<compile_context>
chip_gen: v7x
topology: tpu7x:2x2x1
jax: 0.10.0
libtpu: 0.0.40
codegen_flags: <defaults>
</compile_context>

<pallas_src>
import jax
import jax.numpy as jnp
import numpy as np
from jax.experimental import pallas as pl
from jax.experimental.pallas import tpu as pltpu


KSIZE = 7
PAD = (KSIZE - 1) // 2  # 3


def _make_icbam_kernel(H, W):
    HW = H * W
    # Flat padding wide enough to cover the largest tap shift |(ki-3)*W + (kj-3)|.
    PADF = PAD * W + PAD
    # Lane-align the padded spatial buffer to a multiple of 128 so the 49 tap windows
    # are extracted from an aligned slab (single rotate each, no tail handling).
    P_TOTAL = ((HW + 2 * PADF + 127) // 128) * 128
    RIGHT = P_TOTAL - HW - PADF          # >= PADF by construction
    POW2_W = (W & (W - 1)) == 0

    def kernel(x_ref, w1_ref, w2_ref, wsa_ref, out_ref):
        # x_ref / out_ref : (C, H*W)   one image, lane-dense
        # w1_ref          : (C//r, C)  channel-attention fc1 (1x1 conv)
        # w2_ref          : (C, C//r)  channel-attention fc2 (1x1 conv)
        # wsa_ref         : (2*7*7,)   SMEM scalars, layout [c, ki, kj], c0=mean c1=max
        xf = x_ref[...].astype(jnp.float32)                          # (C, HW)

        # ------------- hoisted 7x7 conv taps (SMEM scalars, read once) -------------
        w_avg = [[wsa_ref[ti * KSIZE + tj] for tj in range(KSIZE)]
                 for ti in range(KSIZE)]
        w_max = [[wsa_ref[KSIZE * KSIZE + ti * KSIZE + tj] for tj in range(KSIZE)]
                 for ti in range(KSIZE)]

        # ------------- channel attention (transpose-free, C on sublanes) -----------
        avg_c = jnp.mean(xf, axis=1, keepdims=True)                  # (C, 1) global avg pool
        max_c = jnp.max(xf, axis=1, keepdims=True)                   # (C, 1) global max pool
        pooled = jnp.concatenate([avg_c, max_c], axis=1)             # (C, 2)
        h = jnp.dot(w1_ref[...], pooled, preferred_element_type=jnp.float32)   # (Ch, 2)
        h = jnp.maximum(h, 0.0)                                      # ReLU
        m = jnp.dot(w2_ref[...], h, preferred_element_type=jnp.float32)        # (C, 2)
        ch_att = jax.nn.sigmoid(m[:, 0:1] + m[:, 1:2])               # (C, 1)

        # ------------- spatial attention: 7x7 conv in flat lane space --------------
        sa_mean = jnp.mean(xf, axis=0, keepdims=True)                # (1, HW) channel mean
        sa_max = jnp.max(xf, axis=0, keepdims=True)                  # (1, HW) channel max
        sa = jnp.concatenate([sa_mean, sa_max], axis=0)              # (2, HW)
        sa_pad = jnp.concatenate(
            [jnp.zeros((2, PADF), jnp.float32),
             sa,
             jnp.zeros((2, RIGHT), jnp.float32)], axis=1)            # (2, P_TOTAL), 128-aligned

        # Column-validity masks; row out-of-range taps land in the flat zero pad.
        lane = jax.lax.broadcasted_iota(jnp.int32, (1, HW), 1)
        col = jnp.bitwise_and(lane, W - 1) if POW2_W else lane % W   # p mod W
        col_masks = []
        for tj in range(KSIZE):
            dj = tj - PAD
            ok = jnp.logical_and(col + dj >= 0, col + dj <= W - 1)
            col_masks.append(ok.astype(jnp.float32))                 # (1, HW)

        acc = jnp.zeros((1, HW), jnp.float32)
        for tj in range(KSIZE):
            inner = jnp.zeros((1, HW), jnp.float32)
            for ti in range(KSIZE):
                s = (ti - PAD) * W + (tj - PAD)                      # flat tap shift
                start = PADF + s                                     # in [0, 2*PADF]
                win = sa_pad[:, start:start + HW]                    # (2, HW) aligned-slab window
                inner = inner + w_avg[ti][tj] * win[0:1] + w_max[ti][tj] * win[1:2]
            if tj == PAD:                                            # dj == 0: mask is all-ones
                acc = acc + inner
            else:
                acc = acc + col_masks[tj] * inner
        sp_att = jax.nn.sigmoid(acc)                                 # (1, HW)

        # ------------- combine & single lane-dense block store ---------------------
        out_ref[...] = (xf * ch_att * sp_att).astype(out_ref.dtype)

    return kernel


def icbam_pallas(x, w1, w2, wsa):
    """x: (B, C, H, W); w1: (C//r, C); w2: (C, C//r); wsa: (1, 2, 7, 7)."""
    B, C, H, W = x.shape
    HW = H * W
    Ch = w1.shape[0]

    x_flat = x.reshape(B, C, HW)
    wsa_flat = wsa.reshape(2 * KSIZE * KSIZE).astype(jnp.float32)

    itemsize = jnp.dtype(x.dtype).itemsize
    cost = pl.CostEstimate(
        flops=int(B * (7 * C * HW + 6 * KSIZE * KSIZE * HW + 8 * C * Ch)),
        transcendentals=int(B * (C + HW)),
        bytes_accessed=int(2 * B * C * HW * itemsize
                           + (int(w1.size) + int(w2.size) + int(wsa.size)) * 4),
    )

    kernel = _make_icbam_kernel(H, W)

    out_flat = pl.pallas_call(
        kernel,
        out_shape=jax.ShapeDtypeStruct((B, C, HW), x.dtype),
        grid_spec=pltpu.PrefetchScalarGridSpec(
            num_scalar_prefetch=0,
            grid=(B,),                                   # >=2 parallel steps (v7x: 2 TCs) + DMA overlap
            in_specs=[
                pl.BlockSpec((None, C, HW), lambda i: (i, 0, 0)),   # one image, batch dim squeezed
                pl.BlockSpec((Ch, C), lambda i: (0, 0)),            # fc1, resident
                pl.BlockSpec((C, Ch), lambda i: (0, 0)),            # fc2, resident
                pl.BlockSpec(memory_space=pltpu.SMEM),              # 7x7 conv taps as scalars (98,)
            ],
            out_specs=pl.BlockSpec((None, C, HW), lambda i: (i, 0, 0)),
        ),
        compiler_params=pltpu.CompilerParams(
            dimension_semantics=("parallel",)),
        cost_estimate=cost,
    )(x_flat, w1, w2, wsa_flat)

    return out_flat.reshape(B, C, H, W)


def icbam_ref(x, w1, w2, wsa):
    """Pure-JAX reference matching the PyTorch module semantics."""
    # channel attention
    avg = jnp.mean(x, axis=(2, 3), keepdims=True)   # (B, C, 1, 1)
    mx = jnp.max(x, axis=(2, 3), keepdims=True)

    def mlp(p):
        h = jnp.einsum('bcij,hc->bhij', p, w1)
        h = jax.nn.relu(h)
        return jnp.einsum('bhij,ch->bcij', h, w2)

    ca = jax.nn.sigmoid(mlp(avg) + mlp(mx))          # (B, C, 1, 1)

    # spatial attention
    sa_in = jnp.concatenate(
        [jnp.mean(x, axis=1, keepdims=True), jnp.max(x, axis=1, keepdims=True)],
        axis=1)                                      # (B, 2, H, W)
    conv = jax.lax.conv_general_dilated(
        sa_in, wsa, window_strides=(1, 1),
        padding=((PAD, PAD), (PAD, PAD)),
        dimension_numbers=('NCHW', 'OIHW', 'NCHW'))  # (B, 1, H, W)
    sa = jax.nn.sigmoid(conv)

    return x * ca * sa


if __name__ == "__main__":
    B, C, H, W = 2, 32, 16, 16
    reduction_ratio = 16
    Ch = C // reduction_ratio  # hidden channels of the channel-attention MLP

    key = jax.random.PRNGKey(0)
    kx, k1, k2, k3 = jax.random.split(key, 4)

    x = jax.random.normal(kx, (B, C, H, W), dtype=jnp.float32)
    # ChannelAttention: fc1 = Conv2d(C, C//r, 1, bias=False), fc2 = Conv2d(C//r, C, 1, bias=False)
    w1 = jax.random.normal(k1, (Ch, C), dtype=jnp.float32) * 0.2     # (out, in) of 1x1 conv
    w2 = jax.random.normal(k2, (C, Ch), dtype=jnp.float32) * 0.2
    # SpatialAttention: Conv2d(2, 1, 7, padding=3, bias=False)
    wsa = jax.random.normal(k3, (1, 2, KSIZE, KSIZE), dtype=jnp.float32) * 0.1

    out = icbam_pallas(x, w1, w2, wsa)
    out = jax.block_until_ready(out)

    ref = jax.block_until_ready(icbam_ref(x, w1, w2, wsa))
    np.testing.assert_allclose(np.asarray(out), np.asarray(ref),
                               rtol=1e-4, atol=1e-5)

    print("KERNEL_OK")
</pallas_src>

<mosaic_0001>
module attributes {stable_mosaic.version = 11 : i64} {
  func.func @kernel(%arg0: i32, %arg1: memref<1x32x256xf32, #tpu.memory_space<vmem>>, %arg2: memref<2x32xf32, #tpu.memory_space<vmem>>, %arg3: memref<32x2xf32, #tpu.memory_space<vmem>>, %arg4: memref<98xf32, #tpu.memory_space<smem>>, %arg5: memref<1x32x256xf32, #tpu.memory_space<vmem>>) attributes {dimension_semantics = [#tpu.dimension_semantics<parallel>], iteration_bounds = array<i64: 2>, scalar_prefetch = 0 : i64, scratch_operands = 0 : i64, tpu.core_type = #tpu.core_type<tc>, window_params = [{transform_indices = @transform_0, window_bounds = array<i64: 1, 32, 256>}, {pipeline_mode = #tpu.pipeline_mode<synchronous>, transform_indices = @transform_1, window_bounds = array<i64: 2, 32>}, {pipeline_mode = #tpu.pipeline_mode<synchronous>, transform_indices = @transform_2, window_bounds = array<i64: 32, 2>}, {transform_indices = @transform_3, window_bounds = array<i64: 98>}, {transform_indices = @transform_4, window_bounds = array<i64: 1, 32, 256>}]} {
    %c0 = arith.constant 0 : index
    %c0_0 = arith.constant 0 : index
    %c0_1 = arith.constant 0 : index
    %0 = vector.load %arg1[%c0, %c0_0, %c0_1] : memref<1x32x256xf32, #tpu.memory_space<vmem>>, vector<1x32x256xf32>
    %1 = vector.shape_cast %0 : vector<1x32x256xf32> to vector<32x256xf32>
    %c0_2 = arith.constant 0 : index
    %2 = memref.load %arg4[%c0_2] : memref<98xf32, #tpu.memory_space<smem>>
    %c1 = arith.constant 1 : index
    %3 = memref.load %arg4[%c1] : memref<98xf32, #tpu.memory_space<smem>>
    %c2 = arith.constant 2 : index
    %4 = memref.load %arg4[%c2] : memref<98xf32, #tpu.memory_space<smem>>
    %c3 = arith.constant 3 : index
    %5 = memref.load %arg4[%c3] : memref<98xf32, #tpu.memory_space<smem>>
    %c4 = arith.constant 4 : index
    %6 = memref.load %arg4[%c4] : memref<98xf32, #tpu.memory_space<smem>>
    %c5 = arith.constant 5 : index
    %7 = memref.load %arg4[%c5] : memref<98xf32, #tpu.memory_space<smem>>
    %c6 = arith.constant 6 : index
    %8 = memref.load %arg4[%c6] : memref<98xf32, #tpu.memory_space<smem>>
    %c7 = arith.constant 7 : index
    %9 = memref.load %arg4[%c7] : memref<98xf32, #tpu.memory_space<smem>>
    %c8 = arith.constant 8 : index
    %10 = memref.load %arg4[%c8] : memref<98xf32, #tpu.memory_space<smem>>
    %c9 = arith.constant 9 : index
    %11 = memref.load %arg4[%c9] : memref<98xf32, #tpu.memory_space<smem>>
    %c10 = arith.constant 10 : index
    %12 = memref.load %arg4[%c10] : memref<98xf32, #tpu.memory_space<smem>>
    %c11 = arith.constant 11 : index
    %13 = memref.load %arg4[%c11] : memref<98xf32, #tpu.memory_space<smem>>
    %c12 = arith.constant 12 : index
    %14 = memref.load %arg4[%c12] : memref<98xf32, #tpu.memory_space<smem>>
    %c13 = arith.constant 13 : index
    %15 = memref.load %arg4[%c13] : memref<98xf32, #tpu.memory_space<smem>>
    %c14 = arith.constant 14 : index
    %16 = memref.load %arg4[%c14] : memref<98xf32, #tpu.memory_space<smem>>
    %c15 = arith.constant 15 : index
    %17 = memref.load %arg4[%c15] : memref<98xf32, #tpu.memory_space<smem>>
    %c16 = arith.constant 16 : index
    %18 = memref.load %arg4[%c16] : memref<98xf32, #tpu.memory_space<smem>>
    %c17 = arith.constant 17 : index
    %19 = memref.load %arg4[%c17] : memref<98xf32, #tpu.memory_space<smem>>
    %c18 = arith.constant 18 : index
    %20 = memref.load %arg4[%c18] : memref<98xf32, #tpu.memory_space<smem>>
    %c19 = arith.constant 19 : index
    %21 = memref.load %arg4[%c19] : memref<98xf32, #tpu.memory_space<smem>>
    %c20 = arith.constant 20 : index
    %22 = memref.load %arg4[%c20] : memref<98xf32, #tpu.memory_space<smem>>
    %c21 = arith.constant 21 : index
    %23 = memref.load %arg4[%c21] : memref<98xf32, #tpu.memory_space<smem>>
    %c22 = arith.constant 22 : index
    %24 = memref.load %arg4[%c22] : memref<98xf32, #tpu.memory_space<smem>>
    %c23 = arith.constant 23 : index
    %25 = memref.load %arg4[%c23] : memref<98xf32, #tpu.memory_space<smem>>
    %c24 = arith.constant 24 : index
    %26 = memref.load %arg4[%c24] : memref<98xf32, #tpu.memory_space<smem>>
    %c25 = arith.constant 25 : index
    %27 = memref.load %arg4[%c25] : memref<98xf32, #tpu.memory_space<smem>>
    %c26 = arith.constant 26 : index
    %28 = memref.load %arg4[%c26] : memref<98xf32, #tpu.memory_space<smem>>
    %c27 = arith.constant 27 : index
    %29 = memref.load %arg4[%c27] : memref<98xf32, #tpu.memory_space<smem>>
    %c28 = arith.constant 28 : index
    %30 = memref.load %arg4[%c28] : memref<98xf32, #tpu.memory_space<smem>>
    %c29 = arith.constant 29 : index
    %31 = memref.load %arg4[%c29] : memref<98xf32, #tpu.memory_space<smem>>
    %c30 = arith.constant 30 : index
    %32 = memref.load %arg4[%c30] : memref<98xf32, #tpu.memory_space<smem>>
    %c31 = arith.constant 31 : index
    %33 = memref.load %arg4[%c31] : memref<98xf32, #tpu.memory_space<smem>>
    %c32 = arith.constant 32 : index
    %34 = memref.load %arg4[%c32] : memref<98xf32, #tpu.memory_space<smem>>
    %c33 = arith.constant 33 : index
    %35 = memref.load %arg4[%c33] : memref<98xf32, #tpu.memory_space<smem>>
    %c34 = arith.constant 34 : index
    %36 = memref.load %arg4[%c34] : memref<98xf32, #tpu.memory_space<smem>>
    %c35 = arith.constant 35 : index
    %37 = memref.load %arg4[%c35] : memref<98xf32, #tpu.memory_space<smem>>
    %c36 = arith.constant 36 : index
    %38 = memref.load %arg4[%c36] : memref<98xf32, #tpu.memory_space<smem>>
    %c37 = arith.constant 37 : index
    %39 = memref.load %arg4[%c37] : memref<98xf32, #tpu.memory_space<smem>>
    %c38 = arith.constant 38 : index
    %40 = memref.load %arg4[%c38] : memref<98xf32, #tpu.memory_space<smem>>
    %c39 = arith.constant 39 : index
    %41 = memref.load %arg4[%c39] : memref<98xf32, #tpu.memory_space<smem>>
    %c40 = arith.constant 40 : index
    %42 = memref.load %arg4[%c40] : memref<98xf32, #tpu.memory_space<smem>>
    %c41 = arith.constant 41 : index
    %43 = memref.load %arg4[%c41] : memref<98xf32, #tpu.memory_space<smem>>
    %c42 = arith.constant 42 : index
    %44 = memref.load %arg4[%c42] : memref<98xf32, #tpu.memory_space<smem>>
    %c43 = arith.constant 43 : index
    %45 = memref.load %arg4[%c43] : memref<98xf32, #tpu.memory_space<smem>>
    %c44 = arith.constant 44 : index
    %46 = memref.load %arg4[%c44] : memref<98xf32, #tpu.memory_space<smem>>
    %c45 = arith.constant 45 : index
    %47 = memref.load %arg4[%c45] : memref<98xf32, #tpu.memory_space<smem>>
    %c46 = arith.constant 46 : index
    %48 = memref.load %arg4[%c46] : memref<98xf32, #tpu.memory_space<smem>>
    %c47 = arith.constant 47 : index
    %49 = memref.load %arg4[%c47] : memref<98xf32, #tpu.memory_space<smem>>
    %c48 = arith.constant 48 : index
    %50 = memref.load %arg4[%c48] : memref<98xf32, #tpu.memory_space<smem>>
    %c49 = arith.constant 49 : index
    %51 = memref.load %arg4[%c49] : memref<98xf32, #tpu.memory_space<smem>>
    %c50 = arith.constant 50 : index
    %52 = memref.load %arg4[%c50] : memref<98xf32, #tpu.memory_space<smem>>
    %c51 = arith.constant 51 : index
    %53 = memref.load %arg4[%c51] : memref<98xf32, #tpu.memory_space<smem>>
    %c52 = arith.constant 52 : index
    %54 = memref.load %arg4[%c52] : memref<98xf32, #tpu.memory_space<smem>>
    %c53 = arith.constant 53 : index
    %55 = memref.load %arg4[%c53] : memref<98xf32, #tpu.memory_space<smem>>
    %c54 = arith.constant 54 : index
    %56 = memref.load %arg4[%c54] : memref<98xf32, #tpu.memory_space<smem>>
    %c55 = arith.constant 55 : index
    %57 = memref.load %arg4[%c55] : memref<98xf32, #tpu.memory_space<smem>>
    %c56 = arith.constant 56 : index
    %58 = memref.load %arg4[%c56] : memref<98xf32, #tpu.memory_space<smem>>
    %c57 = arith.constant 57 : index
    %59 = memref.load %arg4[%c57] : memref<98xf32, #tpu.memory_space<smem>>
    %c58 = arith.constant 58 : index
    %60 = memref.load %arg4[%c58] : memref<98xf32, #tpu.memory_space<smem>>
    %c59 = arith.constant 59 : index
    %61 = memref.load %arg4[%c59] : memref<98xf32, #tpu.memory_space<smem>>
    %c60 = arith.constant 60 : index
    %62 = memref.load %arg4[%c60] : memref<98xf32, #tpu.memory_space<smem>>
    %c61 = arith.constant 61 : index
    %63 = memref.load %arg4[%c61] : memref<98xf32, #tpu.memory_space<smem>>
    %c62 = arith.constant 62 : index
    %64 = memref.load %arg4[%c62] : memref<98xf32, #tpu.memory_space<smem>>
    %c63 = arith.constant 63 : index
    %65 = memref.load %arg4[%c63] : memref<98xf32, #tpu.memory_space<smem>>
    %c64 = arith.constant 64 : index
    %66 = memref.load %arg4[%c64] : memref<98xf32, #tpu.memory_space<smem>>
    %c65 = arith.constant 65 : index
    %67 = memref.load %arg4[%c65] : memref<98xf32, #tpu.memory_space<smem>>
    %c66 = arith.constant 66 : index
    %68 = memref.load %arg4[%c66] : memref<98xf32, #tpu.memory_space<smem>>
    %c67 = arith.constant 67 : index
    %69 = memref.load %arg4[%c67] : memref<98xf32, #tpu.memory_space<smem>>
    %c68 = arith.constant 68 : index
    %70 = memref.load %arg4[%c68] : memref<98xf32, #tpu.memory_space<smem>>
    %c69 = arith.constant 69 : index
    %71 = memref.load %arg4[%c69] : memref<98xf32, #tpu.memory_space<smem>>
    %c70 = arith.constant 70 : index
    %72 = memref.load %arg4[%c70] : memref<98xf32, #tpu.memory_space<smem>>
    %c71 = arith.constant 71 : index
    %73 = memref.load %arg4[%c71] : memref<98xf32, #tpu.memory_space<smem>>
    %c72 = arith.constant 72 : index
    %74 = memref.load %arg4[%c72] : memref<98xf32, #tpu.memory_space<smem>>
    %c73 = arith.constant 73 : index
    %75 = memref.load %arg4[%c73] : memref<98xf32, #tpu.memory_space<smem>>
    %c74 = arith.constant 74 : index
    %76 = memref.load %arg4[%c74] : memref<98xf32, #tpu.memory_space<smem>>
    %c75 = arith.constant 75 : index
    %77 = memref.load %arg4[%c75] : memref<98xf32, #tpu.memory_space<smem>>
    %c76 = arith.constant 76 : index
    %78 = memref.load %arg4[%c76] : memref<98xf32, #tpu.memory_space<smem>>
    %c77 = arith.constant 77 : index
    %79 = memref.load %arg4[%c77] : memref<98xf32, #tpu.memory_space<smem>>
    %c78 = arith.constant 78 : index
    %80 = memref.load %arg4[%c78] : memref<98xf32, #tpu.memory_space<smem>>
    %c79 = arith.constant 79 : index
    %81 = memref.load %arg4[%c79] : memref<98xf32, #tpu.memory_space<smem>>
    %c80 = arith.constant 80 : index
    %82 = memref.load %arg4[%c80] : memref<98xf32, #tpu.memory_space<smem>>
    %c81 = arith.constant 81 : index
    %83 = memref.load %arg4[%c81] : memref<98xf32, #tpu.memory_space<smem>>
    %c82 = arith.constant 82 : index
    %84 = memref.load %arg4[%c82] : memref<98xf32, #tpu.memory_space<smem>>
    %c83 = arith.constant 83 : index
    %85 = memref.load %arg4[%c83] : memref<98xf32, #tpu.memory_space<smem>>
    %c84 = arith.constant 84 : index
    %86 = memref.load %arg4[%c84] : memref<98xf32, #tpu.memory_space<smem>>
    %c85 = arith.constant 85 : index
    %87 = memref.load %arg4[%c85] : memref<98xf32, #tpu.memory_space<smem>>
    %c86 = arith.constant 86 : index
    %88 = memref.load %arg4[%c86] : memref<98xf32, #tpu.memory_space<smem>>
    %c87 = arith.constant 87 : index
    %89 = memref.load %arg4[%c87] : memref<98xf32, #tpu.memory_space<smem>>
    %c88 = arith.constant 88 : index
    %90 = memref.load %arg4[%c88] : memref<98xf32, #tpu.memory_space<smem>>
    %c89 = arith.constant 89 : index
    %91 = memref.load %arg4[%c89] : memref<98xf32, #tpu.memory_space<smem>>
    %c90 = arith.constant 90 : index
    %92 = memref.load %arg4[%c90] : memref<98xf32, #tpu.memory_space<smem>>
    %c91 = arith.constant 91 : index
    %93 = memref.load %arg4[%c91] : memref<98xf32, #tpu.memory_space<smem>>
    %c92 = arith.constant 92 : index
    %94 = memref.load %arg4[%c92] : memref<98xf32, #tpu.memory_space<smem>>
    %c93 = arith.constant 93 : index
    %95 = memref.load %arg4[%c93] : memref<98xf32, #tpu.memory_space<smem>>
    %c94 = arith.constant 94 : index
    %96 = memref.load %arg4[%c94] : memref<98xf32, #tpu.memory_space<smem>>
    %c95 = arith.constant 95 : index
    %97 = memref.load %arg4[%c95] : memref<98xf32, #tpu.memory_space<smem>>
    %c96 = arith.constant 96 : index
    %98 = memref.load %arg4[%c96] : memref<98xf32, #tpu.memory_space<smem>>
    %c97 = arith.constant 97 : index
    %99 = memref.load %arg4[%c97] : memref<98xf32, #tpu.memory_space<smem>>
    %cst = arith.constant dense<0.000000e+00> : vector<32xf32>
    %100 = vector.multi_reduction <add>, %1, %cst [1] : vector<32x256xf32> to vector<32xf32>
    %101 = vector.shape_cast %100 : vector<32xf32> to vector<32x1xf32>
    %cst_3 = arith.constant 2.560000e+02 : f32
    %102 = vector.broadcast %cst_3 : f32 to vector<32x1xf32>
    %103 = arith.divf %101, %102 : vector<32x1xf32>
    %cst_4 = arith.constant dense<0xFF800000> : vector<32xf32>
    %104 = vector.multi_reduction <maximumf>, %1, %cst_4 [1] : vector<32x256xf32> to vector<32xf32>
    %105 = vector.shape_cast %104 : vector<32xf32> to vector<32x1xf32>
    %106 = tpu.concatenate %103, %105 in 1 : vector<32x1xf32>, vector<32x1xf32> -> vector<32x2xf32>
    %c0_5 = arith.constant 0 : index
    %c0_6 = arith.constant 0 : index
    %107 = vector.load %arg2[%c0_5, %c0_6] : memref<2x32xf32, #tpu.memory_space<vmem>>, vector<2x32xf32>
    %cst_7 = arith.constant dense<0.000000e+00> : vector<2x2xf32>
    %108 = tpu.matmul %107, %106, %cst_7 {dimension_numbers = #tpu.dot_dimension_numbers<[1], [0], [0], [1], [0, 0, 1, 1], [], []>} : vector<2x32xf32>, vector<32x2xf32>, vector<2x2xf32> -> vector<2x2xf32>
    %cst_8 = arith.constant 0.000000e+00 : f32
    %109 = vector.broadcast %cst_8 : f32 to vector<2x2xf32>
    %110 = arith.maximumf %108, %109 : vector<2x2xf32>
    %c0_9 = arith.constant 0 : index
    %c0_10 = arith.constant 0 : index
    %111 = vector.load %arg3[%c0_9, %c0_10] : memref<32x2xf32, #tpu.memory_space<vmem>>, vector<32x2xf32>
    %cst_11 = arith.constant dense<0.000000e+00> : vector<32x2xf32>
    %112 = tpu.matmul %111, %110, %cst_11 {dimension_numbers = #tpu.dot_dimension_numbers<[1], [0], [0], [1], [0, 0, 1, 1], [], []>} : vector<32x2xf32>, vector<2x2xf32>, vector<32x2xf32> -> vector<32x2xf32>
    %113 = vector.extract_strided_slice %112 {offsets = [0, 0], sizes = [32, 1], strides = [1, 1]} : vector<32x2xf32> to vector<32x1xf32>
    %114 = vector.extract_strided_slice %112 {offsets = [0, 1], sizes = [32, 1], strides = [1, 1]} : vector<32x2xf32> to vector<32x1xf32>
    %115 = arith.addf %113, %114 : vector<32x1xf32>
    %116 = arith.negf %115 : vector<32x1xf32>
    %117 = math.exp %116 : vector<32x1xf32>
    %cst_12 = arith.constant 1.000000e+00 : f32
    %118 = vector.broadcast %cst_12 : f32 to vector<32x1xf32>
    %119 = arith.addf %118, %117 : vector<32x1xf32>
    %120 = arith.divf %118, %119 : vector<32x1xf32>
    %cst_13 = arith.constant dense<0.000000e+00> : vector<256xf32>
    %121 = vector.multi_reduction <add>, %1, %cst_13 [0] : vector<32x256xf32> to vector<256xf32>
    %122 = vector.shape_cast %121 : vector<256xf32> to vector<1x256xf32>
    %cst_14 = arith.constant 3.200000e+01 : f32
    %123 = vector.broadcast %cst_14 : f32 to vector<1x256xf32>
    %124 = arith.divf %122, %123 : vector<1x256xf32>
    %cst_15 = arith.constant dense<0xFF800000> : vector<256xf32>
    %125 = vector.multi_reduction <maximumf>, %1, %cst_15 [0] : vector<32x256xf32> to vector<256xf32>
    %126 = vector.shape_cast %125 : vector<256xf32> to vector<1x256xf32>
    %127 = tpu.concatenate %124, %126 in 0 : vector<1x256xf32>, vector<1x256xf32> -> vector<2x256xf32>
    %cst_16 = arith.constant 0.000000e+00 : f32
    %128 = vector.broadcast %cst_16 : f32 to vector<2x51xf32>
    %cst_17 = arith.constant 0.000000e+00 : f32
    %129 = vector.broadcast %cst_17 : f32 to vector<2x77xf32>
    %130 = tpu.concatenate %128, %127, %129 in 1 : vector<2x51xf32>, vector<2x256xf32>, vector<2x77xf32> -> vector<2x384xf32>
    %131 = tpu.iota {dimensions = array<i32: 1>} : vector<1x256xi32>
    %c15_i32 = arith.constant 15 : i32
    %132 = vector.broadcast %c15_i32 : i32 to vector<1x256xi32>
    %133 = arith.andi %131, %132 : vector<1x256xi32>
    %c-3_i32 = arith.constant -3 : i32
    %134 = vector.broadcast %c-3_i32 : i32 to vector<1x256xi32>
    %135 = arith.addi %133, %134 : vector<1x256xi32>
    %c0_i32 = arith.constant 0 : i32
    %136 = vector.broadcast %c0_i32 : i32 to vector<1x256xi32>
    %137 = arith.cmpi sge, %135, %136 : vector<1x256xi32>
    %c-3_i32_18 = arith.constant -3 : i32
    %138 = vector.broadcast %c-3_i32_18 : i32 to vector<1x256xi32>
    %139 = arith.addi %133, %138 : vector<1x256xi32>
    %c15_i32_19 = arith.constant 15 : i32
    %140 = vector.broadcast %c15_i32_19 : i32 to vector<1x256xi32>
    %141 = arith.cmpi sle, %139, %140 : vector<1x256xi32>
    %142 = arith.andi %137, %141 : vector<1x256xi1>
    %143 = arith.extui %142 : vector<1x256xi1> to vector<1x256xi32>
    %144 = arith.sitofp %143 : vector<1x256xi32> to vector<1x256xf32>
    %c-2_i32 = arith.constant -2 : i32
    %145 = vector.broadcast %c-2_i32 : i32 to vector<1x256xi32>
    %146 = arith.addi %133, %145 : vector<1x256xi32>
    %c0_i32_20 = arith.constant 0 : i32
    %147 = vector.broadcast %c0_i32_20 : i32 to vector<1x256xi32>
    %148 = arith.cmpi sge, %146, %147 : vector<1x256xi32>
    %c-2_i32_21 = arith.constant -2 : i32
    %149 = vector.broadcast %c-2_i32_21 : i32 to vector<1x256xi32>
    %150 = arith.addi %133, %149 : vector<1x256xi32>
    %c15_i32_22 = arith.constant 15 : i32
    %151 = vector.broadcast %c15_i32_22 : i32 to vector<1x256xi32>
    %152 = arith.cmpi sle, %150, %151 : vector<1x256xi32>
    %153 = arith.andi %148, %152 : vector<1x256xi1>
    %154 = arith.extui %153 : vector<1x256xi1> to vector<1x256xi32>
    %155 = arith.sitofp %154 : vector<1x256xi32> to vector<1x256xf32>
    %c-1_i32 = arith.constant -1 : i32
    %156 = vector.broadcast %c-1_i32 : i32 to vector<1x256xi32>
    %157 = arith.addi %133, %156 : vector<1x256xi32>
    %c0_i32_23 = arith.constant 0 : i32
    %158 = vector.broadcast %c0_i32_23 : i32 to vector<1x256xi32>
    %159 = arith.cmpi sge, %157, %158 : vector<1x256xi32>
    %c-1_i32_24 = arith.constant -1 : i32
    %160 = vector.broadcast %c-1_i32_24 : i32 to vector<1x256xi32>
    %161 = arith.addi %133, %160 : vector<1x256xi32>
    %c15_i32_25 = arith.constant 15 : i32
    %162 = vector.broadcast %c15_i32_25 : i32 to vector<1x256xi32>
    %163 = arith.cmpi sle, %161, %162 : vector<1x256xi32>
    %164 = arith.andi %159, %163 : vector<1x256xi1>
    %165 = arith.extui %164 : vector<1x256xi1> to vector<1x256xi32>
    %166 = arith.sitofp %165 : vector<1x256xi32> to vector<1x256xf32>
    %c1_i32 = arith.constant 1 : i32
    %167 = vector.broadcast %c1_i32 : i32 to vector<1x256xi32>
    %168 = arith.addi %133, %167 : vector<1x256xi32>
    %c0_i32_26 = arith.constant 0 : i32
    %169 = vector.broadcast %c0_i32_26 : i32 to vector<1x256xi32>
    %170 = arith.cmpi sge, %168, %169 : vector<1x256xi32>
    %c1_i32_27 = arith.constant 1 : i32
    %171 = vector.broadcast %c1_i32_27 : i32 to vector<1x256xi32>
    %172 = arith.addi %133, %171 : vector<1x256xi32>
    %c15_i32_28 = arith.constant 15 : i32
    %173 = vector.broadcast %c15_i32_28 : i32 to vector<1x256xi32>
    %174 = arith.cmpi sle, %172, %173 : vector<1x256xi32>
    %175 = arith.andi %170, %174 : vector<1x256xi1>
    %176 = arith.extui %175 : vector<1x256xi1> to vector<1x256xi32>
    %177 = arith.sitofp %176 : vector<1x256xi32> to vector<1x256xf32>
    %c2_i32 = arith.constant 2 : i32
    %178 = vector.broadcast %c2_i32 : i32 to vector<1x256xi32>
    %179 = arith.addi %133, %178 : vector<1x256xi32>
    %c0_i32_29 = arith.constant 0 : i32
    %180 = vector.broadcast %c0_i32_29 : i32 to vector<1x256xi32>
    %181 = arith.cmpi sge, %179, %180 : vector<1x256xi32>
    %c2_i32_30 = arith.constant 2 : i32
    %182 = vector.broadcast %c2_i32_30 : i32 to vector<1x256xi32>
    %183 = arith.addi %133, %182 : vector<1x256xi32>
    %c15_i32_31 = arith.constant 15 : i32
    %184 = vector.broadcast %c15_i32_31 : i32 to vector<1x256xi32>
    %185 = arith.cmpi sle, %183, %184 : vector<1x256xi32>
    %186 = arith.andi %181, %185 : vector<1x256xi1>
    %187 = arith.extui %186 : vector<1x256xi1> to vector<1x256xi32>
    %188 = arith.sitofp %187 : vector<1x256xi32> to vector<1x256xf32>
    %c3_i32 = arith.constant 3 : i32
    %189 = vector.broadcast %c3_i32 : i32 to vector<1x256xi32>
    %190 = arith.addi %133, %189 : vector<1x256xi32>
    %c0_i32_32 = arith.constant 0 : i32
    %191 = vector.broadcast %c0_i32_32 : i32 to vector<1x256xi32>
    %192 = arith.cmpi sge, %190, %191 : vector<1x256xi32>
    %c3_i32_33 = arith.constant 3 : i32
    %193 = vector.broadcast %c3_i32_33 : i32 to vector<1x256xi32>
    %194 = arith.addi %133, %193 : vector<1x256xi32>
    %c15_i32_34 = arith.constant 15 : i32
    %195 = vector.broadcast %c15_i32_34 : i32 to vector<1x256xi32>
    %196 = arith.cmpi sle, %194, %195 : vector<1x256xi32>
    %197 = arith.andi %192, %196 : vector<1x256xi1>
    %198 = arith.extui %197 : vector<1x256xi1> to vector<1x256xi32>
    %199 = arith.sitofp %198 : vector<1x256xi32> to vector<1x256xf32>
    %cst_35 = arith.constant 0.000000e+00 : f32
    %200 = vector.broadcast %cst_35 : f32 to vector<1x256xf32>
    %cst_36 = arith.constant 0.000000e+00 : f32
    %201 = vector.broadcast %cst_36 : f32 to vector<1x256xf32>
    %202 = vector.extract_strided_slice %130 {offsets = [0, 0], sizes = [2, 256], strides = [1, 1]} : vector<2x384xf32> to vector<2x256xf32>
    %203 = vector.extract_strided_slice %202 {offsets = [0, 0], sizes = [1, 256], strides = [1, 1]} : vector<2x256xf32> to vector<1x256xf32>
    %204 = vector.broadcast %2 : f32 to vector<1x256xf32>
    %205 = arith.mulf %204, %203 : vector<1x256xf32>
    %206 = arith.addf %201, %205 : vector<1x256xf32>
    %207 = vector.extract_strided_slice %202 {offsets = [1, 0], sizes = [1, 256], strides = [1, 1]} : vector<2x256xf32> to vector<1x256xf32>
    %208 = vector.broadcast %51 : f32 to vector<1x256xf32>
    %209 = arith.mulf %208, %207 : vector<1x256xf32>
    %210 = arith.addf %206, %209 : vector<1x256xf32>
    %211 = vector.extract_strided_slice %130 {offsets = [0, 16], sizes = [2, 256], strides = [1, 1]} : vector<2x384xf32> to vector<2x256xf32>
    %212 = vector.extract_strided_slice %211 {offsets = [0, 0], sizes = [1, 256], strides = [1, 1]} : vector<2x256xf32> to vector<1x256xf32>
    %213 = vector.broadcast %9 : f32 to vector<1x256xf32>
    %214 = arith.mulf %213, %212 : vector<1x256xf32>
    %215 = arith.addf %210, %214 : vector<1x256xf32>
    %216 = vector.extract_strided_slice %211 {offsets = [1, 0], sizes = [1, 256], strides = [1, 1]} : vector<2x256xf32> to vector<1x256xf32>
    %217 = vector.broadcast %58 : f32 to vector<1x256xf32>
    %218 = arith.mulf %217, %216 : vector<1x256xf32>
    %219 = arith.addf %215, %218 : vector<1x256xf32>
    %220 = vector.extract_strided_slice %130 {offsets = [0, 32], sizes = [2, 256], strides = [1, 1]} : vector<2x384xf32> to vector<2x256xf32>
    %221 = vector.extract_strided_slice %220 {offsets = [0, 0], sizes = [1, 256], strides = [1, 1]} : vector<2x256xf32> to vector<1x256xf32>
    %222 = vector.broadcast %16 : f32 to vector<1x256xf32>
    %223 = arith.mulf %222, %221 : vector<1x256xf32>
    %224 = arith.addf %219, %223 : vector<1x256xf32>
    %225 = vector.extract_strided_slice %220 {offsets = [1, 0], sizes = [1, 256], strides = [1, 1]} : vector<2x256xf32> to vector<1x256xf32>
    %226 = vector.broadcast %65 : f32 to vector<1x256xf32>
    %227 = arith.mulf %226, %225 : vector<1x256xf32>
    %228 = arith.addf %224, %227 : vector<1x256xf32>
    %229 = vector.extract_strided_slice %130 {offsets = [0, 48], sizes = [2, 256], strides = [1, 1]} : vector<2x384xf32> to vector<2x256xf32>
    %230 = vector.extract_strided_slice %229 {offsets = [0, 0], sizes = [1, 256], strides = [1, 1]} : vector<2x256xf32> to vector<1x256xf32>
    %231 = vector.broadcast %23 : f32 to vector<1x256xf32>
    %232 = arith.mulf %231, %230 : vector<1x256xf32>
    %233 = arith.addf %228, %232 : vector<1x256xf32>
    %234 = vector.extract_strided_slice %229 {offsets = [1, 0], sizes = [1, 256], strides = [1, 1]} : vector<2x256xf32> to vector<1x256xf32>
    %235 = vector.broadcast %72 : f32 to vector<1x256xf32>
    %236 = arith.mulf %235, %234 : vector<1x256xf32>
    %237 = arith.addf %233, %236 : vector<1x256xf32>
    %238 = vector.extract_strided_slice %130 {offsets = [0, 64], sizes = [2, 256], strides = [1, 1]} : vector<2x384xf32> to vector<2x256xf32>
    %239 = vector.extract_strided_slice %238 {offsets = [0, 0], sizes = [1, 256], strides = [1, 1]} : vector<2x256xf32> to vector<1x256xf32>
    %240 = vector.broadcast %30 : f32 to vector<1x256xf32>
    %241 = arith.mulf %240, %239 : vector<1x256xf32>
    %242 = arith.addf %237, %241 : vector<1x256xf32>
    %243 = vector.extract_strided_slice %238 {offsets = [1, 0], sizes = [1, 256], strides = [1, 1]} : vector<2x256xf32> to vector<1x256xf32>
    %244 = vector.broadcast %79 : f32 to vector<1x256xf32>
    %245 = arith.mulf %244, %243 : vector<1x256xf32>
    %246 = arith.addf %242, %245 : vector<1x256xf32>
    %247 = vector.extract_strided_slice %130 {offsets = [0, 80], sizes = [2, 256], strides = [1, 1]} : vector<2x384xf32> to vector<2x256xf32>
    %248 = vector.extract_strided_slice %247 {offsets = [0, 0], sizes = [1, 256], strides = [1, 1]} : vector<2x256xf32> to vector<1x256xf32>
    %249 = vector.broadcast %37 : f32 to vector<1x256xf32>
    %250 = arith.mulf %249, %248 : vector<1x256xf32>
    %251 = arith.addf %246, %250 : vector<1x256xf32>
    %252 = vector.extract_strided_slice %247 {offsets = [1, 0], sizes = [1, 256], strides = [1, 1]} : vector<2x256xf32> to vector<1x256xf32>
    %253 = vector.broadcast %86 : f32 to vector<1x256xf32>
    %254 = arith.mulf %253, %252 : vector<1x256xf32>
    %255 = arith.addf %251, %254 : vector<1x256xf32>
    %256 = vector.extract_strided_slice %130 {offsets = [0, 96], sizes = [2, 256], strides = [1, 1]} : vector<2x384xf32> to vector<2x256xf32>
    %257 = vector.extract_strided_slice %256 {offsets = [0, 0], sizes = [1, 256], strides = [1, 1]} : vector<2x256xf32> to vector<1x256xf32>
    %258 = vector.broadcast %44 : f32 to vector<1x256xf32>
    %259 = arith.mulf %258, %257 : vector<1x256xf32>
    %260 = arith.addf %255, %259 : vector<1x256xf32>
    %261 = vector.extract_strided_slice %256 {offsets = [1, 0], sizes = [1, 256], strides = [1, 1]} : vector<2x256xf32> to vector<1x256xf32>
    %262 = vector.broadcast %93 : f32 to vector<1x256xf32>
    %263 = arith.mulf %262, %261 : vector<1x256xf32>
    %264 = arith.addf %260, %263 : vector<1x256xf32>
    %265 = arith.mulf %144, %264 : vector<1x256xf32>
    %266 = arith.addf %200, %265 : vector<1x256xf32>
    %cst_37 = arith.constant 0.000000e+00 : f32
    %267 = vector.broadcast %cst_37 : f32 to vector<1x256xf32>
    %268 = vector.extract_strided_slice %130 {offsets = [0, 1], sizes = [2, 256], strides = [1, 1]} : vector<2x384xf32> to vector<2x256xf32>
    %269 = vector.extract_strided_slice %268 {offsets = [0, 0], sizes = [1, 256], strides = [1, 1]} : vector<2x256xf32> to vector<1x256xf32>
    %270 = vector.broadcast %3 : f32 to vector<1x256xf32>
    %271 = arith.mulf %270, %269 : vector<1x256xf32>
    %272 = arith.addf %267, %271 : vector<1x256xf32>
    %273 = vector.extract_strided_slice %268 {offsets = [1, 0], sizes = [1, 256], strides = [1, 1]} : vector<2x256xf32> to vector<1x256xf32>
    %274 = vector.broadcast %52 : f32 to vector<1x256xf32>
    %275 = arith.mulf %274, %273 : vector<1x256xf32>
    %276 = arith.addf %272, %275 : vector<1x256xf32>
    %277 = vector.extract_strided_slice %130 {offsets = [0, 17], sizes = [2, 256], strides = [1, 1]} : vector<2x384xf32> to vector<2x256xf32>
    %278 = vector.extract_strided_slice %277 {offsets = [0, 0], sizes = [1, 256], strides = [1, 1]} : vector<2x256xf32> to vector<1x256xf32>
    %279 = vector.broadcast %10 : f32 to vector<1x256xf32>
    %280 = arith.mulf %279, %278 : vector<1x256xf32>
    %281 = arith.addf %276, %280 : vector<1x256xf32>
    %282 = vector.extract_strided_slice %277 {offsets = [1, 0], sizes = [1, 256], strides = [1, 1]} : vector<2x256xf32> to vector<1x256xf32>
    %283 = vector.broadcast %59 : f32 to vector<1x256xf32>
    %284 = arith.mulf %283, %282 : vector<1x256xf32>
    %285 = arith.addf %281, %284 : vector<1x256xf32>
    %286 = vector.extract_strided_slice %130 {offsets = [0, 33], sizes = [2, 256], strides = [1, 1]} : vector<2x384xf32> to vector<2x256xf32>
    %287 = vector.extract_strided_slice %286 {offsets = [0, 0], sizes = [1, 256], strides = [1, 1]} : vector<2x256xf32> to vector<1x256xf32>
    %288 = vector.broadcast %17 : f32 to vector<1x256xf32>
    %289 = arith.mulf %288, %287 : vector<1x256xf32>
    %290 = arith.addf %285, %289 : vector<1x256xf32>
    %291 = vector.extract_strided_slice %286 {offsets = [1, 0], sizes = [1, 256], strides = [1, 1]} : vector<2x256xf32> to vector<1x256xf32>
    %292 = vector.broadcast %66 : f32 to vector<1x256xf32>
    %293 = arith.mulf %292, %291 : vector<1x256xf32>
    %294 = arith.addf %290, %293 : vector<1x256xf32>
    %295 = vector.extract_strided_slice %130 {offsets = [0, 49], sizes = [2, 256], strides = [1, 1]} : vector<2x384xf32> to vector<2x256xf32>
    %296 = vector.extract_strided_slice %295 {offsets = [0, 0], sizes = [1, 256], strides = [1, 1]} : vector<2x256xf32> to vector<1x256xf32>
    %297 = vector.broadcast %24 : f32 to vector<1x256xf32>
    %298 = arith.mulf %297, %296 : vector<1x256xf32>
    %299 = arith.addf %294, %298 : vector<1x256xf32>
    %300 = vector.extract_strided_slice %295 {offsets = [1, 0], sizes = [1, 256], strides = [1, 1]} : vector<2x256xf32> to vector<1x256xf32>
    %301 = vector.broadcast %73 : f32 to vector<1x256xf32>
    %302 = arith.mulf %301, %300 : vector<1x256xf32>
    %303 = arith.addf %299, %302 : vector<1x256xf32>
    %304 = vector.extract_strided_slice %130 {offsets = [0, 65], sizes = [2, 256], strides = [1, 1]} : vector<2x384xf32> to vector<2x256xf32>
    %305 = vector.extract_strided_slice %304 {offsets = [0, 0], sizes = [1, 256], strides = [1, 1]} : vector<2x256xf32> to vector<1x256xf32>
    %306 = vector.broadcast %31 : f32 to vector<1x256xf32>
    %307 = arith.mulf %306, %305 : vector<1x256xf32>
    %308 = arith.addf %303, %307 : vector<1x256xf32>
    %309 = vector.extract_strided_slice %304 {offsets = [1, 0], sizes = [1, 256], strides = [1, 1]} : vector<2x256xf32> to vector<1x256xf32>
    %310 = vector.broadcast %80 : f32 to vector<1x256xf32>
    %311 = arith.mulf %310, %309 : vector<1x256xf32>
    %312 = arith.addf %308, %311 : vector<1x256xf32>
    %313 = vector.extract_strided_slice %130 {offsets = [0, 81], sizes = [2, 256], strides = [1, 1]} : vector<2x384xf32> to vector<2x256xf32>
    %314 = vector.extract_strided_slice %313 {offsets = [0, 0], sizes = [1, 256], strides = [1, 1]} : vector<2x256xf32> to vector<1x256xf32>
    %315 = vector.broadcast %38 : f32 to vector<1x256xf32>
    %316 = arith.mulf %315, %314 : vector<1x256xf32>
    %317 = arith.addf %312, %316 : vector<1x256xf32>
    %318 = vector.extract_strided_slice %313 {offsets = [1, 0], sizes = [1, 256], strides = [1, 1]} : vector<2x256xf32> to vector<1x256xf32>
    %319 = vector.broadcast %87 : f32 to vector<1x256xf32>
    %320 = arith.mulf %319, %318 : vector<1x256xf32>
    %321 = arith.addf %317, %320 : vector<1x256xf32>
    %322 = vector.extract_strided_slice %130 {offsets = [0, 97], sizes = [2, 256], strides = [1, 1]} : vector<2x384xf32> to vector<2x256xf32>
    %323 = vector.extract_strided_slice %322 {offsets = [0, 0], sizes = [1, 256], strides = [1, 1]} : vector<2x256xf32> to vector<1x256xf32>
    %324 = vector.broadcast %45 : f32 to vector<1x256xf32>
    %325 = arith.mulf %324, %323 : vector<1x256xf32>
    %326 = arith.addf %321, %325 : vector<1x256xf32>
    %327 = vector.extract_strided_slice %322 {offsets = [1, 0], sizes = [1, 256], strides = [1, 1]} : vector<2x256xf32> to vector<1x256xf32>
    %328 = vector.broadcast %94 : f32 to vector<1x256xf32>
    %329 = arith.mulf %328, %327 : vector<1x256xf32>
    %330 = arith.addf %326, %329 : vector<1x256xf32>
    %331 = arith.mulf %155, %330 : vector<1x256xf32>
    %332 = arith.addf %266, %331 : vector<1x256xf32>
    %cst_38 = arith.constant 0.000000e+00 : f32
    %333 = vector.broadcast %cst_38 : f32 to vector<1x256xf32>
    %334 = vector.extract_strided_slice %130 {offsets = [0, 2], sizes = [2, 256], strides = [1, 1]} : vector<2x384xf32> to vector<2x256xf32>
    %335 = vector.extract_strided_slice %334 {offsets = [0, 0], sizes = [1, 256], strides = [1, 1]} : vector<2x256xf32> to vector<1x256xf32>
    %336 = vector.broadcast %4 : f32 to vector<1x256xf32>
    %337 = arith.mulf %336, %335 : vector<1x256xf32>
    %338 = arith.addf %333, %337 : vector<1x256xf32>
    %339 = vector.extract_strided_slice %334 {offsets = [1, 0], sizes = [1, 256], strides = [1, 1]} : vector<2x256xf32> to vector<1x256xf32>
    %340 = vector.broadcast %53 : f32 to vector<1x256xf32>
    %341 = arith.mulf %340, %339 : vector<1x256xf32>
    %342 = arith.addf %338, %341 : vector<1x256xf32>
    %343 = vector.extract_strided_slice %130 {offsets = [0, 18], sizes = [2, 256], strides = [1, 1]} : vector<2x384xf32> to vector<2x256xf32>
    %344 = vector.extract_strided_slice %343 {offsets = [0, 0], sizes = [1, 256], strides = [1, 1]} : vector<2x256xf32> to vector<1x256xf32>
    %345 = vector.broadcast %11 : f32 to vector<1x256xf32>
    %346 = arith.mulf %345, %344 : vector<1x256xf32>
    %347 = arith.addf %342, %346 : vector<1x256xf32>
    %348 = vector.extract_strided_slice %343 {offsets = [1, 0], sizes = [1, 256], strides = [1, 1]} : vector<2x256xf32> to vector<1x256xf32>
    %349 = vector.broadcast %60 : f32 to vector<1x256xf32>
    %350 = arith.mulf %349, %348 : vector<1x256xf32>
    %351 = arith.addf %347, %350 : vector<1x256xf32>
    %352 = vector.extract_strided_slice %130 {offsets = [0, 34], sizes = [2, 256], strides = [1, 1]} : vector<2x384xf32> to vector<2x256xf32>
    %353 = vector.extract_strided_slice %352 {offsets = [0, 0], sizes = [1, 256], strides = [1, 1]} : vector<2x256xf32> to vector<1x256xf32>
    %354 = vector.broadcast %18 : f32 to vector<1x256xf32>
    %355 = arith.mulf %354, %353 : vector<1x256xf32>
    %356 = arith.addf %351, %355 : vector<1x256xf32>
    %357 = vector.extract_strided_slice %352 {offsets = [1, 0], sizes = [1, 256], strides = [1, 1]} : vector<2x256xf32> to vector<1x256xf32>
    %358 = vector.broadcast %67 : f32 to vector<1x256xf32>
    %359 = arith.mulf %358, %357 : vector<1x256xf32>
    %360 = arith.addf %356, %359 : vector<1x256xf32>
    %361 = vector.extract_strided_slice %130 {offsets = [0, 50], sizes = [2, 256], strides = [1, 1]} : vector<2x384xf32> to vector<2x256xf32>
    %362 = vector.extract_strided_slice %361 {offsets = [0, 0], sizes = [1, 256], strides = [1, 1]} : vector<2x256xf32> to vector<1x256xf32>
    %363 = vector.broadcast %25 : f32 to vector<1x256xf32>
    %364 = arith.mulf %363, %362 : vector<1x256xf32>
    %365 = arith.addf %360, %364 : vector<1x256xf32>
    %366 = vector.extract_strided_slice %361 {offsets = [1, 0], sizes = [1, 256], strides = [1, 1]} : vector<2x256xf32> to vector<1x256xf32>
    %367 = vector.broadcast %74 : f32 to vector<1x256xf32>
    %368 = arith.mulf %367, %366 : vector<1x256xf32>
    %369 = arith.addf %365, %368 : vector<1x256xf32>
    %370 = vector.extract_strided_slice %130 {offsets = [0, 66], sizes = [2, 256], strides = [1, 1]} : vector<2x384xf32> to vector<2x256xf32>
    %371 = vector.extract_strided_slice %370 {offsets = [0, 0], sizes = [1, 256], strides = [1, 1]} : vector<2x256xf32> to vector<1x256xf32>
    %372 = vector.broadcast %32 : f32 to vector<1x256xf32>
    %373 = arith.mulf %372, %371 : vector<1x256xf32>
    %374 = arith.addf %369, %373 : vector<1x256xf32>
    %375 = vector.extract_strided_slice %370 {offsets = [1, 0], sizes = [1, 256], strides = [1, 1]} : vector<2x256xf32> to vector<1x256xf32>
    %376 = vector.broadcast %81 : f32 to vector<1x256xf32>
    %377 = arith.mulf %376, %375 : vector<1x256xf32>
    %378 = arith.addf %374, %377 : vector<1x256xf32>
    %379 = vector.extract_strided_slice %130 {offsets = [0, 82], sizes = [2, 256], strides = [1, 1]} : vector<2x384xf32> to vector<2x256xf32>
    %380 = vector.extract_strided_slice %379 {offsets = [0, 0], sizes = [1, 256], strides = [1, 1]} : vector<2x256xf32> to vector<1x256xf32>
    %381 = vector.broadcast %39 : f32 to vector<1x256xf32>
    %382 = arith.mulf %381, %380 : vector<1x256xf32>
    %383 = arith.addf %378, %382 : vector<1x256xf32>
    %384 = vector.extract_strided_slice %379 {offsets = [1, 0], sizes = [1, 256], strides = [1, 1]} : vector<2x256xf32> to vector<1x256xf32>
    %385 = vector.broadcast %88 : f32 to vector<1x256xf32>
    %386 = arith.mulf %385, %384 : vector<1x256xf32>
    %387 = arith.addf %383, %386 : vector<1x256xf32>
    %388 = vector.extract_strided_slice %130 {offsets = [0, 98], sizes = [2, 256], strides = [1, 1]} : vector<2x384xf32> to vector<2x256xf32>
    %389 = vector.extract_strided_slice %388 {offsets = [0, 0], sizes = [1, 256], strides = [1, 1]} : vector<2x256xf32> to vector<1x256xf32>
    %390 = vector.broadcast %46 : f32 to vector<1x256xf32>
    %391 = arith.mulf %390, %389 : vector<1x256xf32>
    %392 = arith.addf %387, %391 : vector<1x256xf32>
    %393 = vector.extract_strided_slice %388 {offsets = [1, 0], sizes = [1, 256], strides = [1, 1]} : vector<2x256xf32> to vector<1x256xf32>
    %394 = vector.broadcast %95 : f32 to vector<1x256xf32>
    %395 = arith.mulf %394, %393 : vector<1x256xf32>
    %396 = arith.addf %392, %395 : vector<1x256xf32>
    %397 = arith.mulf %166, %396 : vector<1x256xf32>
    %398 = arith.addf %332, %397 : vector<1x256xf32>
    %cst_39 = arith.constant 0.000000e+00 : f32
    %399 = vector.broadcast %cst_39 : f32 to vector<1x256xf32>
    %400 = vector.extract_strided_slice %130 {offsets = [0, 3], sizes = [2, 256], strides = [1, 1]} : vector<2x384xf32> to vector<2x256xf32>
    %401 = vector.extract_strided_slice %400 {offsets = [0, 0], sizes = [1, 256], strides = [1, 1]} : vector<2x256xf32> to vector<1x256xf32>
    %402 = vector.broadcast %5 : f32 to vector<1x256xf32>
    %403 = arith.mulf %402, %401 : vector<1x256xf32>
    %404 = arith.addf %399, %403 : vector<1x256xf32>
    %405 = vector.extract_strided_slice %400 {offsets = [1, 0], sizes = [1, 256], strides = [1, 1]} : vector<2x256xf32> to vector<1x256xf32>
    %406 = vector.broadcast %54 : f32 to vector<1x256xf32>
    %407 = arith.mulf %406, %405 : vector<1x256xf32>
    %408 = arith.addf %404, %407 : vector<1x256xf32>
    %409 = vector.extract_strided_slice %130 {offsets = [0, 19], sizes = [2, 256], strides = [1, 1]} : vector<2x384xf32> to vector<2x256xf32>
    %410 = vector.extract_strided_slice %409 {offsets = [0, 0], sizes = [1, 256], strides = [1, 1]} : vector<2x256xf32> to vector<1x256xf32>
    %411 = vector.broadcast %12 : f32 to vector<1x256xf32>
    %412 = arith.mulf %411, %410 : vector<1x256xf32>
    %413 = arith.addf %408, %412 : vector<1x256xf32>
    %414 = vector.extract_strided_slice %409 {offsets = [1, 0], sizes = [1, 256], strides = [1, 1]} : vector<2x256xf32> to vector<1x256xf32>
    %415 = vector.broadcast %61 : f32 to vector<1x256xf32>
    %416 = arith.mulf %415, %414 : vector<1x256xf32>
    %417 = arith.addf %413, %416 : vector<1x256xf32>
    %418 = vector.extract_strided_slice %130 {offsets = [0, 35], sizes = [2, 256], strides = [1, 1]} : vector<2x384xf32> to vector<2x256xf32>
    %419 = vector.extract_strided_slice %418 {offsets = [0, 0], sizes = [1, 256], strides = [1, 1]} : vector<2x256xf32> to vector<1x256xf32>
    %420 = vector.broadcast %19 : f32 to vector<1x256xf32>
    %421 = arith.mulf %420, %419 : vector<1x256xf32>
    %422 = arith.addf %417, %421 : vector<1x256xf32>
    %423 = vector.extract_strided_slice %418 {offsets = [1, 0], sizes = [1, 256], strides = [1, 1]} : vector<2x256xf32> to vector<1x256xf32>
    %424 = vector.broadcast %68 : f32 to vector<1x256xf32>
    %425 = arith.mulf %424, %423 : vector<1x256xf32>
    %426 = arith.addf %422, %425 : vector<1x256xf32>
    %427 = vector.extract_strided_slice %130 {offsets = [0, 51], sizes = [2, 256], strides = [1, 1]} : vector<2x384xf32> to vector<2x256xf32>
    %428 = vector.extract_strided_slice %427 {offsets = [0, 0], sizes = [1, 256], strides = [1, 1]} : vector<2x256xf32> to vector<1x256xf32>
    %429 = vector.broadcast %26 : f32 to vector<1x256xf32>
    %430 = arith.mulf %429, %428 : vector<1x256xf32>
    %431 = arith.addf %426, %430 : vector<1x256xf32>
    %432 = vector.extract_strided_slice %427 {offsets = [1, 0], sizes = [1, 256], strides = [1, 1]} : vector<2x256xf32> to vector<1x256xf32>
    %433 = vector.broadcast %75 : f32 to vector<1x256xf32>
    %434 = arith.mulf %433, %432 : vector<1x256xf32>
    %435 = arith.addf %431, %434 : vector<1x256xf32>
    %436 = vector.extract_strided_slice %130 {offsets = [0, 67], sizes = [2, 256], strides = [1, 1]} : vector<2x384xf32> to vector<2x256xf32>
    %437 = vector.extract_strided_slice %436 {offsets = [0, 0], sizes = [1, 256], strides = [1, 1]} : vector<2x256xf32> to vector<1x256xf32>
    %438 = vector.broadcast %33 : f32 to vector<1x256xf32>
    %439 = arith.mulf %438, %437 : vector<1x256xf32>
    %440 = arith.addf %435, %439 : vector<1x256xf32>
    %441 = vector.extract_strided_slice %436 {offsets = [1, 0], sizes = [1, 256], strides = [1, 1]} : vector<2x256xf32> to vector<1x256xf32>
    %442 = vector.broadcast %82 : f32 to vector<1x256xf32>
    %443 = arith.mulf %442, %441 : vector<1x256xf32>
    %444 = arith.addf %440, %443 : vector<1x256xf32>
    %445 = vector.extract_strided_slice %130 {offsets = [0, 83], sizes = [2, 256], strides = [1, 1]} : vector<2x384xf32> to vector<2x256xf32>
    %446 = vector.extract_strided_slice %445 {offsets = [0, 0], sizes = [1, 256], strides = [1, 1]} : vector<2x256xf32> to vector<1x256xf32>
    %447 = vector.broadcast %40 : f32 to vector<1x256xf32>
    %448 = arith.mulf %447, %446 : vector<1x256xf32>
    %449 = arith.addf %444, %448 : vector<1x256xf32>
    %450 = vector.extract_strided_slice %445 {offsets = [1, 0], sizes = [1, 256], strides = [1, 1]} : vector<2x256xf32> to vector<1x256xf32>
    %451 = vector.broadcast %89 : f32 to vector<1x256xf32>
    %452 = arith.mulf %451, %450 : vector<1x256xf32>
    %453 = arith.addf %449, %452 : vector<1x256xf32>
    %454 = vector.extract_strided_slice %130 {offsets = [0, 99], sizes = [2, 256], strides = [1, 1]} : vector<2x384xf32> to vector<2x256xf32>
    %455 = vector.extract_strided_slice %454 {offsets = [0, 0], sizes = [1, 256], strides = [1, 1]} : vector<2x256xf32> to vector<1x256xf32>
    %456 = vector.broadcast %47 : f32 to vector<1x256xf32>
    %457 = arith.mulf %456, %455 : vector<1x256xf32>
    %458 = arith.addf %453, %457 : vector<1x256xf32>
    %459 = vector.extract_strided_slice %454 {offsets = [1, 0], sizes = [1, 256], strides = [1, 1]} : vector<2x256xf32> to vector<1x256xf32>
    %460 = vector.broadcast %96 : f32 to vector<1x256xf32>
    %461 = arith.mulf %460, %459 : vector<1x256xf32>
    %462 = arith.addf %458, %461 : vector<1x256xf32>
    %463 = arith.addf %398, %462 : vector<1x256xf32>
    %cst_40 = arith.constant 0.000000e+00 : f32
    %464 = vector.broadcast %cst_40 : f32 to vector<1x256xf32>
    %465 = vector.extract_strided_slice %130 {offsets = [0, 4], sizes = [2, 256], strides = [1, 1]} : vector<2x384xf32> to vector<2x256xf32>
    %466 = vector.extract_strided_slice %465 {offsets = [0, 0], sizes = [1, 256], strides = [1, 1]} : vector<2x256xf32> to vector<1x256xf32>
    %467 = vector.broadcast %6 : f32 to vector<1x256xf32>
    %468 = arith.mulf %467, %466 : vector<1x256xf32>
    %469 = arith.addf %464, %468 : vector<1x256xf32>
    %470 = vector.extract_strided_slice %465 {offsets = [1, 0], sizes = [1, 256], strides = [1, 1]} : vector<2x256xf32> to vector<1x256xf32>
    %471 = vector.broadcast %55 : f32 to vector<1x256xf32>
    %472 = arith.mulf %471, %470 : vector<1x256xf32>
    %473 = arith.addf %469, %472 : vector<1x256xf32>
    %474 = vector.extract_strided_slice %130 {offsets = [0, 20], sizes = [2, 256], strides = [1, 1]} : vector<2x384xf32> to vector<2x256xf32>
    %475 = vector.extract_strided_slice %474 {offsets = [0, 0], sizes = [1, 256], strides = [1, 1]} : vector<2x256xf32> to vector<1x256xf32>
    %476 = vector.broadcast %13 : f32 to vector<1x256xf32>
    %477 = arith.mulf %476, %475 : vector<1x256xf32>
    %478 = arith.addf %473, %477 : vector<1x256xf32>
    %479 = vector.extract_strided_slice %474 {offsets = [1, 0], sizes = [1, 256], strides = [1, 1]} : vector<2x256xf32> to vector<1x256xf32>
    %480 = vector.broadcast %62 : f32 to vector<1x256xf32>
    %481 = arith.mulf %480, %479 : vector<1x256xf32>
    %482 = arith.addf %478, %481 : vector<1x256xf32>
    %483 = vector.extract_strided_slice %130 {offsets = [0, 36], sizes = [2, 256], strides = [1, 1]} : vector<2x384xf32> to vector<2x256xf32>
    %484 = vector.extract_strided_slice %483 {offsets = [0, 0], sizes = [1, 256], strides = [1, 1]} : vector<2x256xf32> to vector<1x256xf32>
    %485 = vector.broadcast %20 : f32 to vector<1x256xf32>
    %486 = arith.mulf %485, %484 : vector<1x256xf32>
    %487 = arith.addf %482, %486 : vector<1x256xf32>
    %488 = vector.extract_strided_slice %483 {offsets = [1, 0], sizes = [1, 256], strides = [1, 1]} : vector<2x256xf32> to vector<1x256xf32>
    %489 = vector.broadcast %69 : f32 to vector<1x256xf32>
    %490 = arith.mulf %489, %488 : vector<1x256xf32>
    %491 = arith.addf %487, %490 : vector<1x256xf32>
    %492 = vector.extract_strided_slice %130 {offsets = [0, 52], sizes = [2, 256], strides = [1, 1]} : vector<2x384xf32> to vector<2x256xf32>
    %493 = vector.extract_strided_slice %492 {offsets = [0, 0], sizes = [1, 256], strides = [1, 1]} : vector<2x256xf32> to vector<1x256xf32>
    %494 = vector.broadcast %27 : f32 to vector<1x256xf32>
    %495 = arith.mulf %494, %493 : vector<1x256xf32>
    %496 = arith.addf %491, %495 : vector<1x256xf32>
    %497 = vector.extract_strided_slice %492 {offsets = [1, 0], sizes = [1, 256], strides = [1, 1]} : vector<2x256xf32> to vector<1x256xf32>
    %498 = vector.broadcast %76 : f32 to vector<1x256xf32>
    %499 = arith.mulf %498, %497 : vector<1x256xf32>
    %500 = arith.addf %496, %499 : vector<1x256xf32>
    %501 = vector.extract_strided_slice %130 {offsets = [0, 68], sizes = [2, 256], strides = [1, 1]} : vector<2x384xf32> to vector<2x256xf32>
    %502 = vector.extract_strided_slice %501 {offsets = [0, 0], sizes = [1, 256], strides = [1, 1]} : vector<2x256xf32> to vector<1x256xf32>
    %503 = vector.broadcast %34 : f32 to vector<1x256xf32>
    %504 = arith.mulf %503, %502 : vector<1x256xf32>
    %505 = arith.addf %500, %504 : vector<1x256xf32>
    %506 = vector.extract_strided_slice %501 {offsets = [1, 0], sizes = [1, 256], strides = [1, 1]} : vector<2x256xf32> to vector<1x256xf32>
    %507 = vector.broadcast %83 : f32 to vector<1x256xf32>
    %508 = arith.mulf %507, %506 : vector<1x256xf32>
    %509 = arith.addf %505, %508 : vector<1x256xf32>
    %510 = vector.extract_strided_slice %130 {offsets = [0, 84], sizes = [2, 256], strides = [1, 1]} : vector<2x384xf32> to vector<2x256xf32>
    %511 = vector.extract_strided_slice %510 {offsets = [0, 0], sizes = [1, 256], strides = [1, 1]} : vector<2x256xf32> to vector<1x256xf32>
    %512 = vector.broadcast %41 : f32 to vector<1x256xf32>
    %513 = arith.mulf %512, %511 : vector<1x256xf32>
    %514 = arith.addf %509, %513 : vector<1x256xf32>
    %515 = vector.extract_strided_slice %510 {offsets = [1, 0], sizes = [1, 256], strides = [1, 1]} : vector<2x256xf32> to vector<1x256xf32>
    %516 = vector.broadcast %90 : f32 to vector<1x256xf32>
    %517 = arith.mulf %516, %515 : vector<1x256xf32>
    %518 = arith.addf %514, %517 : vector<1x256xf32>
    %519 = vector.extract_strided_slice %130 {offsets = [0, 100], sizes = [2, 256], strides = [1, 1]} : vector<2x384xf32> to vector<2x256xf32>
    %520 = vector.extract_strided_slice %519 {offsets = [0, 0], sizes = [1, 256], strides = [1, 1]} : vector<2x256xf32> to vector<1x256xf32>
    %521 = vector.broadcast %48 : f32 to vector<1x256xf32>
    %522 = arith.mulf %521, %520 : vector<1x256xf32>
    %523 = arith.addf %518, %522 : vector<1x256xf32>
    %524 = vector.extract_strided_slice %519 {offsets = [1, 0], sizes = [1, 256], strides = [1, 1]} : vector<2x256xf32> to vector<1x256xf32>
    %525 = vector.broadcast %97 : f32 to vector<1x256xf32>
    %526 = arith.mulf %525, %524 : vector<1x256xf32>
    %527 = arith.addf %523, %526 : vector<1x256xf32>
    %528 = arith.mulf %177, %527 : vector<1x256xf32>
    %529 = arith.addf %463, %528 : vector<1x256xf32>
    %cst_41 = arith.constant 0.000000e+00 : f32
    %530 = vector.broadcast %cst_41 : f32 to vector<1x256xf32>
    %531 = vector.extract_strided_slice %130 {offsets = [0, 5], sizes = [2, 256], strides = [1, 1]} : vector<2x384xf32> to vector<2x256xf32>
    %532 = vector.extract_strided_slice %531 {offsets = [0, 0], sizes = [1, 256], strides = [1, 1]} : vector<2x256xf32> to vector<1x256xf32>
    %533 = vector.broadcast %7 : f32 to vector<1x256xf32>
    %534 = arith.mulf %533, %532 : vector<1x256xf32>
    %535 = arith.addf %530, %534 : vector<1x256xf32>
    %536 = vector.extract_strided_slice %531 {offsets = [1, 0], sizes = [1, 256], strides = [1, 1]} : vector<2x256xf32> to vector<1x256xf32>
    %537 = vector.broadcast %56 : f32 to vector<1x256xf32>
    %538 = arith.mulf %537, %536 : vector<1x256xf32>
    %539 = arith.addf %535, %538 : vector<1x256xf32>
    %540 = vector.extract_strided_slice %130 {offsets = [0, 21], sizes = [2, 256], strides = [1, 1]} : vector<2x384xf32> to vector<2x256xf32>
    %541 = vector.extract_strided_slice %540 {offsets = [0, 0], sizes = [1, 256], strides = [1, 1]} : vector<2x256xf32> to vector<1x256xf32>
    %542 = vector.broadcast %14 : f32 to vector<1x256xf32>
    %543 = arith.mulf %542, %541 : vector<1x256xf32>
    %544 = arith.addf %539, %543 : vector<1x256xf32>
    %545 = vector.extract_strided_slice %540 {offsets = [1, 0], sizes = [1, 256], strides = [1, 1]} : vector<2x256xf32> to vector<1x256xf32>
    %546 = vector.broadcast %63 : f32 to vector<1x256xf32>
    %547 = arith.mulf %546, %545 : vector<1x256xf32>
    %548 = arith.addf %544, %547 : vector<1x256xf32>
    %549 = vector.extract_strided_slice %130 {offsets = [0, 37], sizes = [2, 256], strides = [1, 1]} : vector<2x384xf32> to vector<2x256xf32>
    %550 = vector.extract_strided_slice %549 {offsets = [0, 0], sizes = [1, 256], strides = [1, 1]} : vector<2x256xf32> to vector<1x256xf32>
    %551 = vector.broadcast %21 : f32 to vector<1x256xf32>
    %552 = arith.mulf %551, %550 : vector<1x256xf32>
    %553 = arith.addf %548, %552 : vector<1x256xf32>
    %554 = vector.extract_strided_slice %549 {offsets = [1, 0], sizes = [1, 256], strides = [1, 1]} : vector<2x256xf32> to vector<1x256xf32>
    %555 = vector.broadcast %70 : f32 to vector<1x256xf32>
    %556 = arith.mulf %555, %554 : vector<1x256xf32>
    %557 = arith.addf %553, %556 : vector<1x256xf32>
    %558 = vector.extract_strided_slice %130 {offsets = [0, 53], sizes = [2, 256], strides = [1, 1]} : vector<2x384xf32> to vector<2x256xf32>
    %559 = vector.extract_strided_slice %558 {offsets = [0, 0], sizes = [1, 256], strides = [1, 1]} : vector<2x256xf32> to vector<1x256xf32>
    %560 = vector.broadcast %28 : f32 to vector<1x256xf32>
    %561 = arith.mulf %560, %559 : vector<1x256xf32>
    %562 = arith.addf %557, %561 : vector<1x256xf32>
    %563 = vector.extract_strided_slice %558 {offsets = [1, 0], sizes = [1, 256], strides = [1, 1]} : vector<2x256xf32> to vector<1x256xf32>
    %564 = vector.broadcast %77 : f32 to vector<1x256xf32>
    %565 = arith.mulf %564, %563 : vector<1x256xf32>
    %566 = arith.addf %562, %565 : vector<1x256xf32>
    %567 = vector.extract_strided_slice %130 {offsets = [0, 69], sizes = [2, 256], strides = [1, 1]} : vector<2x384xf32> to vector<2x256xf32>
    %568 = vector.extract_strided_slice %567 {offsets = [0, 0], sizes = [1, 256], strides = [1, 1]} : vector<2x256xf32> to vector<1x256xf32>
    %569 = vector.broadcast %35 : f32 to vector<1x256xf32>
    %570 = arith.mulf %569, %568 : vector<1x256xf32>
    %571 = arith.addf %566, %570 : vector<1x256xf32>
    %572 = vector.extract_strided_slice %567 {offsets = [1, 0], sizes = [1, 256], strides = [1, 1]} : vector<2x256xf32> to vector<1x256xf32>
    %573 = vector.broadcast %84 : f32 to vector<1x256xf32>
    %574 = arith.mulf %573, %572 : vector<1x256xf32>
    %575 = arith.addf %571, %574 : vector<1x256xf32>
    %576 = vector.extract_strided_slice %130 {offsets = [0, 85], sizes = [2, 256], strides = [1, 1]} : vector<2x384xf32> to vector<2x256xf32>
    %577 = vector.extract_strided_slice %576 {offsets = [0, 0], sizes = [1, 256], strides = [1, 1]} : vector<2x256xf32> to vector<1x256xf32>
    %578 = vector.broadcast %42 : f32 to vector<1x256xf32>
    %579 = arith.mulf %578, %577 : vector<1x256xf32>
    %580 = arith.addf %575, %579 : vector<1x256xf32>
    %581 = vector.extract_strided_slice %576 {offsets = [1, 0], sizes = [1, 256], strides = [1, 1]} : vector<2x256xf32> to vector<1x256xf32>
    %582 = vector.broadcast %91 : f32 to vector<1x256xf32>
    %583 = arith.mulf %582, %581 : vector<1x256xf32>
    %584 = arith.addf %580, %583 : vector<1x256xf32>
    %585 = vector.extract_strided_slice %130 {offsets = [0, 101], sizes = [2, 256], strides = [1, 1]} : vector<2x384xf32> to vector<2x256xf32>
    %586 = vector.extract_strided_slice %585 {offsets = [0, 0], sizes = [1, 256], strides = [1, 1]} : vector<2x256xf32> to vector<1x256xf32>
    %587 = vector.broadcast %49 : f32 to vector<1x256xf32>
    %588 = arith.mulf %587, %586 : vector<1x256xf32>
    %589 = arith.addf %584, %588 : vector<1x256xf32>
    %590 = vector.extract_strided_slice %585 {offsets = [1, 0], sizes = [1, 256], strides = [1, 1]} : vector<2x256xf32> to vector<1x256xf32>
    %591 = vector.broadcast %98 : f32 to vector<1x256xf32>
    %592 = arith.mulf %591, %590 : vector<1x256xf32>
    %593 = arith.addf %589, %592 : vector<1x256xf32>
    %594 = arith.mulf %188, %593 : vector<1x256xf32>
    %595 = arith.addf %529, %594 : vector<1x256xf32>
    %cst_42 = arith.constant 0.000000e+00 : f32
    %596 = vector.broadcast %cst_42 : f32 to vector<1x256xf32>
    %597 = vector.extract_strided_slice %130 {offsets = [0, 6], sizes = [2, 256], strides = [1, 1]} : vector<2x384xf32> to vector<2x256xf32>
    %598 = vector.extract_strided_slice %597 {offsets = [0, 0], sizes = [1, 256], strides = [1, 1]} : vector<2x256xf32> to vector<1x256xf32>
    %599 = vector.broadcast %8 : f32 to vector<1x256xf32>
    %600 = arith.mulf %599, %598 : vector<1x256xf32>
    %601 = arith.addf %596, %600 : vector<1x256xf32>
    %602 = vector.extract_strided_slice %597 {offsets = [1, 0], sizes = [1, 256], strides = [1, 1]} : vector<2x256xf32> to vector<1x256xf32>
    %603 = vector.broadcast %57 : f32 to vector<1x256xf32>
    %604 = arith.mulf %603, %602 : vector<1x256xf32>
    %605 = arith.addf %601, %604 : vector<1x256xf32>
    %606 = vector.extract_strided_slice %130 {offsets = [0, 22], sizes = [2, 256], strides = [1, 1]} : vector<2x384xf32> to vector<2x256xf32>
    %607 = vector.extract_strided_slice %606 {offsets = [0, 0], sizes = [1, 256], strides = [1, 1]} : vector<2x256xf32> to vector<1x256xf32>
    %608 = vector.broadcast %15 : f32 to vector<1x256xf32>
    %609 = arith.mulf %608, %607 : vector<1x256xf32>
    %610 = arith.addf %605, %609 : vector<1x256xf32>
    %611 = vector.extract_strided_slice %606 {offsets = [1, 0], sizes = [1, 256], strides = [1, 1]} : vector<2x256xf32> to vector<1x256xf32>
    %612 = vector.broadcast %64 : f32 to vector<1x256xf32>
    %613 = arith.mulf %612, %611 : vector<1x256xf32>
    %614 = arith.addf %610, %613 : vector<1x256xf32>
    %615 = vector.extract_strided_slice %130 {offsets = [0, 38], sizes = [2, 256], strides = [1, 1]} : vector<2x384xf32> to vector<2x256xf32>
    %616 = vector.extract_strided_slice %615 {offsets = [0, 0], sizes = [1, 256], strides = [1, 1]} : vector<2x256xf32> to vector<1x256xf32>
    %617 = vector.broadcast %22 : f32 to vector<1x256xf32>
    %618 = arith.mulf %617, %616 : vector<1x256xf32>
    %619 = arith.addf %614, %618 : vector<1x256xf32>
    %620 = vector.extract_strided_slice %615 {offsets = [1, 0], sizes = [1, 256], strides = [1, 1]} : vector<2x256xf32> to vector<1x256xf32>
    %621 = vector.broadcast %71 : f32 to vector<1x256xf32>
    %622 = arith.mulf %621, %620 : vector<1x256xf32>
    %623 = arith.addf %619, %622 : vector<1x256xf32>
    %624 = vector.extract_strided_slice %130 {offsets = [0, 54], sizes = [2, 256], strides = [1, 1]} : vector<2x384xf32> to vector<2x256xf32>
    %625 = vector.extract_strided_slice %624 {offsets = [0, 0], sizes = [1, 256], strides = [1, 1]} : vector<2x256xf32> to vector<1x256xf32>
    %626 = vector.broadcast %29 : f32 to vector<1x256xf32>
    %627 = arith.mulf %626, %625 : vector<1x256xf32>
    %628 = arith.addf %623, %627 : vector<1x256xf32>
    %629 = vector.extract_strided_slice %624 {offsets = [1, 0], sizes = [1, 256], strides = [1, 1]} : vector<2x256xf32> to vector<1x256xf32>
    %630 = vector.broadcast %78 : f32 to vector<1x256xf32>
    %631 = arith.mulf %630, %629 : vector<1x256xf32>
    %632 = arith.addf %628, %631 : vector<1x256xf32>
    %633 = vector.extract_strided_slice %130 {offsets = [0, 70], sizes = [2, 256], strides = [1, 1]} : vector<2x384xf32> to vector<2x256xf32>
    %634 = vector.extract_strided_slice %633 {offsets = [0, 0], sizes = [1, 256], strides = [1, 1]} : vector<2x256xf32> to vector<1x256xf32>
    %635 = vector.broadcast %36 : f32 to vector<1x256xf32>
    %636 = arith.mulf %635, %634 : vector<1x256xf32>
    %637 = arith.addf %632, %636 : vector<1x256xf32>
    %638 = vector.extract_strided_slice %633 {offsets = [1, 0], sizes = [1, 256], strides = [1, 1]} : vector<2x256xf32> to vector<1x256xf32>
    %639 = vector.broadcast %85 : f32 to vector<1x256xf32>
    %640 = arith.mulf %639, %638 : vector<1x256xf32>
    %641 = arith.addf %637, %640 : vector<1x256xf32>
    %642 = vector.extract_strided_slice %130 {offsets = [0, 86], sizes = [2, 256], strides = [1, 1]} : vector<2x384xf32> to vector<2x256xf32>
    %643 = vector.extract_strided_slice %642 {offsets = [0, 0], sizes = [1, 256], strides = [1, 1]} : vector<2x256xf32> to vector<1x256xf32>
    %644 = vector.broadcast %43 : f32 to vector<1x256xf32>
    %645 = arith.mulf %644, %643 : vector<1x256xf32>
    %646 = arith.addf %641, %645 : vector<1x256xf32>
    %647 = vector.extract_strided_slice %642 {offsets = [1, 0], sizes = [1, 256], strides = [1, 1]} : vector<2x256xf32> to vector<1x256xf32>
    %648 = vector.broadcast %92 : f32 to vector<1x256xf32>
    %649 = arith.mulf %648, %647 : vector<1x256xf32>
    %650 = arith.addf %646, %649 : vector<1x256xf32>
    %651 = vector.extract_strided_slice %130 {offsets = [0, 102], sizes = [2, 256], strides = [1, 1]} : vector<2x384xf32> to vector<2x256xf32>
    %652 = vector.extract_strided_slice %651 {offsets = [0, 0], sizes = [1, 256], strides = [1, 1]} : vector<2x256xf32> to vector<1x256xf32>
    %653 = vector.broadcast %50 : f32 to vector<1x256xf32>
    %654 = arith.mulf %653, %652 : vector<1x256xf32>
    %655 = arith.addf %650, %654 : vector<1x256xf32>
    %656 = vector.extract_strided_slice %651 {offsets = [1, 0], sizes = [1, 256], strides = [1, 1]} : vector<2x256xf32> to vector<1x256xf32>
    %657 = vector.broadcast %99 : f32 to vector<1x256xf32>
    %658 = arith.mulf %657, %656 : vector<1x256xf32>
    %659 = arith.addf %655, %658 : vector<1x256xf32>
    %660 = arith.mulf %199, %659 : vector<1x256xf32>
    %661 = arith.addf %595, %660 : vector<1x256xf32>
    %662 = arith.negf %661 : vector<1x256xf32>
    %663 = math.exp %662 : vector<1x256xf32>
    %cst_43 = arith.constant 1.000000e+00 : f32
    %664 = vector.broadcast %cst_43 : f32 to vector<1x256xf32>
    %665 = arith.addf %664, %663 : vector<1x256xf32>
    %666 = arith.divf %664, %665 : vector<1x256xf32>
    %667 = vector.broadcast %120 : vector<32x1xf32> to vector<32x256xf32>
    %668 = arith.mulf %1, %667 : vector<32x256xf32>
    %669 = vector.broadcast %666 : vector<1x256xf32> to vector<32x256xf32>
    %670 = arith.mulf %668, %669 : vector<32x256xf32>
    %c0_44 = arith.constant 0 : index
    %c0_45 = arith.constant 0 : index
    %c0_46 = arith.constant 0 : index
    %671 = vector.load %arg5[%c0_44, %c0_45, %c0_46] : memref<1x32x256xf32, #tpu.memory_space<vmem>>, vector<1x32x256xf32>
    %672 = vector.shape_cast %671 : vector<1x32x256xf32> to vector<32x256xf32>
    %673 = vector.shape_cast %670 : vector<32x256xf32> to vector<1x32x256xf32>
    tpu.vector_store %arg5[%c0_44, %c0_45, %c0_46], %673 {strides = array<i32>} : memref<1x32x256xf32, #tpu.memory_space<vmem>>, vector<1x32x256xf32>,
    return
  }
  func.func @transform_0(%arg0: i32) -> (i32, i32, i32) {
    %c0_i32 = arith.constant 0 : i32
    %c0_i32_0 = arith.constant 0 : i32
    %c0_i32_1 = arith.constant 0 : i32
    return %arg0, %c0_i32, %c0_i32_0 : i32, i32, i32
  }
  func.func @transform_1(%arg0: i32) -> (i32, i32) {
    %c0_i32 = arith.constant 0 : i32
    %c0_i32_0 = arith.constant 0 : i32
    %c0_i32_1 = arith.constant 0 : i32
    return %c0_i32, %c0_i32_0 : i32, i32
  }
  func.func @transform_2(%arg0: i32) -> (i32, i32) {
    %c0_i32 = arith.constant 0 : i32
    %c0_i32_0 = arith.constant 0 : i32
    %c0_i32_1 = arith.constant 0 : i32
    return %c0_i32, %c0_i32_0 : i32, i32
  }
  func.func @transform_3(%arg0: i32) -> i32 {
    %c0_i32 = arith.constant 0 : i32
    %c0_i32_0 = arith.constant 0 : i32
    return %c0_i32 : i32
  }
  func.func @transform_4(%arg0: i32) -> (i32, i32, i32) {
    %c0_i32 = arith.constant 0 : i32
    %c0_i32_0 = arith.constant 0 : i32
    %c0_i32_1 = arith.constant 0 : i32
    return %arg0, %c0_i32, %c0_i32_0 : i32, i32, i32
  }
}

</mosaic_0001>

<llo_original>
// kernel: tpu_custom_call.1
$region0: #{tpu_custom_call.1}
  #allocation0 [shape = 'u32[]', space=smem, size = 0x4, offset = 0x4, fixed_abs, tag = 'smem constant byte address 0x4 - core index']
  #allocation1 [shape = 'u32[144,128]{1,0:T(1,128)}', space=vmem, size = 0x12000, scoped, tag = 'internal scratch']
  %s0 = inlined_call_operand.hbm [shape: f32[2,32,256], index: 0, kind: input, shape index: {}]
  %s1 = inlined_call_operand.vmem [shape: f32[2,32], index: 1, kind: input, shape index: {}]
  %s2 = inlined_call_operand.vmem [shape: f32[32,2], index: 2, kind: input, shape index: {}]
  %s3 = inlined_call_operand.vmem [shape: f32[98], index: 3, kind: input, shape index: {}]
  %s4 = inlined_call_operand.hbm [shape: f32[2,32,256], index: 4, kind: output, shape index: {}]
  %s5 = sld [smem:[#allocation0]]
  $region57: #{tpu_custom_call.1} parent=0
    _
  %s7 = ssub.s32 1, %s5
  %s8 = scalar_select 0, %s7, %s5
  $region1: #{tpu_custom_call.1} parent=0
    #allocation2 [shape = 'u8[65536]{0}', space=vmem, size = 0x10000, scoped, tag = 'input window, operand 0']
    #allocation3 [shape = 's32[2]{0}', space=sflag, size = 0x8, scoped, tag = 'scoped memory for tpu_custom_call.1']
    #allocation4 [shape = 's32[2]{0}', space=sflag, size = 0x8, scoped, tag = 'scoped memory for tpu_custom_call.1']
    #allocation5 [shape = 's32[2]{0}', space=sflag, size = 0x8, scoped, tag = 'scoped memory for tpu_custom_call.1']
    #allocation6 [shape = 'u8[512]{0}', space=smem, size = 0x200, scoped, tag = 'input window, operand 3, single buffered']
    #allocation7 [shape = 'u8[65536]{0}', space=vmem, size = 0x10000, scoped, tag = 'output window, operand 0']
    %9 = vsyncpa [#allocation3], 0
    %s10 = scalar_lea.sflag [#allocation3], 1
    %11 = vsyncpa %s10, 0
    %12 = vsyncpa [#allocation5], 0
    %13 = vsyncpa [#allocation4], 0
    %s14 = scalar_lea.sflag [#allocation4], 1
    %15 = vsyncpa %s14, 0
    loop: start=0, step=1, limit=4
    $region2: #{tpu_custom_call.1} parent=1 // loop_pre_header
      _
    $region3: #{tpu_custom_call.1} parent=1 // loop_header
      %s17 = sphi 0, %s21
      %p18 = scmp.ge.s32.totalorder %s17, 4
      %s27 = sphi 0, %s29
      %s30 = sphi 0, %s27
      %s31 = sphi 0, %s30
      %s47 = sphi 0, %s31
      %s51 = sphi 0, %s51
      %s53 = sphi 0, %s51
      %s54 = sphi 0, %s53
      %s68 = sphi 0, %s54
      %s72 = sphi 0, %s72
      %s74 = sphi 0, %s72
      %s75 = sphi 0, %s74
      %s89 = sphi 0, %s75
      %s93 = sphi 0, %s93
      %s95 = sphi 0, %s93
      %s96 = sphi 0, %s95
      %s110 = sphi 0, %s96
      %s116 = sphi 0, %s118
      %s119 = sphi 0, %s116
      %s120 = sphi 0, %s119
      %s136 = sphi 0, %s120
    $region4: #{tpu_custom_call.1} parent=1 // loop_header_branch
      %20 = sbr.rel (%p18) target = $region8
    $region5: #{tpu_custom_call.1} parent=1 // loop_body
      %s22 = ssub.s32 %s17, 1
      %s23 = ssub.s32 %s17, 2
      %s24 = sadd.s32 %s17, 1
      %s25 = ssub.s32 %s17, %s24
      %p26 = scmp.eq.s32.totalorder %s25, 0
      %s28 = sadd.s32 %s27, 1
      %s29 = scalar_select %p26, %s27, %s28
      %p32 = pneg %p26
      %p33 = scmp.eq.s32.totalorder %s17, 1
      %p34 = por %p32, %p33
      %p35 = scmp.ne.s32.totalorder %s27, %s30
      %p36 = scmp.eq.s32.totalorder %s17, 0
      %p37 = por %p35, %p36
      %p38 = scmp.ne.s32.totalorder %s27, %s30
      %p39 = scmp.eq.s32.totalorder %s22, 1
      %p40 = por %p38, %p39
      %p41 = scmp.ne.s32.totalorder %s30, %s31
      %p42 = scmp.eq.s32.totalorder %s22, 0
      %p43 = por %p41, %p42
      %p44 = scmp.ne.s32.totalorder %s30, %s31
      %p45 = scmp.eq.s32.totalorder %s23, 1
      %p46 = por %p44, %p45
      %p48 = scmp.ne.s32.totalorder %s31, %s47
      %p49 = scmp.eq.s32.totalorder %s23, 0
      %p50 = por %p48, %p49
      %s52 = sadd.s32 %s51, 1
      %p55 = scmp.eq.s32.totalorder %s17, 1
      %p56 = scmp.ne.s32.totalorder %s51, %s53
      %p57 = scmp.eq.s32.totalorder %s17, 0
      %p58 = por %p56, %p57
      %p59 = scmp.ne.s32.totalorder %s51, %s53
      %p60 = scmp.eq.s32.totalorder %s22, 1
      %p61 = por %p59, %p60
      %p62 = scmp.ne.s32.totalorder %s53, %s54
      %p63 = scmp.eq.s32.totalorder %s22, 0
      %p64 = por %p62, %p63
      %p65 = scmp.ne.s32.totalorder %s53, %s54
      %p66 = scmp.eq.s32.totalorder %s23, 1
      %p67 = por %p65, %p66
      %p69 = scmp.ne.s32.totalorder %s54, %s68
      %p70 = scmp.eq.s32.totalorder %s23, 0
      %p71 = por %p69, %p70
      %s73 = sadd.s32 %s72, 1
      %p76 = scmp.eq.s32.totalorder %s17, 1
      %p77 = scmp.ne.s32.totalorder %s72, %s74
      %p78 = scmp.eq.s32.totalorder %s17, 0
      %p79 = por %p77, %p78
      %p80 = scmp.ne.s32.totalorder %s72, %s74
      %p81 = scmp.eq.s32.totalorder %s22, 1
      %p82 = por %p80, %p81
      %p83 = scmp.ne.s32.totalorder %s74, %s75
      %p84 = scmp.eq.s32.totalorder %s22, 0
      %p85 = por %p83, %p84
      %p86 = scmp.ne.s32.totalorder %s74, %s75
      %p87 = scmp.eq.s32.totalorder %s23, 1
      %p88 = por %p86, %p87
      %p90 = scmp.ne.s32.totalorder %s75, %s89
      %p91 = scmp.eq.s32.totalorder %s23, 0
      %p92 = por %p90, %p91
      %s94 = sadd.s32 %s93, 1
      %p97 = scmp.eq.s32.totalorder %s17, 1
      %p98 = scmp.ne.s32.totalorder %s93, %s95
      %p99 = scmp.eq.s32.totalorder %s17, 0
      %p100 = por %p98, %p99
      %p101 = scmp.ne.s32.totalorder %s93, %s95
      %p102 = scmp.eq.s32.totalorder %s22, 1
      %p103 = por %p101, %p102
      %p104 = scmp.ne.s32.totalorder %s95, %s96
      %p105 = scmp.eq.s32.totalorder %s22, 0
      %p106 = por %p104, %p105
      %p107 = scmp.ne.s32.totalorder %s95, %s96
      %p108 = scmp.eq.s32.totalorder %s23, 1
      %p109 = por %p107, %p108
      %p111 = scmp.ne.s32.totalorder %s96, %s110
      %p112 = scmp.eq.s32.totalorder %s23, 0
      %p113 = por %p111, %p112
      %s114 = ssub.s32 %s17, %s24
      %p115 = scmp.eq.s32.totalorder %s114, 0
      %s117 = sadd.s32 %s116, 1
      %s118 = scalar_select %p115, %s116, %s117
      %p121 = pneg %p115
      %p122 = scmp.eq.s32.totalorder %s17, 1
      %p123 = por %p121, %p122
      %p124 = scmp.ne.s32.totalorder %s116, %s119
      %p125 = scmp.eq.s32.totalorder %s17, 0
      %p126 = por %p124, %p125
      %p127 = scmp.ne.s32.totalorder %s116, %s119
      %p128 = scmp.eq.s32.totalorder %s22, 1
      %p129 = por %p127, %p128
      %p130 = scmp.ne.s32.totalorder %s119, %s120
      %p131 = scmp.eq.s32.totalorder %s22, 0
      %p132 = por %p130, %p131
      %p133 = scmp.ne.s32.totalorder %s119, %s120
      %p134 = scmp.eq.s32.totalorder %s23, 1
      %p135 = por %p133, %p134
      %p137 = scmp.ne.s32.totalorder %s120, %s136
      %p138 = scmp.eq.s32.totalorder %s23, 0
      %p139 = por %p137, %p138
      %p140 = scmp.le.s32.totalorder 1, %s17
      %p141 = scmp.lt.s32.totalorder %s17, 3
      %p142 = pnand %p140, %p141
      %p143 = pneg %p142
      // Predicated region
      $region9: #{tpu_custom_call.1} parent=5 // pred_check
        _
      $region10: #{tpu_custom_call.1} parent=5 // pred_check_branch
        %145 = sbr.rel (%p142) target = $region12
      $region11: #{tpu_custom_call.1} parent=5 // pred_region
        %s146 = ssub.s32 %s17, 1
        // Predicated region
        $region13: #{tpu_custom_call.1} parent=11 // pred_check
          %p147 = pneg %p64
        $region14: #{tpu_custom_call.1} parent=11 // pred_check_branch
          %149 = sbr.rel (%p147) target = $region16
        $region15: #{tpu_custom_call.1} parent=11 // pred_region
          _
        $region16: #{tpu_custom_call.1} parent=11 // pred_fallthru
          _
        // Predicated region
        $region17: #{tpu_custom_call.1} parent=11 // pred_check
          %p150 = pneg %p85
        $region18: #{tpu_custom_call.1} parent=11 // pred_check_branch
          %152 = sbr.rel (%p150) target = $region20
        $region19: #{tpu_custom_call.1} parent=11 // pred_region
          _
        $region20: #{tpu_custom_call.1} parent=11 // pred_fallthru
          _
        // Predicated region
        $region21: #{tpu_custom_call.1} parent=11 // pred_check
          %p153 = pneg %p106
        $region22: #{tpu_custom_call.1} parent=11 // pred_check_branch
          %155 = sbr.rel (%p153) target = $region24
        $region23: #{tpu_custom_call.1} parent=11 // pred_region
          %s157 = ssub.s32 16, 16
          %158 = vsyncadd [#allocation5], %s157
          %s160 = sshll.u32 %s3, 4
          %s161 = int_to_ptr.vmem [resolvable:$true] %s160
          %163 = dma.vmem_to_smem %s161, 16, [#allocation6], [#allocation5]
        $region24: #{tpu_custom_call.1} parent=11 // pred_fallthru
          _
      $region12: #{tpu_custom_call.1} parent=5 // pred_fallthru
        _
      %p164 = scmp.lt.s32.totalorder %s17, 2
      // Predicated region
      $region25: #{tpu_custom_call.1} parent=5 // pred_check
        %p165 = pneg %p164
      $region26: #{tpu_custom_call.1} parent=5 // pred_check_branch
        %167 = sbr.rel (%p165) target = $region28
      $region27: #{tpu_custom_call.1} parent=5 // pred_region
        // Predicated region
        $region29: #{tpu_custom_call.1} parent=27 // pred_check
          %p168 = pneg %p37
        $region30: #{tpu_custom_call.1} parent=27 // pred_check_branch
          %170 = sbr.rel (%p168) target = $region32
        $region31: #{tpu_custom_call.1} parent=27 // pred_region
          %s171 = sand.u32 %s27, 1
          %s172 = scalar_lea.sflag [#allocation3], %s171
          %s173 = sand.u32 %s27, 1
          %s174 = smul.addr %s173, 64
          %s175 = scalar_lea.vmem [#allocation2], %s174
          %s177 = ssub.s32 1024, 1024
          %178 = vsyncadd %s172, %s177
          %s179 = smul.addr %s17, 8
          %s180 = smul.addr %s179, 128
          %s181 = scalar_lea.hbm %s0, %s180
          %s182 = sshll.u32 %s175, 4
          %s183 = int_to_ptr.vmem [resolvable:$true] %s182
          %188 = dma.hbm_to_vmem [thread:$0]  %s181, 1024, %s183, %s172, 256, 256, 16
        $region32: #{tpu_custom_call.1} parent=27 // pred_fallthru
          _
      $region28: #{tpu_custom_call.1} parent=5 // pred_fallthru
        _
      %p189 = scmp.le.s32.totalorder 1, %s17
      %p190 = scmp.lt.s32.totalorder %s17, 3
      %p191 = pnand %p189, %p190
      %p192 = pneg %p191
      // Predicated region
      $region33: #{tpu_custom_call.1} parent=5 // pred_check
        _
      $region34: #{tpu_custom_call.1} parent=5 // pred_check_branch
        %194 = sbr.rel (%p191) target = $region36
      $region35: #{tpu_custom_call.1} parent=5 // pred_region
        %s195 = ssub.s32 %s17, 1
        %s196 = sand.u32 %s30, 1
        %s197 = scalar_lea.sflag [#allocation3], %s196
        %s198 = sand.u32 %s30, 1
        %s199 = smul.addr %s198, 64
        %s200 = scalar_lea.vmem [#allocation2], %s199
        // Predicated region
        $region37: #{tpu_custom_call.1} parent=35 // pred_check
          %p201 = pneg %p43
        $region38: #{tpu_custom_call.1} parent=35 // pred_check_branch
          %203 = sbr.rel (%p201) target = $region40
        $region39: #{tpu_custom_call.1} parent=35 // pred_region
          %204 = dma.done %s197, 1024
        $region40: #{tpu_custom_call.1} parent=35 // pred_fallthru
          _
        // Predicated region
        $region41: #{tpu_custom_call.1} parent=35 // pred_check
          %p205 = pneg %p106
        $region42: #{tpu_custom_call.1} parent=35 // pred_check_branch
          %207 = sbr.rel (%p205) target = $region44
        $region43: #{tpu_custom_call.1} parent=35 // pred_region
          %208 = dma.done [#allocation5], 16
        $region44: #{tpu_custom_call.1} parent=35 // pred_fallthru
          _
        %209 = sfence
        %s210 = sand.u32 %s30, 1
        %s211 = scalar_lea.sflag [#allocation3], %s210
        %s212 = sand.u32 %s30, 1
        %s213 = smul.addr %s212, 64
        %s214 = scalar_lea.vmem [#allocation2], %s213
        %p215 = pneg %p43
        %p216 = pneg %p40
        %p217 = pneg %p64
        %p218 = pneg %p61
        %p219 = pneg %p85
        %p220 = pneg %p82
        %p221 = pneg %p106
        %p222 = pneg %p103
        %p223 = pneg %p132
        %p224 = pneg %p129
        %s225 = sand.u32 %s119, 1
        %s226 = scalar_lea.sflag [#allocation4], %s225
        %s227 = sand.u32 %s119, 1
        %s228 = smul.addr %s227, 64
        %s229 = scalar_lea.vmem [#allocation7], %s228
        %v230 = vld [vmem:[%s200] sm:$0xff]
        %v231 = vld [vmem:[%s200 + $0x8] sm:$0xff]
        %v232 = vld [vmem:[%s200 + $0x10] sm:$0xff]
        %v233 = vld [vmem:[%s200 + $0x18] sm:$0xff]
        %v234 = vld [vmem:[%s200 + $0x20] sm:$0xff]
        %v235 = vld [vmem:[%s200 + $0x28] sm:$0xff]
        %v236 = vld [vmem:[%s200 + $0x30] sm:$0xff]
        %v237 = vld [vmem:[%s200 + $0x38] sm:$0xff]
        %s238 = sld [smem:[#allocation6]]
        %s239 = sld [smem:[#allocation6 + $0x1]]
        %s240 = sld [smem:[#allocation6 + $0x2]]
        %s241 = sld [smem:[#allocation6 + $0x3]]
        %s242 = sld [smem:[#allocation6 + $0x4]]
        %s243 = sld [smem:[#allocation6 + $0x5]]
        %s244 = sld [smem:[#allocation6 + $0x6]]
        %s245 = sld [smem:[#allocation6 + $0x7]]
        %s246 = sld [smem:[#allocation6 + $0x8]]
        %s247 = sld [smem:[#allocation6 + $0x9]]
        %s248 = sld [smem:[#allocation6 + $0xa]]
        %s249 = sld [smem:[#allocation6 + $0xb]]
        %s250 = sld [smem:[#allocation6 + $0xc]]
        %s251 = sld [smem:[#allocation6 + $0xd]]
        %s252 = sld [smem:[#allocation6 + $0xe]]
        %s253 = sld [smem:[#allocation6 + $0xf]]
        %s254 = sld [smem:[#allocation6 + $0x10]]
        %s255 = sld [smem:[#allocation6 + $0x11]]
        %s256 = sld [smem:[#allocation6 + $0x12]]
        %s257 = sld [smem:[#allocation6 + $0x13]]
        %s258 = sld [smem:[#allocation6 + $0x14]]
        %s259 = sld [smem:[#allocation6 + $0x15]]
        %s260 = sld [smem:[#allocation6 + $0x16]]
        %s261 = sld [smem:[#allocation6 + $0x17]]
        %s262 = sld [smem:[#allocation6 + $0x18]]
        %s263 = sld [smem:[#allocation6 + $0x19]]
        %s264 = sld [smem:[#allocation6 + $0x1a]]
        %s265 = sld [smem:[#allocation6 + $0x1b]]
        %s266 = sld [smem:[#allocation6 + $0x1c]]
        %s267 = sld [smem:[#allocation6 + $0x1d]]
        %s268 = sld [smem:[#allocation6 + $0x1e]]
        %s269 = sld [smem:[#allocation6 + $0x1f]]
        %s270 = sld [smem:[#allocation6 + $0x20]]
        %s271 = sld [smem:[#allocation6 + $0x21]]
        %s272 = sld [smem:[#allocation6 + $0x22]]
        %s273 = sld [smem:[#allocation6 + $0x23]]
        %s274 = sld [smem:[#allocation6 + $0x24]]
        %s275 = sld [smem:[#allocation6 + $0x25]]
        %s276 = sld [smem:[#allocation6 + $0x26]]
        %s277 = sld [smem:[#allocation6 + $0x27]]
        %s278 = sld [smem:[#allocation6 + $0x28]]
        %s279 = sld [smem:[#allocation6 + $0x29]]
        %s280 = sld [smem:[#allocation6 + $0x2a]]
        %s281 = sld [smem:[#allocation6 + $0x2b]]
        %s282 = sld [smem:[#allocation6 + $0x2c]]
        %s283 = sld [smem:[#allocation6 + $0x2d]]
        %s284 = sld [smem:[#allocation6 + $0x2e]]
        %s285 = sld [smem:[#allocation6 + $0x2f]]
        %s286 = sld [smem:[#allocation6 + $0x30]]
        %s287 = sld [smem:[#allocation6 + $0x31]]
        %s288 = sld [smem:[#allocation6 + $0x32]]
        %s289 = sld [smem:[#allocation6 + $0x33]]
        %s290 = sld [smem:[#allocation6 + $0x34]]
        %s291 = sld [smem:[#allocation6 + $0x35]]
        %s292 = sld [smem:[#allocation6 + $0x36]]
        %s293 = sld [smem:[#allocation6 + $0x37]]
        %s294 = sld [smem:[#allocation6 + $0x38]]
        %s295 = sld [smem:[#allocation6 + $0x39]]
        %s296 = sld [smem:[#allocation6 + $0x3a]]
        %s297 = sld [smem:[#allocation6 + $0x3b]]
        %s298 = sld [smem:[#allocation6 + $0x3c]]
        %s299 = sld [smem:[#allocation6 + $0x3d]]
        %s300 = sld [smem:[#allocation6 + $0x3e]]
        %s301 = sld [smem:[#allocation6 + $0x3f]]
        %s302 = sld [smem:[#allocation6 + $0x40]]
        %s303 = sld [smem:[#allocation6 + $0x41]]
        %s304 = sld [smem:[#allocation6 + $0x42]]
        %s305 = sld [smem:[#allocation6 + $0x43]]
        %s306 = sld [smem:[#allocation6 + $0x44]]
        %s307 = sld [smem:[#allocation6 + $0x45]]
        %s308 = sld [smem:[#allocation6 + $0x46]]
        %s309 = sld [smem:[#allocation6 + $0x47]]
        %s310 = sld [smem:[#allocation6 + $0x48]]
        %s311 = sld [smem:[#allocation6 + $0x49]]
        %s312 = sld [smem:[#allocation6 + $0x4a]]
        %s313 = sld [smem:[#allocation6 + $0x4b]]
        %s314 = sld [smem:[#allocation6 + $0x4c]]
        %s315 = sld [smem:[#allocation6 + $0x4d]]
        %s316 = sld [smem:[#allocation6 + $0x4e]]
        %s317 = sld [smem:[#allocation6 + $0x4f]]
        %s318 = sld [smem:[#allocation6 + $0x50]]
        %s319 = sld [smem:[#allocation6 + $0x51]]
        %s320 = sld [smem:[#allocation6 + $0x52]]
        %s321 = sld [smem:[#allocation6 + $0x53]]
        %s322 = sld [smem:[#allocation6 + $0x54]]
        %s323 = sld [smem:[#allocation6 + $0x55]]
        %s324 = sld [smem:[#allocation6 + $0x56]]
        %s325 = sld [smem:[#allocation6 + $0x57]]
        %s326 = sld [smem:[#allocation6 + $0x58]]
        %s327 = sld [smem:[#allocation6 + $0x59]]
        %s328 = sld [smem:[#allocation6 + $0x5a]]
        %s329 = sld [smem:[#allocation6 + $0x5b]]
        %s330 = sld [smem:[#allocation6 + $0x5c]]
        %s331 = sld [smem:[#allocation6 + $0x5d]]
        %s332 = sld [smem:[#allocation6 + $0x5e]]
        %s333 = sld [smem:[#allocation6 + $0x5f]]
        %s334 = sld [smem:[#allocation6 + $0x60]]
        %s335 = sld [smem:[#allocation6 + $0x61]]
        %v336 = vadd.f32 %v230, %v231
        %337 = vadd.xlane.f32.xlu0 %v336
        %v338 = vpop.xlane.xlu0 %337
        %v339 = vadd.f32 %v232, %v233
        %340 = vadd.xlane.f32.xlu0 %v339
        %v341 = vpop.xlane.xlu0 %340
        %v342 = vadd.f32 %v234, %v235
        %343 = vadd.xlane.f32.xlu0 %v342
        %v344 = vpop.xlane.xlu0 %343
        %v345 = vadd.f32 %v236, %v237
        %346 = vadd.xlane.f32.xlu0 %v345
        %v347 = vpop.xlane.xlu0 %346
        %v348 = vrcp.pop 256.0
        %v349 = vmul.f32 %v338, %v348
        %v350 = vmul.f32 %v341, %v348
        %v351 = vmul.f32 %v344, %v348
        %v352 = vmul.f32 %v347, %v348
        %v353 = vmax.f32 %v230, %v231
        %354 = vmax.xlane.f32.xlu0 %v353
        %v355 = vpop.xlane.xlu0 %354
        %v356 = vmax.f32 %v232, %v233
        %357 = vmax.xlane.f32.xlu0 %v356
        %v358 = vpop.xlane.xlu0 %357
        %v359 = vmax.f32 %v234, %v235
        %360 = vmax.xlane.f32.xlu0 %v359
        %v361 = vpop.xlane.xlu0 %360
        %v362 = vmax.f32 %v236, %v237
        %363 = vmax.xlane.f32.xlu0 %v362
        %v364 = vpop.xlane.xlu0 %363
        %vm365 = vcmask 7168
        %v366 = vsel %vm365, %v349, %v355
        %v367 = vsel %vm365, %v350, %v358
        %v368 = vsel %vm365, %v351, %v361
        %v369 = vsel %vm365, %v352, %v364
        %v370 = vld [vmem:[%s1] sm:$0x3]
        %vm371 = vcmask 261120
        %v373 = vsel %vm371, %v370, 0
        %375 = vmatprep.subr.mxu0 0.0
        %376 = vmatpush1.msra.mxu0 %v366
        %377 = vmatprep.subr.mxu0 0.0
        %378 = vmatpush1.msra.mxu0 %v367
        %379 = vmatprep.subr.mxu0 0.0
        %380 = vmatpush1.msra.mxu0 %v368
        %381 = vmatprep.subr.mxu0 0.0
        %382 = vmatpush1.msra.mxu0 %v369
        %383 = vmatprep.subr.mxu0 0.0
        %384 = vmatpush1.msra.mxu0 0.0
        %385 = vmatprep.subr.mxu0 0.0
        %386 = vmatpush1.msra.mxu0 0.0
        %387 = vmatprep.subr.mxu0 0.0
        %388 = vmatpush1.msra.mxu0 0.0
        %389 = vmatprep.subr.mxu0 0.0
        %390 = vmatpush1.msra.mxu0 0.0
        %391 = vmatprep.subr.mxu0 0.0
        %392 = vmatpush1.msra.mxu0 0.0
        %393 = vmatprep.subr.mxu0 0.0
        %394 = vmatpush1.msra.mxu0 0.0
        %395 = vmatprep.subr.mxu0 0.0
        %396 = vmatpush1.msra.mxu0 0.0
        %397 = vmatprep.subr.mxu0 0.0
        %398 = vmatpush1.msra.mxu0 0.0
        %399 = vmatprep.subr.mxu0 0.0
        %400 = vmatpush1.msra.mxu0 0.0
        %401 = vmatprep.subr.mxu0 0.0
        %402 = vmatpush1.msra.mxu0 0.0
        %403 = vmatprep.subr.mxu0 0.0
        %404 = vmatpush1.msra.mxu0 0.0
        %405 = vmatprep.subr.mxu0 0.0
        %406 = vmatpush1.msra.mxu0 0.0
        %407 = vmatprep.subr.mxu0 0.0
        %408 = vmatpush1.msra.mxu0 0.0
        %409 = vmatprep.subr.mxu0 0.0
        %410 = vmatpush1.msra.mxu0 0.0
        %411 = vmatprep.subr.mxu0 0.0
        %412 = vmatpush1.msra.mxu0 0.0
        %413 = vmatprep.subr.mxu0 0.0
        %414 = vmatpush1.msra.mxu0 0.0
        %415 = vmatprep.subr.mxu0 0.0
        %416 = vmatpush1.msra.mxu0 0.0
        %417 = vmatprep.subr.mxu0 0.0
        %418 = vmatpush1.msra.mxu0 0.0
        %419 = vmatprep.subr.mxu0 0.0
        %420 = vmatpush1.msra.mxu0 0.0
        %421 = vmatprep.subr.mxu0 0.0
        %422 = vmatpush1.msra.mxu0 0.0
        %423 = vmatprep.subr.mxu0 0.0
        %424 = vmatpush1.msra.mxu0 0.0
        %425 = vmatprep.subr.mxu0 0.0
        %426 = vmatpush1.msra.mxu0 0.0
        %427 = vmatprep.subr.mxu0 0.0
        %428 = vmatpush1.msra.mxu0 0.0
        %429 = vmatprep.subr.mxu0 0.0
        %430 = vmatpush1.msra.mxu0 0.0
        %431 = vmatprep.subr.mxu0 0.0
        %432 = vmatpush1.msra.mxu0 0.0
        %433 = vmatprep.subr.mxu0 0.0
        %434 = vmatpush1.msra.mxu0 0.0
        %435 = vmatprep.subr.mxu0 0.0
        %436 = vmatpush1.msra.mxu0 0.0
        %437 = vmatprep.subr.mxu0 0.0
        %438 = vmatpush1.msra.mxu0 0.0
        %439 = vmatprep.mubr.f32.mxu0 0.0
        %440 = vmatmul.mubr.f32.gmra.mrb[0].mxu0 %v373
        %v441 = vpop.f32.mrb[0].mxu0
        %v442 = vadd.f32 0.0, %v441
        %v443 = vpop.f32.mrb[0].mxu0
        %444 = vdwg.mxu0
        %v445 = vmax.f32 %v442, 0.0
        %v446 = vld [vmem:[%s2] sm:$0xff]
        %v447 = vld [vmem:[%s2 + $0x8] sm:$0xff]
        %v448 = vld [vmem:[%s2 + $0x10] sm:$0xff]
        %v449 = vld [vmem:[%s2 + $0x18] sm:$0xff]
        %vm450 = vcmask 15360
        %v452 = vsel %vm450, %v446, 0
        %v455 = vsel %vm450, %v447, 0
        %v458 = vsel %vm450, %v448, 0
        %v461 = vsel %vm450, %v449, 0
        %vm463 = vcmask 1041408
        %v465 = vsel %vm463, %v445, 0
        %467 = vmatprep.subr.mxu0 0.0
        %468 = vmatpush1.msra.mxu0 %v465
        %469 = vmatprep.subr.mxu0 0.0
        %470 = vmatpush1.msra.mxu0 0.0
        %471 = vmatprep.subr.mxu0 0.0
        %472 = vmatpush1.msra.mxu0 0.0
        %473 = vmatprep.subr.mxu0 0.0
        %474 = vmatpush1.msra.mxu0 0.0
        %475 = vmatprep.subr.mxu0 0.0
        %476 = vmatpush1.msra.mxu0 0.0
        %477 = vmatprep.subr.mxu0 0.0
        %478 = vmatpush1.msra.mxu0 0.0
        %479 = vmatprep.subr.mxu0 0.0
        %480 = vmatpush1.msra.mxu0 0.0
        %481 = vmatprep.subr.mxu0 0.0
        %482 = vmatpush1.msra.mxu0 0.0
        %483 = vmatprep.subr.mxu0 0.0
        %484 = vmatpush1.msra.mxu0 0.0
        %485 = vmatprep.subr.mxu0 0.0
        %486 = vmatpush1.msra.mxu0 0.0
        %487 = vmatprep.subr.mxu0 0.0
        %488 = vmatpush1.msra.mxu0 0.0
        %489 = vmatprep.subr.mxu0 0.0
        %490 = vmatpush1.msra.mxu0 0.0
        %491 = vmatprep.subr.mxu0 0.0
        %492 = vmatpush1.msra.mxu0 0.0
        %493 = vmatprep.subr.mxu0 0.0
        %494 = vmatpush1.msra.mxu0 0.0
        %495 = vmatprep.subr.mxu0 0.0
        %496 = vmatpush1.msra.mxu0 0.0
        %497 = vmatprep.subr.mxu0 0.0
        %498 = vmatpush1.msra.mxu0 0.0
        %499 = vmatprep.subr.mxu0 0.0
        %500 = vmatpush1.msra.mxu0 0.0
        %501 = vmatprep.subr.mxu0 0.0
        %502 = vmatpush1.msra.mxu0 0.0
        %503 = vmatprep.subr.mxu0 0.0
        %504 = vmatpush1.msra.mxu0 0.0
        %505 = vmatprep.subr.mxu0 0.0
        %506 = vmatpush1.msra.mxu0 0.0
        %507 = vmatprep.subr.mxu0 0.0
        %508 = vmatpush1.msra.mxu0 0.0
        %509 = vmatprep.subr.mxu0 0.0
        %510 = vmatpush1.msra.mxu0 0.0
        %511 = vmatprep.subr.mxu0 0.0
        %512 = vmatpush1.msra.mxu0 0.0
        %513 = vmatprep.subr.mxu0 0.0
        %514 = vmatpush1.msra.mxu0 0.0
        %515 = vmatprep.subr.mxu0 0.0
        %516 = vmatpush1.msra.mxu0 0.0
        %517 = vmatprep.subr.mxu0 0.0
        %518 = vmatpush1.msra.mxu0 0.0
        %519 = vmatprep.subr.mxu0 0.0
        %520 = vmatpush1.msra.mxu0 0.0
        %521 = vmatprep.subr.mxu0 0.0
        %522 = vmatpush1.msra.mxu0 0.0
        %523 = vmatprep.subr.mxu0 0.0
        %524 = vmatpush1.msra.mxu0 0.0
        %525 = vmatprep.subr.mxu0 0.0
        %526 = vmatpush1.msra.mxu0 0.0
        %527 = vmatprep.subr.mxu0 0.0
        %528 = vmatpush1.msra.mxu0 0.0
        %529 = vmatprep.subr.mxu0 0.0
        %530 = vmatpush1.msra.mxu0 0.0
        %531 = vmatprep.mubr.f32.mxu0 0.0
        %532 = vmatmul.mubr.f32.gmra.mrb[0].mxu0 %v452
        %v533 = vpop.f32.mrb[0].mxu0
        %v534 = vadd.f32 0.0, %v533
        %v535 = vpop.f32.mrb[0].mxu0
        %536 = vmatprep.mubr.f32.mxu0 0.0
        %537 = vmatmul.mubr.f32.gmra.mrb[0].mxu0 %v455
        %v538 = vpop.f32.mrb[0].mxu0
        %v539 = vadd.f32 0.0, %v538
        %v540 = vpop.f32.mrb[0].mxu0
        %541 = vmatprep.mubr.f32.mxu0 0.0
        %542 = vmatmul.mubr.f32.gmra.mrb[0].mxu0 %v458
        %v543 = vpop.f32.mrb[0].mxu0
        %v544 = vadd.f32 0.0, %v543
        %v545 = vpop.f32.mrb[0].mxu0
        %546 = vmatprep.mubr.f32.mxu0 0.0
        %547 = vmatmul.mubr.f32.gmra.mrb[0].mxu0 %v461
        %v548 = vpop.f32.mrb[0].mxu0
        %v549 = vadd.f32 0.0, %v548
        %v550 = vpop.f32.mrb[0].mxu0
        %551 = vdwg.mxu0
        %556 = vrot.lane.b32.xlu0 %v534, 127
        %v557 = vpop.permute.xlu0 %556
        %558 = vrot.lane.b32.xlu0 %v539, 127
        %v559 = vpop.permute.xlu0 %558
        %560 = vrot.lane.b32.xlu0 %v544, 127
        %v561 = vpop.permute.xlu0 %560
        %562 = vrot.lane.b32.xlu0 %v549, 127
        %v563 = vpop.permute.xlu0 %562
        %v568 = vadd.f32 %v534, %v557
        %v569 = vadd.f32 %v539, %v559
        %v570 = vadd.f32 %v544, %v561
        %v571 = vadd.f32 %v549, %v563
        %v572 = vxor.u32 %v568, 2147483648
        %v573 = vxor.u32 %v569, 2147483648
        %v574 = vxor.u32 %v570, 2147483648
        %v575 = vxor.u32 %v571, 2147483648
        %v576 = vmul.f32 %v572, 1.442695
        %v577 = vpow.pop %v576
        %v578 = vmul.f32 %v573, 1.442695
        %v579 = vpow.pop %v578
        %v580 = vmul.f32 %v574, 1.442695
        %v581 = vpow.pop %v580
        %v582 = vmul.f32 %v575, 1.442695
        %v583 = vpow.pop %v582
        %v584 = vadd.f32 %v577, 1.0
        %v585 = vadd.f32 %v579, 1.0
        %v586 = vadd.f32 %v581, 1.0
        %v587 = vadd.f32 %v583, 1.0
        %v588 = vrcp.pop %v584
        %v589 = vmul.f32 1.0, %v588
        %v590 = vrcp.pop %v585
        %v591 = vmul.f32 1.0, %v590
        %v592 = vrcp.pop %v586
        %v593 = vmul.f32 1.0, %v592
        %v594 = vrcp.pop %v587
        %v595 = vmul.f32 1.0, %v594
        %v596 = vadd.f32 %v230, %v232
        %v597 = vadd.f32 %v596, %v234
        %v598 = vadd.f32 %v597, %v236
        %v599 = vrot.slane %v598, 4
        %v600 = vadd.f32 %v598, %v599
        %v601 = vrot.slane %v600, 2
        %v602 = vadd.f32 %v600, %v601
        %v603 = vrot.slane %v602, 1
        %v604 = vadd.f32 %v602, %v603
        %v605 = vadd.f32 %v231, %v233
        %v606 = vadd.f32 %v605, %v235
        %v607 = vadd.f32 %v606, %v237
        %v608 = vrot.slane %v607, 4
        %v609 = vadd.f32 %v607, %v608
        %v610 = vrot.slane %v609, 2
        %v611 = vadd.f32 %v609, %v610
        %v612 = vrot.slane %v611, 1
        %v613 = vadd.f32 %v611, %v612
        %v614 = vrcp.pop 32.0
        %v615 = vmul.f32 %v604, %v614
        %v616 = vmul.f32 %v613, %v614
        %v617 = vmax.f32 %v230, %v234
        %v618 = vmax.f32 %v232, %v236
        %v619 = vmax.f32 %v617, %v618
        %v620 = vrot.slane %v619, 4
        %v621 = vmax.f32 %v619, %v620
        %v622 = vrot.slane %v621, 2
        %v623 = vmax.f32 %v621, %v622
        %v624 = vrot.slane %v623, 1
        %v625 = vmax.f32 %v623, %v624
        %v626 = vmax.f32 %v231, %v235
        %v627 = vmax.f32 %v233, %v237
        %v628 = vmax.f32 %v626, %v627
        %v629 = vrot.slane %v628, 4
        %v630 = vmax.f32 %v628, %v629
        %v631 = vrot.slane %v630, 2
        %v632 = vmax.f32 %v630, %v631
        %v633 = vrot.slane %v632, 1
        %v634 = vmax.f32 %v632, %v633
        %vm635 = vcmask 1040384
        %v636 = vsel %vm635, %v615, %v625
        %v637 = vsel %vm635, %v616, %v634
        %640 = vrot.lane.b32.xlu0 %v636, 51
        %v641 = vpop.permute.xlu0 %640
        %642 = vrot.lane.b32.xlu0 %v637, 51
        %v643 = vpop.permute.xlu0 %642
        %vm644 = vcmask 416768
        %v645 = vsel %vm644, %v641, %v643
        %v649 = vsel %vm644, 0.0, %v641
        %v650 = vsel %vm644, %v643, 0.0
        %v651 = vlaneseq
        %v652 = vand.u32 %v651, 127
        %v653 = vadd.s32 %v652, 128
        %v654 = vand.u32 %v652, 15
        %v655 = vand.u32 %v653, 15
        %v656 = vadd.s32 %v654, 4294967293
        %v657 = vadd.s32 %v655, 4294967293
        %vm658 = vcmp.ge.s32.totalorder %v656, 0
        %vm659 = vcmp.ge.s32.totalorder %v657, 0
        %vm660 = vcmp.le.s32.totalorder %v656, 15
        %vm661 = vcmp.le.s32.totalorder %v657, 15
        %vm662 = vmand %vm658, %vm660
        %vm663 = vmand %vm659, %vm661
        %v664 = vsel %vm662, 1, 0
        %v665 = vsel %vm663, 1, 0
        %v666 = vcvt.s32.f32 %v664
        %v667 = vcvt.s32.f32 %v665
        %v668 = vadd.s32 %v654, 4294967294
        %v669 = vadd.s32 %v655, 4294967294
        %vm670 = vcmp.ge.s32.totalorder %v668, 0
        %vm671 = vcmp.ge.s32.totalorder %v669, 0
        %vm672 = vcmp.le.s32.totalorder %v668, 15
        %vm673 = vcmp.le.s32.totalorder %v669, 15
        %vm674 = vmand %vm670, %vm672
        %vm675 = vmand %vm671, %vm673
        %v676 = vsel %vm674, 1, 0
        %v677 = vsel %vm675, 1, 0
        %v678 = vcvt.s32.f32 %v676
        %v679 = vcvt.s32.f32 %v677
        %v680 = vadd.s32 %v654, 4294967295
        %v681 = vadd.s32 %v655, 4294967295
        %vm682 = vcmp.ge.s32.totalorder %v680, 0
        %vm683 = vcmp.ge.s32.totalorder %v681, 0
        %vm684 = vcmp.le.s32.totalorder %v680, 15
        %vm685 = vcmp.le.s32.totalorder %v681, 15
        %vm686 = vmand %vm682, %vm684
        %vm687 = vmand %vm683, %vm685
        %v688 = vsel %vm686, 1, 0
        %v689 = vsel %vm687, 1, 0
        %v690 = vcvt.s32.f32 %v688
        %v691 = vcvt.s32.f32 %v689
        %v692 = vadd.s32 %v654, 1
        %v693 = vadd.s32 %v655, 1
        %vm694 = vcmp.ge.s32.totalorder %v692, 0
        %vm695 = vcmp.ge.s32.totalorder %v693, 0
        %vm696 = vcmp.le.s32.totalorder %v692, 15
        %vm697 = vcmp.le.s32.totalorder %v693, 15
        %vm698 = vmand %vm694, %vm696
        %vm699 = vmand %vm695, %vm697
        %v700 = vsel %vm698, 1, 0
        %v701 = vsel %vm699, 1, 0
        %v702 = vcvt.s32.f32 %v700
        %v703 = vcvt.s32.f32 %v701
        %v704 = vadd.s32 %v654, 2
        %v705 = vadd.s32 %v655, 2
        %vm706 = vcmp.ge.s32.totalorder %v704, 0
        %vm707 = vcmp.ge.s32.totalorder %v705, 0
        %vm708 = vcmp.le.s32.totalorder %v704, 15
        %vm709 = vcmp.le.s32.totalorder %v705, 15
        %vm710 = vmand %vm706, %vm708
        %vm711 = vmand %vm707, %vm709
        %v712 = vsel %vm710, 1, 0
        %v713 = vsel %vm711, 1, 0
        %v714 = vcvt.s32.f32 %v712
        %v715 = vcvt.s32.f32 %v713
        %v716 = vadd.s32 %v654, 3
        %v717 = vadd.s32 %v655, 3
        %vm718 = vcmp.ge.s32.totalorder %v716, 0
        %vm719 = vcmp.ge.s32.totalorder %v717, 0
        %vm720 = vcmp.le.s32.totalorder %v716, 15
        %vm721 = vcmp.le.s32.totalorder %v717, 15
        %vm722 = vmand %vm718, %vm720
        %vm723 = vmand %vm719, %vm721
        %v724 = vsel %vm722, 1, 0
        %v725 = vsel %vm723, 1, 0
        %v726 = vcvt.s32.f32 %v724
        %v727 = vcvt.s32.f32 %v725
        %v728 = vstv %s238
        %v729 = vmul.f32 %v728, %v649
        %v730 = vmul.f32 %v728, %v645
        %v731 = vadd.f32 %v729, 0.0
        %v732 = vadd.f32 %v730, 0.0
        %v733 = vstv %s287
        %v734 = vmul.f32 %v733, %v649
        %v735 = vmul.f32 %v733, %v645
        %v738 = vrot.slane %v734, 1
        %v739 = vrot.slane %v735, 1
        %v742 = vadd.f32 %v731, %v738
        %v743 = vadd.f32 %v732, %v739
        %v744 = vstv %s245
        %v745 = vmul.f32 %v744, %v649
        %v746 = vmul.f32 %v744, %v645
        %v747 = vmul.f32 %v744, %v650
        %751 = vrot.lane.b32.xlu0 %v745, 112
        %v752 = vpop.permute.xlu0 %751
        %753 = vrot.lane.b32.xlu0 %v746, 112
        %v754 = vpop.permute.xlu0 %753
        %755 = vrot.lane.b32.xlu0 %v747, 112
        %v756 = vpop.permute.xlu0 %755
        %vm757 = vcmask 916480
        %v758 = vsel %vm757, %v752, %v754
        %v759 = vsel %vm757, %v754, %v756
        %v762 = vadd.f32 %v742, %v758
        %v763 = vadd.f32 %v743, %v759
        %v764 = vstv %s294
        %v765 = vmul.f32 %v764, %v649
        %v766 = vmul.f32 %v764, %v645
        %v767 = vmul.f32 %v764, %v650
        %v771 = vrot.slane %v765, 1
        %v772 = vrot.slane %v766, 1
        %v773 = vrot.slane %v767, 1
        %774 = vrot.lane.b32.xlu0 %v771, 112
        %v775 = vpop.permute.xlu0 %774
        %776 = vrot.lane.b32.xlu0 %v772, 112
        %v777 = vpop.permute.xlu0 %776
        %778 = vrot.lane.b32.xlu0 %v773, 112
        %v779 = vpop.permute.xlu0 %778
        %v780 = vsel %vm757, %v775, %v777
        %v781 = vsel %vm757, %v777, %v779
        %v784 = vadd.f32 %v762, %v780
        %v785 = vadd.f32 %v763, %v781
        %v786 = vstv %s252
        %v787 = vmul.f32 %v786, %v649
        %v788 = vmul.f32 %v786, %v645
        %v789 = vmul.f32 %v786, %v650
        %793 = vrot.lane.b32.xlu0 %v787, 96
        %v794 = vpop.permute.xlu0 %793
        %795 = vrot.lane.b32.xlu0 %v788, 96
        %v796 = vpop.permute.xlu0 %795
        %797 = vrot.lane.b32.xlu0 %v789, 96
        %v798 = vpop.permute.xlu0 %797
        %vm799 = vcmask 785408
        %v800 = vsel %vm799, %v794, %v796
        %v801 = vsel %vm799, %v796, %v798
        %v804 = vadd.f32 %v784, %v800
        %v805 = vadd.f32 %v785, %v801
        %v806 = vstv %s301
        %v807 = vmul.f32 %v806, %v649
        %v808 = vmul.f32 %v806, %v645
        %v809 = vmul.f32 %v806, %v650
        %v813 = vrot.slane %v807, 1
        %v814 = vrot.slane %v808, 1
        %v815 = vrot.slane %v809, 1
        %816 = vrot.lane.b32.xlu0 %v813, 96
        %v817 = vpop.permute.xlu0 %816
        %818 = vrot.lane.b32.xlu0 %v814, 96
        %v819 = vpop.permute.xlu0 %818
        %820 = vrot.lane.b32.xlu0 %v815, 96
        %v821 = vpop.permute.xlu0 %820
        %v822 = vsel %vm799, %v817, %v819
        %v823 = vsel %vm799, %v819, %v821
        %v826 = vadd.f32 %v804, %v822
        %v827 = vadd.f32 %v805, %v823
        %v828 = vstv %s259
        %v829 = vmul.f32 %v828, %v649
        %v830 = vmul.f32 %v828, %v645
        %v831 = vmul.f32 %v828, %v650
        %835 = vrot.lane.b32.xlu0 %v829, 80
        %v836 = vpop.permute.xlu0 %835
        %837 = vrot.lane.b32.xlu0 %v830, 80
        %v838 = vpop.permute.xlu0 %837
        %839 = vrot.lane.b32.xlu0 %v831, 80
        %v840 = vpop.permute.xlu0 %839
        %vm841 = vcmask 654336
        %v842 = vsel %vm841, %v836, %v838
        %v843 = vsel %vm841, %v838, %v840
        %v846 = vadd.f32 %v826, %v842
        %v847 = vadd.f32 %v827, %v843
        %v848 = vstv %s308
        %v849 = vmul.f32 %v848, %v649
        %v850 = vmul.f32 %v848, %v645
        %v851 = vmul.f32 %v848, %v650
        %v855 = vrot.slane %v849, 1
        %v856 = vrot.slane %v850, 1
        %v857 = vrot.slane %v851, 1
        %858 = vrot.lane.b32.xlu0 %v855, 80
        %v859 = vpop.permute.xlu0 %858
        %860 = vrot.lane.b32.xlu0 %v856, 80
        %v861 = vpop.permute.xlu0 %860
        %862 = vrot.lane.b32.xlu0 %v857, 80
        %v863 = vpop.permute.xlu0 %862
        %v864 = vsel %vm841, %v859, %v861
        %v865 = vsel %vm841, %v861, %v863
        %v868 = vadd.f32 %v846, %v864
        %v869 = vadd.f32 %v847, %v865
        %v870 = vstv %s266
        %v871 = vmul.f32 %v870, %v649
        %v872 = vmul.f32 %v870, %v645
        %v873 = vmul.f32 %v870, %v650
        %877 = vrot.lane.b32.xlu0 %v871, 64
        %v878 = vpop.permute.xlu0 %877
        %879 = vrot.lane.b32.xlu0 %v872, 64
        %v880 = vpop.permute.xlu0 %879
        %881 = vrot.lane.b32.xlu0 %v873, 64
        %v882 = vpop.permute.xlu0 %881
        %vm883 = vcmask 523264
        %v884 = vsel %vm883, %v878, %v880
        %v885 = vsel %vm883, %v880, %v882
        %v888 = vadd.f32 %v868, %v884
        %v889 = vadd.f32 %v869, %v885
        %v890 = vstv %s315
        %v891 = vmul.f32 %v890, %v649
        %v892 = vmul.f32 %v890, %v645
        %v893 = vmul.f32 %v890, %v650
        %v897 = vrot.slane %v891, 1
        %v898 = vrot.slane %v892, 1
        %v899 = vrot.slane %v893, 1
        %900 = vrot.lane.b32.xlu0 %v897, 64
        %v901 = vpop.permute.xlu0 %900
        %902 = vrot.lane.b32.xlu0 %v898, 64
        %v903 = vpop.permute.xlu0 %902
        %904 = vrot.lane.b32.xlu0 %v899, 64
        %v905 = vpop.permute.xlu0 %904
        %v906 = vsel %vm883, %v901, %v903
        %v907 = vsel %vm883, %v903, %v905
        %v910 = vadd.f32 %v888, %v906
        %v911 = vadd.f32 %v889, %v907
        %v912 = vstv %s273
        %v913 = vmul.f32 %v912, %v649
        %v914 = vmul.f32 %v912, %v645
        %v915 = vmul.f32 %v912, %v650
        %919 = vrot.lane.b32.xlu0 %v913, 48
        %v920 = vpop.permute.xlu0 %919
        %921 = vrot.lane.b32.xlu0 %v914, 48
        %v922 = vpop.permute.xlu0 %921
        %923 = vrot.lane.b32.xlu0 %v915, 48
        %v924 = vpop.permute.xlu0 %923
        %vm925 = vcmask 392192
        %v926 = vsel %vm925, %v920, %v922
        %v927 = vsel %vm925, %v922, %v924
        %v930 = vadd.f32 %v910, %v926
        %v931 = vadd.f32 %v911, %v927
        %v932 = vstv %s322
        %v933 = vmul.f32 %v932, %v649
        %v934 = vmul.f32 %v932, %v645
        %v935 = vmul.f32 %v932, %v650
        %v939 = vrot.slane %v933, 1
        %v940 = vrot.slane %v934, 1
        %v941 = vrot.slane %v935, 1
        %942 = vrot.lane.b32.xlu0 %v939, 48
        %v943 = vpop.permute.xlu0 %942
        %944 = vrot.lane.b32.xlu0 %v940, 48
        %v945 = vpop.permute.xlu0 %944
        %946 = vrot.lane.b32.xlu0 %v941, 48
        %v947 = vpop.permute.xlu0 %946
        %v948 = vsel %vm925, %v943, %v945
        %v949 = vsel %vm925, %v945, %v947
        %v952 = vadd.f32 %v930, %v948
        %v953 = vadd.f32 %v931, %v949
        %v954 = vstv %s280
        %v955 = vmul.f32 %v954, %v649
        %v956 = vmul.f32 %v954, %v645
        %v957 = vmul.f32 %v954, %v650
        %961 = vrot.lane.b32.xlu0 %v955, 32
        %v962 = vpop.permute.xlu0 %961
        %963 = vrot.lane.b32.xlu0 %v956, 32
        %v964 = vpop.permute.xlu0 %963
        %965 = vrot.lane.b32.xlu0 %v957, 32
        %v966 = vpop.permute.xlu0 %965
        %v967 = vsel %vm371, %v962, %v964
        %v968 = vsel %vm371, %v964, %v966
        %v971 = vadd.f32 %v952, %v967
        %v972 = vadd.f32 %v953, %v968
        %v973 = vstv %s329
        %v974 = vmul.f32 %v973, %v649
        %v975 = vmul.f32 %v973, %v645
        %v976 = vmul.f32 %v973, %v650
        %v980 = vrot.slane %v974, 1
        %v981 = vrot.slane %v975, 1
        %v982 = vrot.slane %v976, 1
        %983 = vrot.lane.b32.xlu0 %v980, 32
        %v984 = vpop.permute.xlu0 %983
        %985 = vrot.lane.b32.xlu0 %v981, 32
        %v986 = vpop.permute.xlu0 %985
        %987 = vrot.lane.b32.xlu0 %v982, 32
        %v988 = vpop.permute.xlu0 %987
        %v989 = vsel %vm371, %v984, %v986
        %v990 = vsel %vm371, %v986, %v988
        %v993 = vadd.f32 %v971, %v989
        %v994 = vadd.f32 %v972, %v990
        %v995 = vmul.f32 %v666, %v993
        %v996 = vmul.f32 %v667, %v994
        %v997 = vadd.f32 %v995, 0.0
        %v998 = vadd.f32 %v996, 0.0
        %v999 = vstv %s239
        %v1000 = vmul.f32 %v999, %v649
        %v1001 = vmul.f32 %v999, %v645
        %v1002 = vmul.f32 %v999, %v650
        %v1003 = vadd.f32 %v1000, 0.0
        %v1004 = vadd.f32 %v1001, 0.0
        %v1005 = vadd.f32 %v1002, 0.0
        %v1006 = vstv %s288
        %v1007 = vmul.f32 %v1006, %v649
        %v1008 = vmul.f32 %v1006, %v645
        %v1009 = vmul.f32 %v1006, %v650
        %v1013 = vrot.slane %v1007, 1
        %v1014 = vrot.slane %v1008, 1
        %v1015 = vrot.slane %v1009, 1
        %v1019 = vadd.f32 %v1003, %v1013
        %v1020 = vadd.f32 %v1004, %v1014
        %v1021 = vadd.f32 %v1005, %v1015
        %v1022 = vstv %s246
        %v1023 = vmul.f32 %v1022, %v649
        %v1024 = vmul.f32 %v1022, %v645
        %v1025 = vmul.f32 %v1022, %v650
        %1029 = vrot.lane.b32.xlu0 %v1023, 112
        %v1030 = vpop.permute.xlu0 %1029
        %1031 = vrot.lane.b32.xlu0 %v1024, 112
        %v1032 = vpop.permute.xlu0 %1031
        %1033 = vrot.lane.b32.xlu0 %v1025, 112
        %v1034 = vpop.permute.xlu0 %1033
        %v1035 = vsel %vm757, %v1030, %v1032
        %v1036 = vsel %vm757, %v1032, %v1034
        %v1040 = vadd.f32 %v1019, %v1035
        %v1041 = vadd.f32 %v1020, %v1036
        %v1042 = vadd.f32 %v1021, %v1034
        %v1043 = vstv %s295
        %v1044 = vmul.f32 %v1043, %v649
        %v1045 = vmul.f32 %v1043, %v645
        %v1046 = vmul.f32 %v1043, %v650
        %v1050 = vrot.slane %v1044, 1
        %v1051 = vrot.slane %v1045, 1
        %v1052 = vrot.slane %v1046, 1
        %1053 = vrot.lane.b32.xlu0 %v1050, 112
        %v1054 = vpop.permute.xlu0 %1053
        %1055 = vrot.lane.b32.xlu0 %v1051, 112
        %v1056 = vpop.permute.xlu0 %1055
        %1057 = vrot.lane.b32.xlu0 %v1052, 112
        %v1058 = vpop.permute.xlu0 %1057
        %v1059 = vsel %vm757, %v1054, %v1056
        %v1060 = vsel %vm757, %v1056, %v1058
        %v1064 = vadd.f32 %v1040, %v1059
        %v1065 = vadd.f32 %v1041, %v1060
        %v1066 = vadd.f32 %v1042, %v1058
        %v1067 = vstv %s253
        %v1068 = vmul.f32 %v1067, %v649
        %v1069 = vmul.f32 %v1067, %v645
        %v1070 = vmul.f32 %v1067, %v650
        %1074 = vrot.lane.b32.xlu0 %v1068, 96
        %v1075 = vpop.permute.xlu0 %1074
        %1076 = vrot.lane.b32.xlu0 %v1069, 96
        %v1077 = vpop.permute.xlu0 %1076
        %1078 = vrot.lane.b32.xlu0 %v1070, 96
        %v1079 = vpop.permute.xlu0 %1078
        %v1080 = vsel %vm799, %v1075, %v1077
        %v1081 = vsel %vm799, %v1077, %v1079
        %v1085 = vadd.f32 %v1064, %v1080
        %v1086 = vadd.f32 %v1065, %v1081
        %v1087 = vadd.f32 %v1066, %v1079
        %v1088 = vstv %s302
        %v1089 = vmul.f32 %v1088, %v649
        %v1090 = vmul.f32 %v1088, %v645
        %v1091 = vmul.f32 %v1088, %v650
        %v1095 = vrot.slane %v1089, 1
        %v1096 = vrot.slane %v1090, 1
        %v1097 = vrot.slane %v1091, 1
        %1098 = vrot.lane.b32.xlu0 %v1095, 96
        %v1099 = vpop.permute.xlu0 %1098
        %1100 = vrot.lane.b32.xlu0 %v1096, 96
        %v1101 = vpop.permute.xlu0 %1100
        %1102 = vrot.lane.b32.xlu0 %v1097, 96
        %v1103 = vpop.permute.xlu0 %1102
        %v1104 = vsel %vm799, %v1099, %v1101
        %v1105 = vsel %vm799, %v1101, %v1103
        %v1109 = vadd.f32 %v1085, %v1104
        %v1110 = vadd.f32 %v1086, %v1105
        %v1111 = vadd.f32 %v1087, %v1103
        %v1112 = vstv %s260
        %v1113 = vmul.f32 %v1112, %v649
        %v1114 = vmul.f32 %v1112, %v645
        %v1115 = vmul.f32 %v1112, %v650
        %1119 = vrot.lane.b32.xlu0 %v1113, 80
        %v1120 = vpop.permute.xlu0 %1119
        %1121 = vrot.lane.b32.xlu0 %v1114, 80
        %v1122 = vpop.permute.xlu0 %1121
        %1123 = vrot.lane.b32.xlu0 %v1115, 80
        %v1124 = vpop.permute.xlu0 %1123
        %v1125 = vsel %vm841, %v1120, %v1122
        %v1126 = vsel %vm841, %v1122, %v1124
        %v1130 = vadd.f32 %v1109, %v1125
        %v1131 = vadd.f32 %v1110, %v1126
        %v1132 = vadd.f32 %v1111, %v1124
        %v1133 = vstv %s309
        %v1134 = vmul.f32 %v1133, %v649
        %v1135 = vmul.f32 %v1133, %v645
        %v1136 = vmul.f32 %v1133, %v650
        %v1140 = vrot.slane %v1134, 1
        %v1141 = vrot.slane %v1135, 1
        %v1142 = vrot.slane %v1136, 1
        %1143 = vrot.lane.b32.xlu0 %v1140, 80
        %v1144 = vpop.permute.xlu0 %1143
        %1145 = vrot.lane.b32.xlu0 %v1141, 80
        %v1146 = vpop.permute.xlu0 %1145
        %1147 = vrot.lane.b32.xlu0 %v1142, 80
        %v1148 = vpop.permute.xlu0 %1147
        %v1149 = vsel %vm841, %v1144, %v1146
        %v1150 = vsel %vm841, %v1146, %v1148
        %v1154 = vadd.f32 %v1130, %v1149
        %v1155 = vadd.f32 %v1131, %v1150
        %v1156 = vadd.f32 %v1132, %v1148
        %v1157 = vstv %s267
        %v1158 = vmul.f32 %v1157, %v649
        %v1159 = vmul.f32 %v1157, %v645
        %v1160 = vmul.f32 %v1157, %v650
        %1164 = vrot.lane.b32.xlu0 %v1158, 64
        %v1165 = vpop.permute.xlu0 %1164
        %1166 = vrot.lane.b32.xlu0 %v1159, 64
        %v1167 = vpop.permute.xlu0 %1166
        %1168 = vrot.lane.b32.xlu0 %v1160, 64
        %v1169 = vpop.permute.xlu0 %1168
        %v1170 = vsel %vm883, %v1165, %v1167
        %v1171 = vsel %vm883, %v1167, %v1169
        %v1175 = vadd.f32 %v1154, %v1170
        %v1176 = vadd.f32 %v1155, %v1171
        %v1177 = vadd.f32 %v1156, %v1169
        %v1178 = vstv %s316
        %v1179 = vmul.f32 %v1178, %v649
        %v1180 = vmul.f32 %v1178, %v645
        %v1181 = vmul.f32 %v1178, %v650
        %v1185 = vrot.slane %v1179, 1
        %v1186 = vrot.slane %v1180, 1
        %v1187 = vrot.slane %v1181, 1
        %1188 = vrot.lane.b32.xlu0 %v1185, 64
        %v1189 = vpop.permute.xlu0 %1188
        %1190 = vrot.lane.b32.xlu0 %v1186, 64
        %v1191 = vpop.permute.xlu0 %1190
        %1192 = vrot.lane.b32.xlu0 %v1187, 64
        %v1193 = vpop.permute.xlu0 %1192
        %v1194 = vsel %vm883, %v1189, %v1191
        %v1195 = vsel %vm883, %v1191, %v1193
        %v1199 = vadd.f32 %v1175, %v1194
        %v1200 = vadd.f32 %v1176, %v1195
        %v1201 = vadd.f32 %v1177, %v1193
        %v1202 = vstv %s274
        %v1203 = vmul.f32 %v1202, %v649
        %v1204 = vmul.f32 %v1202, %v645
        %v1205 = vmul.f32 %v1202, %v650
        %1209 = vrot.lane.b32.xlu0 %v1203, 48
        %v1210 = vpop.permute.xlu0 %1209
        %1211 = vrot.lane.b32.xlu0 %v1204, 48
        %v1212 = vpop.permute.xlu0 %1211
        %1213 = vrot.lane.b32.xlu0 %v1205, 48
        %v1214 = vpop.permute.xlu0 %1213
        %v1215 = vsel %vm925, %v1210, %v1212
        %v1216 = vsel %vm925, %v1212, %v1214
        %v1220 = vadd.f32 %v1199, %v1215
        %v1221 = vadd.f32 %v1200, %v1216
        %v1222 = vadd.f32 %v1201, %v1214
        %v1223 = vstv %s323
        %v1224 = vmul.f32 %v1223, %v649
        %v1225 = vmul.f32 %v1223, %v645
        %v1226 = vmul.f32 %v1223, %v650
        %v1230 = vrot.slane %v1224, 1
        %v1231 = vrot.slane %v1225, 1
        %v1232 = vrot.slane %v1226, 1
        %1233 = vrot.lane.b32.xlu0 %v1230, 48
        %v1234 = vpop.permute.xlu0 %1233
        %1235 = vrot.lane.b32.xlu0 %v1231, 48
        %v1236 = vpop.permute.xlu0 %1235
        %1237 = vrot.lane.b32.xlu0 %v1232, 48
        %v1238 = vpop.permute.xlu0 %1237
        %v1239 = vsel %vm925, %v1234, %v1236
        %v1240 = vsel %vm925, %v1236, %v1238
        %v1244 = vadd.f32 %v1220, %v1239
        %v1245 = vadd.f32 %v1221, %v1240
        %v1246 = vadd.f32 %v1222, %v1238
        %v1247 = vstv %s281
        %v1248 = vmul.f32 %v1247, %v649
        %v1249 = vmul.f32 %v1247, %v645
        %v1250 = vmul.f32 %v1247, %v650
        %1254 = vrot.lane.b32.xlu0 %v1248, 32
        %v1255 = vpop.permute.xlu0 %1254
        %1256 = vrot.lane.b32.xlu0 %v1249, 32
        %v1257 = vpop.permute.xlu0 %1256
        %1258 = vrot.lane.b32.xlu0 %v1250, 32
        %v1259 = vpop.permute.xlu0 %1258
        %v1260 = vsel %vm371, %v1255, %v1257
        %v1261 = vsel %vm371, %v1257, %v1259
        %v1265 = vadd.f32 %v1244, %v1260
        %v1266 = vadd.f32 %v1245, %v1261
        %v1267 = vadd.f32 %v1246, %v1259
        %v1268 = vstv %s330
        %v1269 = vmul.f32 %v1268, %v649
        %v1270 = vmul.f32 %v1268, %v645
        %v1271 = vmul.f32 %v1268, %v650
        %v1275 = vrot.slane %v1269, 1
        %v1276 = vrot.slane %v1270, 1
        %v1277 = vrot.slane %v1271, 1
        %1278 = vrot.lane.b32.xlu0 %v1275, 32
        %v1279 = vpop.permute.xlu0 %1278
        %1280 = vrot.lane.b32.xlu0 %v1276, 32
        %v1281 = vpop.permute.xlu0 %1280
        %1282 = vrot.lane.b32.xlu0 %v1277, 32
        %v1283 = vpop.permute.xlu0 %1282
        %v1284 = vsel %vm371, %v1279, %v1281
        %v1285 = vsel %vm371, %v1281, %v1283
        %v1289 = vadd.f32 %v1265, %v1284
        %v1290 = vadd.f32 %v1266, %v1285
        %v1291 = vadd.f32 %v1267, %v1283
        %1295 = vrot.lane.b32.xlu0 %v1289, 127
        %v1296 = vpop.permute.xlu0 %1295
        %1297 = vrot.lane.b32.xlu0 %v1290, 127
        %v1298 = vpop.permute.xlu0 %1297
        %1299 = vrot.lane.b32.xlu0 %v1291, 127
        %v1300 = vpop.permute.xlu0 %1299
        %vm1301 = vcmask 1039360
        %v1302 = vsel %vm1301, %v1296, %v1298
        %v1303 = vsel %vm1301, %v1298, %v1300
        %v1306 = vmul.f32 %v678, %v1302
        %v1307 = vmul.f32 %v679, %v1303
        %v1308 = vadd.f32 %v997, %v1306
        %v1309 = vadd.f32 %v998, %v1307
        %v1310 = vstv %s240
        %v1311 = vmul.f32 %v1310, %v649
        %v1312 = vmul.f32 %v1310, %v645
        %v1313 = vmul.f32 %v1310, %v650
        %v1314 = vadd.f32 %v1311, 0.0
        %v1315 = vadd.f32 %v1312, 0.0
        %v1316 = vadd.f32 %v1313, 0.0
        %v1317 = vstv %s289
        %v1318 = vmul.f32 %v1317, %v649
        %v1319 = vmul.f32 %v1317, %v645
        %v1320 = vmul.f32 %v1317, %v650
        %v1324 = vrot.slane %v1318, 1
        %v1325 = vrot.slane %v1319, 1
        %v1326 = vrot.slane %v1320, 1
        %v1330 = vadd.f32 %v1314, %v1324
        %v1331 = vadd.f32 %v1315, %v1325
        %v1332 = vadd.f32 %v1316, %v1326
        %v1333 = vstv %s247
        %v1334 = vmul.f32 %v1333, %v649
        %v1335 = vmul.f32 %v1333, %v645
        %v1336 = vmul.f32 %v1333, %v650
        %1340 = vrot.lane.b32.xlu0 %v1334, 112
        %v1341 = vpop.permute.xlu0 %1340
        %1342 = vrot.lane.b32.xlu0 %v1335, 112
        %v1343 = vpop.permute.xlu0 %1342
        %1344 = vrot.lane.b32.xlu0 %v1336, 112
        %v1345 = vpop.permute.xlu0 %1344
        %v1346 = vsel %vm757, %v1341, %v1343
        %v1347 = vsel %vm757, %v1343, %v1345
        %v1351 = vadd.f32 %v1330, %v1346
        %v1352 = vadd.f32 %v1331, %v1347
        %v1353 = vadd.f32 %v1332, %v1345
        %v1354 = vstv %s296
        %v1355 = vmul.f32 %v1354, %v649
        %v1356 = vmul.f32 %v1354, %v645
        %v1357 = vmul.f32 %v1354, %v650
        %v1361 = vrot.slane %v1355, 1
        %v1362 = vrot.slane %v1356, 1
        %v1363 = vrot.slane %v1357, 1
        %1364 = vrot.lane.b32.xlu0 %v1361, 112
        %v1365 = vpop.permute.xlu0 %1364
        %1366 = vrot.lane.b32.xlu0 %v1362, 112
        %v1367 = vpop.permute.xlu0 %1366
        %1368 = vrot.lane.b32.xlu0 %v1363, 112
        %v1369 = vpop.permute.xlu0 %1368
        %v1370 = vsel %vm757, %v1365, %v1367
        %v1371 = vsel %vm757, %v1367, %v1369
        %v1375 = vadd.f32 %v1351, %v1370
        %v1376 = vadd.f32 %v1352, %v1371
        %v1377 = vadd.f32 %v1353, %v1369
        %v1378 = vstv %s254
        %v1379 = vmul.f32 %v1378, %v649
        %v1380 = vmul.f32 %v1378, %v645
        %v1381 = vmul.f32 %v1378, %v650
        %1385 = vrot.lane.b32.xlu0 %v1379, 96
        %v1386 = vpop.permute.xlu0 %1385
        %1387 = vrot.lane.b32.xlu0 %v1380, 96
        %v1388 = vpop.permute.xlu0 %1387
        %1389 = vrot.lane.b32.xlu0 %v1381, 96
        %v1390 = vpop.permute.xlu0 %1389
        %v1391 = vsel %vm799, %v1386, %v1388
        %v1392 = vsel %vm799, %v1388, %v1390
        %v1396 = vadd.f32 %v1375, %v1391
        %v1397 = vadd.f32 %v1376, %v1392
        %v1398 = vadd.f32 %v1377, %v1390
        %v1399 = vstv %s303
        %v1400 = vmul.f32 %v1399, %v649
        %v1401 = vmul.f32 %v1399, %v645
        %v1402 = vmul.f32 %v1399, %v650
        %v1406 = vrot.slane %v1400, 1
        %v1407 = vrot.slane %v1401, 1
        %v1408 = vrot.slane %v1402, 1
        %1409 = vrot.lane.b32.xlu0 %v1406, 96
        %v1410 = vpop.permute.xlu0 %1409
        %1411 = vrot.lane.b32.xlu0 %v1407, 96
        %v1412 = vpop.permute.xlu0 %1411
        %1413 = vrot.lane.b32.xlu0 %v1408, 96
        %v1414 = vpop.permute.xlu0 %1413
        %v1415 = vsel %vm799, %v1410, %v1412
        %v1416 = vsel %vm799, %v1412, %v1414
        %v1420 = vadd.f32 %v1396, %v1415
        %v1421 = vadd.f32 %v1397, %v1416
        %v1422 = vadd.f32 %v1398, %v1414
        %v1423 = vstv %s261
        %v1424 = vmul.f32 %v1423, %v649
        %v1425 = vmul.f32 %v1423, %v645
        %v1426 = vmul.f32 %v1423, %v650
        %1430 = vrot.lane.b32.xlu0 %v1424, 80
        %v1431 = vpop.permute.xlu0 %1430
        %1432 = vrot.lane.b32.xlu0 %v1425, 80
        %v1433 = vpop.permute.xlu0 %1432
        %1434 = vrot.lane.b32.xlu0 %v1426, 80
        %v1435 = vpop.permute.xlu0 %1434
        %v1436 = vsel %vm841, %v1431, %v1433
        %v1437 = vsel %vm841, %v1433, %v1435
        %v1441 = vadd.f32 %v1420, %v1436
        %v1442 = vadd.f32 %v1421, %v1437
        %v1443 = vadd.f32 %v1422, %v1435
        %v1444 = vstv %s310
        %v1445 = vmul.f32 %v1444, %v649
        %v1446 = vmul.f32 %v1444, %v645
        %v1447 = vmul.f32 %v1444, %v650
        %v1451 = vrot.slane %v1445, 1
        %v1452 = vrot.slane %v1446, 1
        %v1453 = vrot.slane %v1447, 1
        %1454 = vrot.lane.b32.xlu0 %v1451, 80
        %v1455 = vpop.permute.xlu0 %1454
        %1456 = vrot.lane.b32.xlu0 %v1452, 80
        %v1457 = vpop.permute.xlu0 %1456
        %1458 = vrot.lane.b32.xlu0 %v1453, 80
        %v1459 = vpop.permute.xlu0 %1458
        %v1460 = vsel %vm841, %v1455, %v1457
        %v1461 = vsel %vm841, %v1457, %v1459
        %v1465 = vadd.f32 %v1441, %v1460
        %v1466 = vadd.f32 %v1442, %v1461
        %v1467 = vadd.f32 %v1443, %v1459
        %v1468 = vstv %s268
        %v1469 = vmul.f32 %v1468, %v649
        %v1470 = vmul.f32 %v1468, %v645
        %v1471 = vmul.f32 %v1468, %v650
        %1475 = vrot.lane.b32.xlu0 %v1469, 64
        %v1476 = vpop.permute.xlu0 %1475
        %1477 = vrot.lane.b32.xlu0 %v1470, 64
        %v1478 = vpop.permute.xlu0 %1477
        %1479 = vrot.lane.b32.xlu0 %v1471, 64
        %v1480 = vpop.permute.xlu0 %1479
        %v1481 = vsel %vm883, %v1476, %v1478
        %v1482 = vsel %vm883, %v1478, %v1480
        %v1486 = vadd.f32 %v1465, %v1481
        %v1487 = vadd.f32 %v1466, %v1482
        %v1488 = vadd.f32 %v1467, %v1480
        %v1489 = vstv %s317
        %v1490 = vmul.f32 %v1489, %v649
        %v1491 = vmul.f32 %v1489, %v645
        %v1492 = vmul.f32 %v1489, %v650
        %v1496 = vrot.slane %v1490, 1
        %v1497 = vrot.slane %v1491, 1
        %v1498 = vrot.slane %v1492, 1
        %1499 = vrot.lane.b32.xlu0 %v1496, 64
        %v1500 = vpop.permute.xlu0 %1499
        %1501 = vrot.lane.b32.xlu0 %v1497, 64
        %v1502 = vpop.permute.xlu0 %1501
        %1503 = vrot.lane.b32.xlu0 %v1498, 64
        %v1504 = vpop.permute.xlu0 %1503
        %v1505 = vsel %vm883, %v1500, %v1502
        %v1506 = vsel %vm883, %v1502, %v1504
        %v1510 = vadd.f32 %v1486, %v1505
        %v1511 = vadd.f32 %v1487, %v1506
        %v1512 = vadd.f32 %v1488, %v1504
        %v1513 = vstv %s275
        %v1514 = vmul.f32 %v1513, %v649
        %v1515 = vmul.f32 %v1513, %v645
        %v1516 = vmul.f32 %v1513, %v650
        %1520 = vrot.lane.b32.xlu0 %v1514, 48
        %v1521 = vpop.permute.xlu0 %1520
        %1522 = vrot.lane.b32.xlu0 %v1515, 48
        %v1523 = vpop.permute.xlu0 %1522
        %1524 = vrot.lane.b32.xlu0 %v1516, 48
        %v1525 = vpop.permute.xlu0 %1524
        %v1526 = vsel %vm925, %v1521, %v1523
        %v1527 = vsel %vm925, %v1523, %v1525
        %v1531 = vadd.f32 %v1510, %v1526
        %v1532 = vadd.f32 %v1511, %v1527
        %v1533 = vadd.f32 %v1512, %v1525
        %v1534 = vstv %s324
        %v1535 = vmul.f32 %v1534, %v649
        %v1536 = vmul.f32 %v1534, %v645
        %v1537 = vmul.f32 %v1534, %v650
        %v1541 = vrot.slane %v1535, 1
        %v1542 = vrot.slane %v1536, 1
        %v1543 = vrot.slane %v1537, 1
        %1544 = vrot.lane.b32.xlu0 %v1541, 48
        %v1545 = vpop.permute.xlu0 %1544
        %1546 = vrot.lane.b32.xlu0 %v1542, 48
        %v1547 = vpop.permute.xlu0 %1546
        %1548 = vrot.lane.b32.xlu0 %v1543, 48
        %v1549 = vpop.permute.xlu0 %1548
        %v1550 = vsel %vm925, %v1545, %v1547
        %v1551 = vsel %vm925, %v1547, %v1549
        %v1555 = vadd.f32 %v1531, %v1550
        %v1556 = vadd.f32 %v1532, %v1551
        %v1557 = vadd.f32 %v1533, %v1549
        %v1558 = vstv %s282
        %v1559 = vmul.f32 %v1558, %v649
        %v1560 = vmul.f32 %v1558, %v645
        %v1561 = vmul.f32 %v1558, %v650
        %1565 = vrot.lane.b32.xlu0 %v1559, 32
        %v1566 = vpop.permute.xlu0 %1565
        %1567 = vrot.lane.b32.xlu0 %v1560, 32
        %v1568 = vpop.permute.xlu0 %1567
        %1569 = vrot.lane.b32.xlu0 %v1561, 32
        %v1570 = vpop.permute.xlu0 %1569
        %v1571 = vsel %vm371, %v1566, %v1568
        %v1572 = vsel %vm371, %v1568, %v1570
        %v1576 = vadd.f32 %v1555, %v1571
        %v1577 = vadd.f32 %v1556, %v1572
        %v1578 = vadd.f32 %v1557, %v1570
        %v1579 = vstv %s331
        %v1580 = vmul.f32 %v1579, %v649
        %v1581 = vmul.f32 %v1579, %v645
        %v1582 = vmul.f32 %v1579, %v650
        %v1586 = vrot.slane %v1580, 1
        %v1587 = vrot.slane %v1581, 1
        %v1588 = vrot.slane %v1582, 1
        %1589 = vrot.lane.b32.xlu0 %v1586, 32
        %v1590 = vpop.permute.xlu0 %1589
        %1591 = vrot.lane.b32.xlu0 %v1587, 32
        %v1592 = vpop.permute.xlu0 %1591
        %1593 = vrot.lane.b32.xlu0 %v1588, 32
        %v1594 = vpop.permute.xlu0 %1593
        %v1595 = vsel %vm371, %v1590, %v1592
        %v1596 = vsel %vm371, %v1592, %v1594
        %v1600 = vadd.f32 %v1576, %v1595
        %v1601 = vadd.f32 %v1577, %v1596
        %v1602 = vadd.f32 %v1578, %v1594
        %1606 = vrot.lane.b32.xlu0 %v1600, 126
        %v1607 = vpop.permute.xlu0 %1606
        %1608 = vrot.lane.b32.xlu0 %v1601, 126
        %v1609 = vpop.permute.xlu0 %1608
        %1610 = vrot.lane.b32.xlu0 %v1602, 126
        %v1611 = vpop.permute.xlu0 %1610
        %vm1612 = vcmask 1031168
        %v1613 = vsel %vm1612, %v1607, %v1609
        %v1614 = vsel %vm1612, %v1609, %v1611
        %v1617 = vmul.f32 %v690, %v1613
        %v1618 = vmul.f32 %v691, %v1614
        %v1619 = vadd.f32 %v1308, %v1617
        %v1620 = vadd.f32 %v1309, %v1618
        %v1621 = vstv %s241
        %v1622 = vmul.f32 %v1621, %v649
        %v1623 = vmul.f32 %v1621, %v645
        %v1624 = vmul.f32 %v1621, %v650
        %v1625 = vadd.f32 %v1622, 0.0
        %v1626 = vadd.f32 %v1623, 0.0
        %v1627 = vadd.f32 %v1624, 0.0
        %v1628 = vstv %s290
        %v1629 = vmul.f32 %v1628, %v649
        %v1630 = vmul.f32 %v1628, %v645
        %v1631 = vmul.f32 %v1628, %v650
        %v1635 = vrot.slane %v1629, 1
        %v1636 = vrot.slane %v1630, 1
        %v1637 = vrot.slane %v1631, 1
        %v1641 = vadd.f32 %v1625, %v1635
        %v1642 = vadd.f32 %v1626, %v1636
        %v1643 = vadd.f32 %v1627, %v1637
        %v1644 = vstv %s248
        %v1645 = vmul.f32 %v1644, %v649
        %v1646 = vmul.f32 %v1644, %v645
        %v1647 = vmul.f32 %v1644, %v650
        %1651 = vrot.lane.b32.xlu0 %v1645, 112
        %v1652 = vpop.permute.xlu0 %1651
        %1653 = vrot.lane.b32.xlu0 %v1646, 112
        %v1654 = vpop.permute.xlu0 %1653
        %1655 = vrot.lane.b32.xlu0 %v1647, 112
        %v1656 = vpop.permute.xlu0 %1655
        %v1657 = vsel %vm757, %v1652, %v1654
        %v1658 = vsel %vm757, %v1654, %v1656
        %v1662 = vadd.f32 %v1641, %v1657
        %v1663 = vadd.f32 %v1642, %v1658
        %v1664 = vadd.f32 %v1643, %v1656
        %v1665 = vstv %s297
        %v1666 = vmul.f32 %v1665, %v649
        %v1667 = vmul.f32 %v1665, %v645
        %v1668 = vmul.f32 %v1665, %v650
        %v1672 = vrot.slane %v1666, 1
        %v1673 = vrot.slane %v1667, 1
        %v1674 = vrot.slane %v1668, 1
        %1675 = vrot.lane.b32.xlu0 %v1672, 112
        %v1676 = vpop.permute.xlu0 %1675
        %1677 = vrot.lane.b32.xlu0 %v1673, 112
        %v1678 = vpop.permute.xlu0 %1677
        %1679 = vrot.lane.b32.xlu0 %v1674, 112
        %v1680 = vpop.permute.xlu0 %1679
        %v1681 = vsel %vm757, %v1676, %v1678
        %v1682 = vsel %vm757, %v1678, %v1680
        %v1686 = vadd.f32 %v1662, %v1681
        %v1687 = vadd.f32 %v1663, %v1682
        %v1688 = vadd.f32 %v1664, %v1680
        %v1689 = vstv %s255
        %v1690 = vmul.f32 %v1689, %v649
        %v1691 = vmul.f32 %v1689, %v645
        %v1692 = vmul.f32 %v1689, %v650
        %1696 = vrot.lane.b32.xlu0 %v1690, 96
        %v1697 = vpop.permute.xlu0 %1696
        %1698 = vrot.lane.b32.xlu0 %v1691, 96
        %v1699 = vpop.permute.xlu0 %1698
        %1700 = vrot.lane.b32.xlu0 %v1692, 96
        %v1701 = vpop.permute.xlu0 %1700
        %v1702 = vsel %vm799, %v1697, %v1699
        %v1703 = vsel %vm799, %v1699, %v1701
        %v1707 = vadd.f32 %v1686, %v1702
        %v1708 = vadd.f32 %v1687, %v1703
        %v1709 = vadd.f32 %v1688, %v1701
        %v1710 = vstv %s304
        %v1711 = vmul.f32 %v1710, %v649
        %v1712 = vmul.f32 %v1710, %v645
        %v1713 = vmul.f32 %v1710, %v650
        %v1717 = vrot.slane %v1711, 1
        %v1718 = vrot.slane %v1712, 1
        %v1719 = vrot.slane %v1713, 1
        %1720 = vrot.lane.b32.xlu0 %v1717, 96
        %v1721 = vpop.permute.xlu0 %1720
        %1722 = vrot.lane.b32.xlu0 %v1718, 96
        %v1723 = vpop.permute.xlu0 %1722
        %1724 = vrot.lane.b32.xlu0 %v1719, 96
        %v1725 = vpop.permute.xlu0 %1724
        %v1726 = vsel %vm799, %v1721, %v1723
        %v1727 = vsel %vm799, %v1723, %v1725
        %v1731 = vadd.f32 %v1707, %v1726
        %v1732 = vadd.f32 %v1708, %v1727
        %v1733 = vadd.f32 %v1709, %v1725
        %v1734 = vstv %s262
        %v1735 = vmul.f32 %v1734, %v649
        %v1736 = vmul.f32 %v1734, %v645
        %v1737 = vmul.f32 %v1734, %v650
        %1741 = vrot.lane.b32.xlu0 %v1735, 80
        %v1742 = vpop.permute.xlu0 %1741
        %1743 = vrot.lane.b32.xlu0 %v1736, 80
        %v1744 = vpop.permute.xlu0 %1743
        %1745 = vrot.lane.b32.xlu0 %v1737, 80
        %v1746 = vpop.permute.xlu0 %1745
        %v1747 = vsel %vm841, %v1742, %v1744
        %v1748 = vsel %vm841, %v1744, %v1746
        %v1752 = vadd.f32 %v1731, %v1747
        %v1753 = vadd.f32 %v1732, %v1748
        %v1754 = vadd.f32 %v1733, %v1746
        %v1755 = vstv %s311
        %v1756 = vmul.f32 %v1755, %v649
        %v1757 = vmul.f32 %v1755, %v645
        %v1758 = vmul.f32 %v1755, %v650
        %v1762 = vrot.slane %v1756, 1
        %v1763 = vrot.slane %v1757, 1
        %v1764 = vrot.slane %v1758, 1
        %1765 = vrot.lane.b32.xlu0 %v1762, 80
        %v1766 = vpop.permute.xlu0 %1765
        %1767 = vrot.lane.b32.xlu0 %v1763, 80
        %v1768 = vpop.permute.xlu0 %1767
        %1769 = vrot.lane.b32.xlu0 %v1764, 80
        %v1770 = vpop.permute.xlu0 %1769
        %v1771 = vsel %vm841, %v1766, %v1768
        %v1772 = vsel %vm841, %v1768, %v1770
        %v1776 = vadd.f32 %v1752, %v1771
        %v1777 = vadd.f32 %v1753, %v1772
        %v1778 = vadd.f32 %v1754, %v1770
        %v1779 = vstv %s269
        %v1780 = vmul.f32 %v1779, %v649
        %v1781 = vmul.f32 %v1779, %v645
        %v1782 = vmul.f32 %v1779, %v650
        %1786 = vrot.lane.b32.xlu0 %v1780, 64
        %v1787 = vpop.permute.xlu0 %1786
        %1788 = vrot.lane.b32.xlu0 %v1781, 64
        %v1789 = vpop.permute.xlu0 %1788
        %1790 = vrot.lane.b32.xlu0 %v1782, 64
        %v1791 = vpop.permute.xlu0 %1790
        %v1792 = vsel %vm883, %v1787, %v1789
        %v1793 = vsel %vm883, %v1789, %v1791
        %v1797 = vadd.f32 %v1776, %v1792
        %v1798 = vadd.f32 %v1777, %v1793
        %v1799 = vadd.f32 %v1778, %v1791
        %v1800 = vstv %s318
        %v1801 = vmul.f32 %v1800, %v649
        %v1802 = vmul.f32 %v1800, %v645
        %v1803 = vmul.f32 %v1800, %v650
        %v1807 = vrot.slane %v1801, 1
        %v1808 = vrot.slane %v1802, 1
        %v1809 = vrot.slane %v1803, 1
        %1810 = vrot.lane.b32.xlu0 %v1807, 64
        %v1811 = vpop.permute.xlu0 %1810
        %1812 = vrot.lane.b32.xlu0 %v1808, 64
        %v1813 = vpop.permute.xlu0 %1812
        %1814 = vrot.lane.b32.xlu0 %v1809, 64
        %v1815 = vpop.permute.xlu0 %1814
        %v1816 = vsel %vm883, %v1811, %v1813
        %v1817 = vsel %vm883, %v1813, %v1815
        %v1821 = vadd.f32 %v1797, %v1816
        %v1822 = vadd.f32 %v1798, %v1817
        %v1823 = vadd.f32 %v1799, %v1815
        %v1824 = vstv %s276
        %v1825 = vmul.f32 %v1824, %v649
        %v1826 = vmul.f32 %v1824, %v645
        %v1827 = vmul.f32 %v1824, %v650
        %1831 = vrot.lane.b32.xlu0 %v1825, 48
        %v1832 = vpop.permute.xlu0 %1831
        %1833 = vrot.lane.b32.xlu0 %v1826, 48
        %v1834 = vpop.permute.xlu0 %1833
        %1835 = vrot.lane.b32.xlu0 %v1827, 48
        %v1836 = vpop.permute.xlu0 %1835
        %v1837 = vsel %vm925, %v1832, %v1834
        %v1838 = vsel %vm925, %v1834, %v1836
        %v1842 = vadd.f32 %v1821, %v1837
        %v1843 = vadd.f32 %v1822, %v1838
        %v1844 = vadd.f32 %v1823, %v1836
        %v1845 = vstv %s325
        %v1846 = vmul.f32 %v1845, %v649
        %v1847 = vmul.f32 %v1845, %v645
        %v1848 = vmul.f32 %v1845, %v650
        %v1852 = vrot.slane %v1846, 1
        %v1853 = vrot.slane %v1847, 1
        %v1854 = vrot.slane %v1848, 1
        %1855 = vrot.lane.b32.xlu0 %v1852, 48
        %v1856 = vpop.permute.xlu0 %1855
        %1857 = vrot.lane.b32.xlu0 %v1853, 48
        %v1858 = vpop.permute.xlu0 %1857
        %1859 = vrot.lane.b32.xlu0 %v1854, 48
        %v1860 = vpop.permute.xlu0 %1859
        %v1861 = vsel %vm925, %v1856, %v1858
        %v1862 = vsel %vm925, %v1858, %v1860
        %v1866 = vadd.f32 %v1842, %v1861
        %v1867 = vadd.f32 %v1843, %v1862
        %v1868 = vadd.f32 %v1844, %v1860
        %v1869 = vstv %s283
        %v1870 = vmul.f32 %v1869, %v649
        %v1871 = vmul.f32 %v1869, %v645
        %v1872 = vmul.f32 %v1869, %v650
        %1876 = vrot.lane.b32.xlu0 %v1870, 32
        %v1877 = vpop.permute.xlu0 %1876
        %1878 = vrot.lane.b32.xlu0 %v1871, 32
        %v1879 = vpop.permute.xlu0 %1878
        %1880 = vrot.lane.b32.xlu0 %v1872, 32
        %v1881 = vpop.permute.xlu0 %1880
        %v1882 = vsel %vm371, %v1877, %v1879
        %v1883 = vsel %vm371, %v1879, %v1881
        %v1887 = vadd.f32 %v1866, %v1882
        %v1888 = vadd.f32 %v1867, %v1883
        %v1889 = vadd.f32 %v1868, %v1881
        %v1890 = vstv %s332
        %v1891 = vmul.f32 %v1890, %v649
        %v1892 = vmul.f32 %v1890, %v645
        %v1893 = vmul.f32 %v1890, %v650
        %v1897 = vrot.slane %v1891, 1
        %v1898 = vrot.slane %v1892, 1
        %v1899 = vrot.slane %v1893, 1
        %1900 = vrot.lane.b32.xlu0 %v1897, 32
        %v1901 = vpop.permute.xlu0 %1900
        %1902 = vrot.lane.b32.xlu0 %v1898, 32
        %v1903 = vpop.permute.xlu0 %1902
        %1904 = vrot.lane.b32.xlu0 %v1899, 32
        %v1905 = vpop.permute.xlu0 %1904
        %v1906 = vsel %vm371, %v1901, %v1903
        %v1907 = vsel %vm371, %v1903, %v1905
        %v1911 = vadd.f32 %v1887, %v1906
        %v1912 = vadd.f32 %v1888, %v1907
        %v1913 = vadd.f32 %v1889, %v1905
        %1917 = vrot.lane.b32.xlu0 %v1911, 125
        %v1918 = vpop.permute.xlu0 %1917
        %1919 = vrot.lane.b32.xlu0 %v1912, 125
        %v1920 = vpop.permute.xlu0 %1919
        %1921 = vrot.lane.b32.xlu0 %v1913, 125
        %v1922 = vpop.permute.xlu0 %1921
        %vm1923 = vcmask 1022976
        %v1924 = vsel %vm1923, %v1918, %v1920
        %v1925 = vsel %vm1923, %v1920, %v1922
        %v1928 = vadd.f32 %v1619, %v1924
        %v1929 = vadd.f32 %v1620, %v1925
        %v1930 = vstv %s242
        %v1931 = vmul.f32 %v1930, %v649
        %v1932 = vmul.f32 %v1930, %v645
        %v1933 = vmul.f32 %v1930, %v650
        %v1934 = vadd.f32 %v1931, 0.0
        %v1935 = vadd.f32 %v1932, 0.0
        %v1936 = vadd.f32 %v1933, 0.0
        %v1937 = vstv %s291
        %v1938 = vmul.f32 %v1937, %v649
        %v1939 = vmul.f32 %v1937, %v645
        %v1940 = vmul.f32 %v1937, %v650
        %v1944 = vrot.slane %v1938, 1
        %v1945 = vrot.slane %v1939, 1
        %v1946 = vrot.slane %v1940, 1
        %v1950 = vadd.f32 %v1934, %v1944
        %v1951 = vadd.f32 %v1935, %v1945
        %v1952 = vadd.f32 %v1936, %v1946
        %v1953 = vstv %s249
        %v1954 = vmul.f32 %v1953, %v649
        %v1955 = vmul.f32 %v1953, %v645
        %v1956 = vmul.f32 %v1953, %v650
        %1960 = vrot.lane.b32.xlu0 %v1954, 112
        %v1961 = vpop.permute.xlu0 %1960
        %1962 = vrot.lane.b32.xlu0 %v1955, 112
        %v1963 = vpop.permute.xlu0 %1962
        %1964 = vrot.lane.b32.xlu0 %v1956, 112
        %v1965 = vpop.permute.xlu0 %1964
        %v1966 = vsel %vm757, %v1961, %v1963
        %v1967 = vsel %vm757, %v1963, %v1965
        %v1971 = vadd.f32 %v1950, %v1966
        %v1972 = vadd.f32 %v1951, %v1967
        %v1973 = vadd.f32 %v1952, %v1965
        %v1974 = vstv %s298
        %v1975 = vmul.f32 %v1974, %v649
        %v1976 = vmul.f32 %v1974, %v645
        %v1977 = vmul.f32 %v1974, %v650
        %v1981 = vrot.slane %v1975, 1
        %v1982 = vrot.slane %v1976, 1
        %v1983 = vrot.slane %v1977, 1
        %1984 = vrot.lane.b32.xlu0 %v1981, 112
        %v1985 = vpop.permute.xlu0 %1984
        %1986 = vrot.lane.b32.xlu0 %v1982, 112
        %v1987 = vpop.permute.xlu0 %1986
        %1988 = vrot.lane.b32.xlu0 %v1983, 112
        %v1989 = vpop.permute.xlu0 %1988
        %v1990 = vsel %vm757, %v1985, %v1987
        %v1991 = vsel %vm757, %v1987, %v1989
        %v1995 = vadd.f32 %v1971, %v1990
        %v1996 = vadd.f32 %v1972, %v1991
        %v1997 = vadd.f32 %v1973, %v1989
        %v1998 = vstv %s256
        %v1999 = vmul.f32 %v1998, %v649
        %v2000 = vmul.f32 %v1998, %v645
        %v2001 = vmul.f32 %v1998, %v650
        %2005 = vrot.lane.b32.xlu0 %v1999, 96
        %v2006 = vpop.permute.xlu0 %2005
        %2007 = vrot.lane.b32.xlu0 %v2000, 96
        %v2008 = vpop.permute.xlu0 %2007
        %2009 = vrot.lane.b32.xlu0 %v2001, 96
        %v2010 = vpop.permute.xlu0 %2009
        %v2011 = vsel %vm799, %v2006, %v2008
        %v2012 = vsel %vm799, %v2008, %v2010
        %v2016 = vadd.f32 %v1995, %v2011
        %v2017 = vadd.f32 %v1996, %v2012
        %v2018 = vadd.f32 %v1997, %v2010
        %v2019 = vstv %s305
        %v2020 = vmul.f32 %v2019, %v649
        %v2021 = vmul.f32 %v2019, %v645
        %v2022 = vmul.f32 %v2019, %v650
        %v2026 = vrot.slane %v2020, 1
        %v2027 = vrot.slane %v2021, 1
        %v2028 = vrot.slane %v2022, 1
        %2029 = vrot.lane.b32.xlu0 %v2026, 96
        %v2030 = vpop.permute.xlu0 %2029
        %2031 = vrot.lane.b32.xlu0 %v2027, 96
        %v2032 = vpop.permute.xlu0 %2031
        %2033 = vrot.lane.b32.xlu0 %v2028, 96
        %v2034 = vpop.permute.xlu0 %2033
        %v2035 = vsel %vm799, %v2030, %v2032
        %v2036 = vsel %vm799, %v2032, %v2034
        %v2040 = vadd.f32 %v2016, %v2035
        %v2041 = vadd.f32 %v2017, %v2036
        %v2042 = vadd.f32 %v2018, %v2034
        %v2043 = vstv %s263
        %v2044 = vmul.f32 %v2043, %v649
        %v2045 = vmul.f32 %v2043, %v645
        %v2046 = vmul.f32 %v2043, %v650
        %2050 = vrot.lane.b32.xlu0 %v2044, 80
        %v2051 = vpop.permute.xlu0 %2050
        %2052 = vrot.lane.b32.xlu0 %v2045, 80
        %v2053 = vpop.permute.xlu0 %2052
        %2054 = vrot.lane.b32.xlu0 %v2046, 80
        %v2055 = vpop.permute.xlu0 %2054
        %v2056 = vsel %vm841, %v2051, %v2053
        %v2057 = vsel %vm841, %v2053, %v2055
        %v2061 = vadd.f32 %v2040, %v2056
        %v2062 = vadd.f32 %v2041, %v2057
        %v2063 = vadd.f32 %v2042, %v2055
        %v2064 = vstv %s312
        %v2065 = vmul.f32 %v2064, %v649
        %v2066 = vmul.f32 %v2064, %v645
        %v2067 = vmul.f32 %v2064, %v650
        %v2071 = vrot.slane %v2065, 1
        %v2072 = vrot.slane %v2066, 1
        %v2073 = vrot.slane %v2067, 1
        %2074 = vrot.lane.b32.xlu0 %v2071, 80
        %v2075 = vpop.permute.xlu0 %2074
        %2076 = vrot.lane.b32.xlu0 %v2072, 80
        %v2077 = vpop.permute.xlu0 %2076
        %2078 = vrot.lane.b32.xlu0 %v2073, 80
        %v2079 = vpop.permute.xlu0 %2078
        %v2080 = vsel %vm841, %v2075, %v2077
        %v2081 = vsel %vm841, %v2077, %v2079
        %v2085 = vadd.f32 %v2061, %v2080
        %v2086 = vadd.f32 %v2062, %v2081
        %v2087 = vadd.f32 %v2063, %v2079
        %v2088 = vstv %s270
        %v2089 = vmul.f32 %v2088, %v649
        %v2090 = vmul.f32 %v2088, %v645
        %v2091 = vmul.f32 %v2088, %v650
        %2095 = vrot.lane.b32.xlu0 %v2089, 64
        %v2096 = vpop.permute.xlu0 %2095
        %2097 = vrot.lane.b32.xlu0 %v2090, 64
        %v2098 = vpop.permute.xlu0 %2097
        %2099 = vrot.lane.b32.xlu0 %v2091, 64
        %v2100 = vpop.permute.xlu0 %2099
        %v2101 = vsel %vm883, %v2096, %v2098
        %v2102 = vsel %vm883, %v2098, %v2100
        %v2106 = vadd.f32 %v2085, %v2101
        %v2107 = vadd.f32 %v2086, %v2102
        %v2108 = vadd.f32 %v2087, %v2100
        %v2109 = vstv %s319
        %v2110 = vmul.f32 %v2109, %v649
        %v2111 = vmul.f32 %v2109, %v645
        %v2112 = vmul.f32 %v2109, %v650
        %v2116 = vrot.slane %v2110, 1
        %v2117 = vrot.slane %v2111, 1
        %v2118 = vrot.slane %v2112, 1
        %2119 = vrot.lane.b32.xlu0 %v2116, 64
        %v2120 = vpop.permute.xlu0 %2119
        %2121 = vrot.lane.b32.xlu0 %v2117, 64
        %v2122 = vpop.permute.xlu0 %2121
        %2123 = vrot.lane.b32.xlu0 %v2118, 64
        %v2124 = vpop.permute.xlu0 %2123
        %v2125 = vsel %vm883, %v2120, %v2122
        %v2126 = vsel %vm883, %v2122, %v2124
        %v2130 = vadd.f32 %v2106, %v2125
        %v2131 = vadd.f32 %v2107, %v2126
        %v2132 = vadd.f32 %v2108, %v2124
        %v2133 = vstv %s277
        %v2134 = vmul.f32 %v2133, %v649
        %v2135 = vmul.f32 %v2133, %v645
        %v2136 = vmul.f32 %v2133, %v650
        %2140 = vrot.lane.b32.xlu0 %v2134, 48
        %v2141 = vpop.permute.xlu0 %2140
        %2142 = vrot.lane.b32.xlu0 %v2135, 48
        %v2143 = vpop.permute.xlu0 %2142
        %2144 = vrot.lane.b32.xlu0 %v2136, 48
        %v2145 = vpop.permute.xlu0 %2144
        %v2146 = vsel %vm925, %v2141, %v2143
        %v2147 = vsel %vm925, %v2143, %v2145
        %v2151 = vadd.f32 %v2130, %v2146
        %v2152 = vadd.f32 %v2131, %v2147
        %v2153 = vadd.f32 %v2132, %v2145
        %v2154 = vstv %s326
        %v2155 = vmul.f32 %v2154, %v649
        %v2156 = vmul.f32 %v2154, %v645
        %v2157 = vmul.f32 %v2154, %v650
        %v2161 = vrot.slane %v2155, 1
        %v2162 = vrot.slane %v2156, 1
        %v2163 = vrot.slane %v2157, 1
        %2164 = vrot.lane.b32.xlu0 %v2161, 48
        %v2165 = vpop.permute.xlu0 %2164
        %2166 = vrot.lane.b32.xlu0 %v2162, 48
        %v2167 = vpop.permute.xlu0 %2166
        %2168 = vrot.lane.b32.xlu0 %v2163, 48
        %v2169 = vpop.permute.xlu0 %2168
        %v2170 = vsel %vm925, %v2165, %v2167
        %v2171 = vsel %vm925, %v2167, %v2169
        %v2175 = vadd.f32 %v2151, %v2170
        %v2176 = vadd.f32 %v2152, %v2171
        %v2177 = vadd.f32 %v2153, %v2169
        %v2178 = vstv %s284
        %v2179 = vmul.f32 %v2178, %v649
        %v2180 = vmul.f32 %v2178, %v645
        %v2181 = vmul.f32 %v2178, %v650
        %2185 = vrot.lane.b32.xlu0 %v2179, 32
        %v2186 = vpop.permute.xlu0 %2185
        %2187 = vrot.lane.b32.xlu0 %v2180, 32
        %v2188 = vpop.permute.xlu0 %2187
        %2189 = vrot.lane.b32.xlu0 %v2181, 32
        %v2190 = vpop.permute.xlu0 %2189
        %v2191 = vsel %vm371, %v2186, %v2188
        %v2192 = vsel %vm371, %v2188, %v2190
        %v2196 = vadd.f32 %v2175, %v2191
        %v2197 = vadd.f32 %v2176, %v2192
        %v2198 = vadd.f32 %v2177, %v2190
        %v2199 = vstv %s333
        %v2200 = vmul.f32 %v2199, %v649
        %v2201 = vmul.f32 %v2199, %v645
        %v2202 = vmul.f32 %v2199, %v650
        %v2206 = vrot.slane %v2200, 1
        %v2207 = vrot.slane %v2201, 1
        %v2208 = vrot.slane %v2202, 1
        %2209 = vrot.lane.b32.xlu0 %v2206, 32
        %v2210 = vpop.permute.xlu0 %2209
        %2211 = vrot.lane.b32.xlu0 %v2207, 32
        %v2212 = vpop.permute.xlu0 %2211
        %2213 = vrot.lane.b32.xlu0 %v2208, 32
        %v2214 = vpop.permute.xlu0 %2213
        %v2215 = vsel %vm371, %v2210, %v2212
        %v2216 = vsel %vm371, %v2212, %v2214
        %v2220 = vadd.f32 %v2196, %v2215
        %v2221 = vadd.f32 %v2197, %v2216
        %v2222 = vadd.f32 %v2198, %v2214
        %2226 = vrot.lane.b32.xlu0 %v2220, 124
        %v2227 = vpop.permute.xlu0 %2226
        %2228 = vrot.lane.b32.xlu0 %v2221, 124
        %v2229 = vpop.permute.xlu0 %2228
        %2230 = vrot.lane.b32.xlu0 %v2222, 124
        %v2231 = vpop.permute.xlu0 %2230
        %vm2232 = vcmask 1014784
        %v2233 = vsel %vm2232, %v2227, %v2229
        %v2234 = vsel %vm2232, %v2229, %v2231
        %v2237 = vmul.f32 %v702, %v2233
        %v2238 = vmul.f32 %v703, %v2234
        %v2239 = vadd.f32 %v1928, %v2237
        %v2240 = vadd.f32 %v1929, %v2238
        %v2241 = vstv %s243
        %v2242 = vmul.f32 %v2241, %v649
        %v2243 = vmul.f32 %v2241, %v645
        %v2244 = vmul.f32 %v2241, %v650
        %v2245 = vadd.f32 %v2242, 0.0
        %v2246 = vadd.f32 %v2243, 0.0
        %v2247 = vadd.f32 %v2244, 0.0
        %v2248 = vstv %s292
        %v2249 = vmul.f32 %v2248, %v649
        %v2250 = vmul.f32 %v2248, %v645
        %v2251 = vmul.f32 %v2248, %v650
        %v2255 = vrot.slane %v2249, 1
        %v2256 = vrot.slane %v2250, 1
        %v2257 = vrot.slane %v2251, 1
        %v2261 = vadd.f32 %v2245, %v2255
        %v2262 = vadd.f32 %v2246, %v2256
        %v2263 = vadd.f32 %v2247, %v2257
        %v2264 = vstv %s250
        %v2265 = vmul.f32 %v2264, %v649
        %v2266 = vmul.f32 %v2264, %v645
        %v2267 = vmul.f32 %v2264, %v650
        %2271 = vrot.lane.b32.xlu0 %v2265, 112
        %v2272 = vpop.permute.xlu0 %2271
        %2273 = vrot.lane.b32.xlu0 %v2266, 112
        %v2274 = vpop.permute.xlu0 %2273
        %2275 = vrot.lane.b32.xlu0 %v2267, 112
        %v2276 = vpop.permute.xlu0 %2275
        %v2277 = vsel %vm757, %v2272, %v2274
        %v2278 = vsel %vm757, %v2274, %v2276
        %v2282 = vadd.f32 %v2261, %v2277
        %v2283 = vadd.f32 %v2262, %v2278
        %v2284 = vadd.f32 %v2263, %v2276
        %v2285 = vstv %s299
        %v2286 = vmul.f32 %v2285, %v649
        %v2287 = vmul.f32 %v2285, %v645
        %v2288 = vmul.f32 %v2285, %v650
        %v2292 = vrot.slane %v2286, 1
        %v2293 = vrot.slane %v2287, 1
        %v2294 = vrot.slane %v2288, 1
        %2295 = vrot.lane.b32.xlu0 %v2292, 112
        %v2296 = vpop.permute.xlu0 %2295
        %2297 = vrot.lane.b32.xlu0 %v2293, 112
        %v2298 = vpop.permute.xlu0 %2297
        %2299 = vrot.lane.b32.xlu0 %v2294, 112
        %v2300 = vpop.permute.xlu0 %2299
        %v2301 = vsel %vm757, %v2296, %v2298
        %v2302 = vsel %vm757, %v2298, %v2300
        %v2306 = vadd.f32 %v2282, %v2301
        %v2307 = vadd.f32 %v2283, %v2302
        %v2308 = vadd.f32 %v2284, %v2300
        %v2309 = vstv %s257
        %v2310 = vmul.f32 %v2309, %v649
        %v2311 = vmul.f32 %v2309, %v645
        %v2312 = vmul.f32 %v2309, %v650
        %2316 = vrot.lane.b32.xlu0 %v2310, 96
        %v2317 = vpop.permute.xlu0 %2316
        %2318 = vrot.lane.b32.xlu0 %v2311, 96
        %v2319 = vpop.permute.xlu0 %2318
        %2320 = vrot.lane.b32.xlu0 %v2312, 96
        %v2321 = vpop.permute.xlu0 %2320
        %v2322 = vsel %vm799, %v2317, %v2319
        %v2323 = vsel %vm799, %v2319, %v2321
        %v2327 = vadd.f32 %v2306, %v2322
        %v2328 = vadd.f32 %v2307, %v2323
        %v2329 = vadd.f32 %v2308, %v2321
        %v2330 = vstv %s306
        %v2331 = vmul.f32 %v2330, %v649
        %v2332 = vmul.f32 %v2330, %v645
        %v2333 = vmul.f32 %v2330, %v650
        %v2337 = vrot.slane %v2331, 1
        %v2338 = vrot.slane %v2332, 1
        %v2339 = vrot.slane %v2333, 1
        %2340 = vrot.lane.b32.xlu0 %v2337, 96
        %v2341 = vpop.permute.xlu0 %2340
        %2342 = vrot.lane.b32.xlu0 %v2338, 96
        %v2343 = vpop.permute.xlu0 %2342
        %2344 = vrot.lane.b32.xlu0 %v2339, 96
        %v2345 = vpop.permute.xlu0 %2344
        %v2346 = vsel %vm799, %v2341, %v2343
        %v2347 = vsel %vm799, %v2343, %v2345
        %v2351 = vadd.f32 %v2327, %v2346
        %v2352 = vadd.f32 %v2328, %v2347
        %v2353 = vadd.f32 %v2329, %v2345
        %v2354 = vstv %s264
        %v2355 = vmul.f32 %v2354, %v649
        %v2356 = vmul.f32 %v2354, %v645
        %v2357 = vmul.f32 %v2354, %v650
        %2361 = vrot.lane.b32.xlu0 %v2355, 80
        %v2362 = vpop.permute.xlu0 %2361
        %2363 = vrot.lane.b32.xlu0 %v2356, 80
        %v2364 = vpop.permute.xlu0 %2363
        %2365 = vrot.lane.b32.xlu0 %v2357, 80
        %v2366 = vpop.permute.xlu0 %2365
        %v2367 = vsel %vm841, %v2362, %v2364
        %v2368 = vsel %vm841, %v2364, %v2366
        %v2372 = vadd.f32 %v2351, %v2367
        %v2373 = vadd.f32 %v2352, %v2368
        %v2374 = vadd.f32 %v2353, %v2366
        %v2375 = vstv %s313
        %v2376 = vmul.f32 %v2375, %v649
        %v2377 = vmul.f32 %v2375, %v645
        %v2378 = vmul.f32 %v2375, %v650
        %v2382 = vrot.slane %v2376, 1
        %v2383 = vrot.slane %v2377, 1
        %v2384 = vrot.slane %v2378, 1
        %2385 = vrot.lane.b32.xlu0 %v2382, 80
        %v2386 = vpop.permute.xlu0 %2385
        %2387 = vrot.lane.b32.xlu0 %v2383, 80
        %v2388 = vpop.permute.xlu0 %2387
        %2389 = vrot.lane.b32.xlu0 %v2384, 80
        %v2390 = vpop.permute.xlu0 %2389
        %v2391 = vsel %vm841, %v2386, %v2388
        %v2392 = vsel %vm841, %v2388, %v2390
        %v2396 = vadd.f32 %v2372, %v2391
        %v2397 = vadd.f32 %v2373, %v2392
        %v2398 = vadd.f32 %v2374, %v2390
        %v2399 = vstv %s271
        %v2400 = vmul.f32 %v2399, %v649
        %v2401 = vmul.f32 %v2399, %v645
        %v2402 = vmul.f32 %v2399, %v650
        %2406 = vrot.lane.b32.xlu0 %v2400, 64
        %v2407 = vpop.permute.xlu0 %2406
        %2408 = vrot.lane.b32.xlu0 %v2401, 64
        %v2409 = vpop.permute.xlu0 %2408
        %2410 = vrot.lane.b32.xlu0 %v2402, 64
        %v2411 = vpop.permute.xlu0 %2410
        %v2412 = vsel %vm883, %v2407, %v2409
        %v2413 = vsel %vm883, %v2409, %v2411
        %v2417 = vadd.f32 %v2396, %v2412
        %v2418 = vadd.f32 %v2397, %v2413
        %v2419 = vadd.f32 %v2398, %v2411
        %v2420 = vstv %s320
        %v2421 = vmul.f32 %v2420, %v649
        %v2422 = vmul.f32 %v2420, %v645
        %v2423 = vmul.f32 %v2420, %v650
        %v2427 = vrot.slane %v2421, 1
        %v2428 = vrot.slane %v2422, 1
        %v2429 = vrot.slane %v2423, 1
        %2430 = vrot.lane.b32.xlu0 %v2427, 64
        %v2431 = vpop.permute.xlu0 %2430
        %2432 = vrot.lane.b32.xlu0 %v2428, 64
        %v2433 = vpop.permute.xlu0 %2432
        %2434 = vrot.lane.b32.xlu0 %v2429, 64
        %v2435 = vpop.permute.xlu0 %2434
        %v2436 = vsel %vm883, %v2431, %v2433
        %v2437 = vsel %vm883, %v2433, %v2435
        %v2441 = vadd.f32 %v2417, %v2436
        %v2442 = vadd.f32 %v2418, %v2437
        %v2443 = vadd.f32 %v2419, %v2435
        %v2444 = vstv %s278
        %v2445 = vmul.f32 %v2444, %v649
        %v2446 = vmul.f32 %v2444, %v645
        %v2447 = vmul.f32 %v2444, %v650
        %2451 = vrot.lane.b32.xlu0 %v2445, 48
        %v2452 = vpop.permute.xlu0 %2451
        %2453 = vrot.lane.b32.xlu0 %v2446, 48
        %v2454 = vpop.permute.xlu0 %2453
        %2455 = vrot.lane.b32.xlu0 %v2447, 48
        %v2456 = vpop.permute.xlu0 %2455
        %v2457 = vsel %vm925, %v2452, %v2454
        %v2458 = vsel %vm925, %v2454, %v2456
        %v2462 = vadd.f32 %v2441, %v2457
        %v2463 = vadd.f32 %v2442, %v2458
        %v2464 = vadd.f32 %v2443, %v2456
        %v2465 = vstv %s327
        %v2466 = vmul.f32 %v2465, %v649
        %v2467 = vmul.f32 %v2465, %v645
        %v2468 = vmul.f32 %v2465, %v650
        %v2472 = vrot.slane %v2466, 1
        %v2473 = vrot.slane %v2467, 1
        %v2474 = vrot.slane %v2468, 1
        %2475 = vrot.lane.b32.xlu0 %v2472, 48
        %v2476 = vpop.permute.xlu0 %2475
        %2477 = vrot.lane.b32.xlu0 %v2473, 48
        %v2478 = vpop.permute.xlu0 %2477
        %2479 = vrot.lane.b32.xlu0 %v2474, 48
        %v2480 = vpop.permute.xlu0 %2479
        %v2481 = vsel %vm925, %v2476, %v2478
        %v2482 = vsel %vm925, %v2478, %v2480
        %v2486 = vadd.f32 %v2462, %v2481
        %v2487 = vadd.f32 %v2463, %v2482
        %v2488 = vadd.f32 %v2464, %v2480
        %v2489 = vstv %s285
        %v2490 = vmul.f32 %v2489, %v649
        %v2491 = vmul.f32 %v2489, %v645
        %v2492 = vmul.f32 %v2489, %v650
        %2496 = vrot.lane.b32.xlu0 %v2490, 32
        %v2497 = vpop.permute.xlu0 %2496
        %2498 = vrot.lane.b32.xlu0 %v2491, 32
        %v2499 = vpop.permute.xlu0 %2498
        %2500 = vrot.lane.b32.xlu0 %v2492, 32
        %v2501 = vpop.permute.xlu0 %2500
        %v2502 = vsel %vm371, %v2497, %v2499
        %v2503 = vsel %vm371, %v2499, %v2501
        %v2507 = vadd.f32 %v2486, %v2502
        %v2508 = vadd.f32 %v2487, %v2503
        %v2509 = vadd.f32 %v2488, %v2501
        %v2510 = vstv %s334
        %v2511 = vmul.f32 %v2510, %v649
        %v2512 = vmul.f32 %v2510, %v645
        %v2513 = vmul.f32 %v2510, %v650
        %v2517 = vrot.slane %v2511, 1
        %v2518 = vrot.slane %v2512, 1
        %v2519 = vrot.slane %v2513, 1
        %2520 = vrot.lane.b32.xlu0 %v2517, 32
        %v2521 = vpop.permute.xlu0 %2520
        %2522 = vrot.lane.b32.xlu0 %v2518, 32
        %v2523 = vpop.permute.xlu0 %2522
        %2524 = vrot.lane.b32.xlu0 %v2519, 32
        %v2525 = vpop.permute.xlu0 %2524
        %v2526 = vsel %vm371, %v2521, %v2523
        %v2527 = vsel %vm371, %v2523, %v2525
        %v2531 = vadd.f32 %v2507, %v2526
        %v2532 = vadd.f32 %v2508, %v2527
        %v2533 = vadd.f32 %v2509, %v2525
        %2537 = vrot.lane.b32.xlu0 %v2531, 123
        %v2538 = vpop.permute.xlu0 %2537
        %2539 = vrot.lane.b32.xlu0 %v2532, 123
        %v2540 = vpop.permute.xlu0 %2539
        %2541 = vrot.lane.b32.xlu0 %v2533, 123
        %v2542 = vpop.permute.xlu0 %2541
        %vm2543 = vcmask 1006592
        %v2544 = vsel %vm2543, %v2538, %v2540
        %v2545 = vsel %vm2543, %v2540, %v2542
        %v2548 = vmul.f32 %v714, %v2544
        %v2549 = vmul.f32 %v715, %v2545
        %v2550 = vadd.f32 %v2239, %v2548
        %v2551 = vadd.f32 %v2240, %v2549
        %v2552 = vstv %s244
        %v2553 = vmul.f32 %v2552, %v649
        %v2554 = vmul.f32 %v2552, %v645
        %v2555 = vmul.f32 %v2552, %v650
        %v2556 = vadd.f32 %v2553, 0.0
        %v2557 = vadd.f32 %v2554, 0.0
        %v2558 = vadd.f32 %v2555, 0.0
        %v2559 = vstv %s293
        %v2560 = vmul.f32 %v2559, %v649
        %v2561 = vmul.f32 %v2559, %v645
        %v2562 = vmul.f32 %v2559, %v650
        %v2566 = vrot.slane %v2560, 1
        %v2567 = vrot.slane %v2561, 1
        %v2568 = vrot.slane %v2562, 1
        %v2572 = vadd.f32 %v2556, %v2566
        %v2573 = vadd.f32 %v2557, %v2567
        %v2574 = vadd.f32 %v2558, %v2568
        %v2575 = vstv %s251
        %v2576 = vmul.f32 %v2575, %v649
        %v2577 = vmul.f32 %v2575, %v645
        %v2578 = vmul.f32 %v2575, %v650
        %2582 = vrot.lane.b32.xlu0 %v2576, 112
        %v2583 = vpop.permute.xlu0 %2582
        %2584 = vrot.lane.b32.xlu0 %v2577, 112
        %v2585 = vpop.permute.xlu0 %2584
        %2586 = vrot.lane.b32.xlu0 %v2578, 112
        %v2587 = vpop.permute.xlu0 %2586
        %v2588 = vsel %vm757, %v2583, %v2585
        %v2589 = vsel %vm757, %v2585, %v2587
        %v2593 = vadd.f32 %v2572, %v2588
        %v2594 = vadd.f32 %v2573, %v2589
        %v2595 = vadd.f32 %v2574, %v2587
        %v2596 = vstv %s300
        %v2597 = vmul.f32 %v2596, %v649
        %v2598 = vmul.f32 %v2596, %v645
        %v2599 = vmul.f32 %v2596, %v650
        %v2603 = vrot.slane %v2597, 1
        %v2604 = vrot.slane %v2598, 1
        %v2605 = vrot.slane %v2599, 1
        %2606 = vrot.lane.b32.xlu0 %v2603, 112
        %v2607 = vpop.permute.xlu0 %2606
        %2608 = vrot.lane.b32.xlu0 %v2604, 112
        %v2609 = vpop.permute.xlu0 %2608
        %2610 = vrot.lane.b32.xlu0 %v2605, 112
        %v2611 = vpop.permute.xlu0 %2610
        %v2612 = vsel %vm757, %v2607, %v2609
        %v2613 = vsel %vm757, %v2609, %v2611
        %v2617 = vadd.f32 %v2593, %v2612
        %v2618 = vadd.f32 %v2594, %v2613
        %v2619 = vadd.f32 %v2595, %v2611
        %v2620 = vstv %s258
        %v2621 = vmul.f32 %v2620, %v649
        %v2622 = vmul.f32 %v2620, %v645
        %v2623 = vmul.f32 %v2620, %v650
        %2627 = vrot.lane.b32.xlu0 %v2621, 96
        %v2628 = vpop.permute.xlu0 %2627
        %2629 = vrot.lane.b32.xlu0 %v2622, 96
        %v2630 = vpop.permute.xlu0 %2629
        %2631 = vrot.lane.b32.xlu0 %v2623, 96
        %v2632 = vpop.permute.xlu0 %2631
        %v2633 = vsel %vm799, %v2628, %v2630
        %v2634 = vsel %vm799, %v2630, %v2632
        %v2638 = vadd.f32 %v2617, %v2633
        %v2639 = vadd.f32 %v2618, %v2634
        %v2640 = vadd.f32 %v2619, %v2632
        %v2641 = vstv %s307
        %v2642 = vmul.f32 %v2641, %v649
        %v2643 = vmul.f32 %v2641, %v645
        %v2644 = vmul.f32 %v2641, %v650
        %v2648 = vrot.slane %v2642, 1
        %v2649 = vrot.slane %v2643, 1
        %v2650 = vrot.slane %v2644, 1
        %2651 = vrot.lane.b32.xlu0 %v2648, 96
        %v2652 = vpop.permute.xlu0 %2651
        %2653 = vrot.lane.b32.xlu0 %v2649, 96
        %v2654 = vpop.permute.xlu0 %2653
        %2655 = vrot.lane.b32.xlu0 %v2650, 96
        %v2656 = vpop.permute.xlu0 %2655
        %v2657 = vsel %vm799, %v2652, %v2654
        %v2658 = vsel %vm799, %v2654, %v2656
        %v2662 = vadd.f32 %v2638, %v2657
        %v2663 = vadd.f32 %v2639, %v2658
        %v2664 = vadd.f32 %v2640, %v2656
        %v2665 = vstv %s265
        %v2666 = vmul.f32 %v2665, %v649
        %v2667 = vmul.f32 %v2665, %v645
        %v2668 = vmul.f32 %v2665, %v650
        %2672 = vrot.lane.b32.xlu0 %v2666, 80
        %v2673 = vpop.permute.xlu0 %2672
        %2674 = vrot.lane.b32.xlu0 %v2667, 80
        %v2675 = vpop.permute.xlu0 %2674
        %2676 = vrot.lane.b32.xlu0 %v2668, 80
        %v2677 = vpop.permute.xlu0 %2676
        %v2678 = vsel %vm841, %v2673, %v2675
        %v2679 = vsel %vm841, %v2675, %v2677
        %v2683 = vadd.f32 %v2662, %v2678
        %v2684 = vadd.f32 %v2663, %v2679
        %v2685 = vadd.f32 %v2664, %v2677
        %v2686 = vstv %s314
        %v2687 = vmul.f32 %v2686, %v649
        %v2688 = vmul.f32 %v2686, %v645
        %v2689 = vmul.f32 %v2686, %v650
        %v2693 = vrot.slane %v2687, 1
        %v2694 = vrot.slane %v2688, 1
        %v2695 = vrot.slane %v2689, 1
        %2696 = vrot.lane.b32.xlu0 %v2693, 80
        %v2697 = vpop.permute.xlu0 %2696
        %2698 = vrot.lane.b32.xlu0 %v2694, 80
        %v2699 = vpop.permute.xlu0 %2698
        %2700 = vrot.lane.b32.xlu0 %v2695, 80
        %v2701 = vpop.permute.xlu0 %2700
        %v2702 = vsel %vm841, %v2697, %v2699
        %v2703 = vsel %vm841, %v2699, %v2701
        %v2707 = vadd.f32 %v2683, %v2702
        %v2708 = vadd.f32 %v2684, %v2703
        %v2709 = vadd.f32 %v2685, %v2701
        %v2710 = vstv %s272
        %v2711 = vmul.f32 %v2710, %v649
        %v2712 = vmul.f32 %v2710, %v645
        %v2713 = vmul.f32 %v2710, %v650
        %2717 = vrot.lane.b32.xlu0 %v2711, 64
        %v2718 = vpop.permute.xlu0 %2717
        %2719 = vrot.lane.b32.xlu0 %v2712, 64
        %v2720 = vpop.permute.xlu0 %2719
        %2721 = vrot.lane.b32.xlu0 %v2713, 64
        %v2722 = vpop.permute.xlu0 %2721
        %v2723 = vsel %vm883, %v2718, %v2720
        %v2724 = vsel %vm883, %v2720, %v2722
        %v2728 = vadd.f32 %v2707, %v2723
        %v2729 = vadd.f32 %v2708, %v2724
        %v2730 = vadd.f32 %v2709, %v2722
        %v2731 = vstv %s321
        %v2732 = vmul.f32 %v2731, %v649
        %v2733 = vmul.f32 %v2731, %v645
        %v2734 = vmul.f32 %v2731, %v650
        %v2738 = vrot.slane %v2732, 1
        %v2739 = vrot.slane %v2733, 1
        %v2740 = vrot.slane %v2734, 1
        %2741 = vrot.lane.b32.xlu0 %v2738, 64
        %v2742 = vpop.permute.xlu0 %2741
        %2743 = vrot.lane.b32.xlu0 %v2739, 64
        %v2744 = vpop.permute.xlu0 %2743
        %2745 = vrot.lane.b32.xlu0 %v2740, 64
        %v2746 = vpop.permute.xlu0 %2745
        %v2747 = vsel %vm883, %v2742, %v2744
        %v2748 = vsel %vm883, %v2744, %v2746
        %v2752 = vadd.f32 %v2728, %v2747
        %v2753 = vadd.f32 %v2729, %v2748
        %v2754 = vadd.f32 %v2730, %v2746
        %v2755 = vstv %s279
        %v2756 = vmul.f32 %v2755, %v649
        %v2757 = vmul.f32 %v2755, %v645
        %v2758 = vmul.f32 %v2755, %v650
        %2762 = vrot.lane.b32.xlu0 %v2756, 48
        %v2763 = vpop.permute.xlu0 %2762
        %2764 = vrot.lane.b32.xlu0 %v2757, 48
        %v2765 = vpop.permute.xlu0 %2764
        %2766 = vrot.lane.b32.xlu0 %v2758, 48
        %v2767 = vpop.permute.xlu0 %2766
        %v2768 = vsel %vm925, %v2763, %v2765
        %v2769 = vsel %vm925, %v2765, %v2767
        %v2773 = vadd.f32 %v2752, %v2768
        %v2774 = vadd.f32 %v2753, %v2769
        %v2775 = vadd.f32 %v2754, %v2767
        %v2776 = vstv %s328
        %v2777 = vmul.f32 %v2776, %v649
        %v2778 = vmul.f32 %v2776, %v645
        %v2779 = vmul.f32 %v2776, %v650
        %v2783 = vrot.slane %v2777, 1
        %v2784 = vrot.slane %v2778, 1
        %v2785 = vrot.slane %v2779, 1
        %2786 = vrot.lane.b32.xlu0 %v2783, 48
        %v2787 = vpop.permute.xlu0 %2786
        %2788 = vrot.lane.b32.xlu0 %v2784, 48
        %v2789 = vpop.permute.xlu0 %2788
        %2790 = vrot.lane.b32.xlu0 %v2785, 48
        %v2791 = vpop.permute.xlu0 %2790
        %v2792 = vsel %vm925, %v2787, %v2789
        %v2793 = vsel %vm925, %v2789, %v2791
        %v2797 = vadd.f32 %v2773, %v2792
        %v2798 = vadd.f32 %v2774, %v2793
        %v2799 = vadd.f32 %v2775, %v2791
        %v2800 = vstv %s286
        %v2801 = vmul.f32 %v2800, %v649
        %v2802 = vmul.f32 %v2800, %v645
        %v2803 = vmul.f32 %v2800, %v650
        %2807 = vrot.lane.b32.xlu0 %v2801, 32
        %v2808 = vpop.permute.xlu0 %2807
        %2809 = vrot.lane.b32.xlu0 %v2802, 32
        %v2810 = vpop.permute.xlu0 %2809
        %2811 = vrot.lane.b32.xlu0 %v2803, 32
        %v2812 = vpop.permute.xlu0 %2811
        %v2813 = vsel %vm371, %v2808, %v2810
        %v2814 = vsel %vm371, %v2810, %v2812
        %v2818 = vadd.f32 %v2797, %v2813
        %v2819 = vadd.f32 %v2798, %v2814
        %v2820 = vadd.f32 %v2799, %v2812
        %v2821 = vstv %s335
        %v2822 = vmul.f32 %v2821, %v649
        %v2823 = vmul.f32 %v2821, %v645
        %v2824 = vmul.f32 %v2821, %v650
        %v2828 = vrot.slane %v2822, 1
        %v2829 = vrot.slane %v2823, 1
        %v2830 = vrot.slane %v2824, 1
        %2831 = vrot.lane.b32.xlu0 %v2828, 32
        %v2832 = vpop.permute.xlu0 %2831
        %2833 = vrot.lane.b32.xlu0 %v2829, 32
        %v2834 = vpop.permute.xlu0 %2833
        %2835 = vrot.lane.b32.xlu0 %v2830, 32
        %v2836 = vpop.permute.xlu0 %2835
        %v2837 = vsel %vm371, %v2832, %v2834
        %v2838 = vsel %vm371, %v2834, %v2836
        %v2842 = vadd.f32 %v2818, %v2837
        %v2843 = vadd.f32 %v2819, %v2838
        %v2844 = vadd.f32 %v2820, %v2836
        %2848 = vrot.lane.b32.xlu0 %v2842, 122
        %v2849 = vpop.permute.xlu0 %2848
        %2850 = vrot.lane.b32.xlu0 %v2843, 122
        %v2851 = vpop.permute.xlu0 %2850
        %2852 = vrot.lane.b32.xlu0 %v2844, 122
        %v2853 = vpop.permute.xlu0 %2852
        %vm2854 = vcmask 998400
        %v2855 = vsel %vm2854, %v2849, %v2851
        %v2856 = vsel %vm2854, %v2851, %v2853
        %v2859 = vmul.f32 %v726, %v2855
        %v2860 = vmul.f32 %v727, %v2856
        %v2861 = vadd.f32 %v2550, %v2859
        %v2862 = vadd.f32 %v2551, %v2860
        %v2863 = vxor.u32 %v2861, 2147483648
        %v2864 = vxor.u32 %v2862, 2147483648
        %v2865 = vmul.f32 %v2863, 1.442695
        %v2866 = vpow.pop %v2865
        %v2867 = vmul.f32 %v2864, 1.442695
        %v2868 = vpow.pop %v2867
        %v2869 = vadd.f32 %v2866, 1.0
        %v2870 = vadd.f32 %v2868, 1.0
        %v2871 = vrcp.pop %v2869
        %v2872 = vmul.f32 1.0, %v2871
        %v2873 = vrcp.pop %v2870
        %v2874 = vmul.f32 1.0, %v2873
        %2876 = vset.pattern.permute.xlu0 0
        %2877 = vperm.xlu0 %2876, %v589
        %v2878 = vpop.permute.xlu0 %2877
        %2881 = vset.pattern.permute.xlu0 0
        %2882 = vperm.xlu0 %2881, %v591
        %v2883 = vpop.permute.xlu0 %2882
        %2886 = vset.pattern.permute.xlu0 0
        %2887 = vperm.xlu0 %2886, %v593
        %v2888 = vpop.permute.xlu0 %2887
        %2891 = vset.pattern.permute.xlu0 0
        %2892 = vperm.xlu0 %2891, %v595
        %v2893 = vpop.permute.xlu0 %2892
        %v2895 = vmul.f32 %v230, %v2878
        %v2896 = vmul.f32 %v231, %v2878
        %v2897 = vmul.f32 %v232, %v2883
        %v2898 = vmul.f32 %v233, %v2883
        %v2899 = vmul.f32 %v234, %v2888
        %v2900 = vmul.f32 %v235, %v2888
        %v2901 = vmul.f32 %v236, %v2893
        %v2902 = vmul.f32 %v237, %v2893
        %v2903 = vlaneseq
        %v2904 = vshrl.u32 %v2903, 7
        %v2905 = vsub.s32 0, %v2904
        %v2906 = vrot.slane %v2872, %v2905
        %v2907 = vlaneseq
        %v2908 = vshrl.u32 %v2907, 7
        %v2909 = vsub.s32 0, %v2908
        %v2910 = vrot.slane %v2874, %v2909
        %v2911 = vmul.f32 %v2895, %v2906
        %v2912 = vmul.f32 %v2896, %v2910
        %v2913 = vmul.f32 %v2897, %v2906
        %v2914 = vmul.f32 %v2898, %v2910
        %v2915 = vmul.f32 %v2899, %v2906
        %v2916 = vmul.f32 %v2900, %v2910
        %v2917 = vmul.f32 %v2901, %v2906
        %v2918 = vmul.f32 %v2902, %v2910
        %2919 = vst [vmem:[%s229] sm:$0xff] %v2911
        %2920 = vst [vmem:[%s229 + $0x8] sm:$0xff] %v2912
        %2921 = vst [vmem:[%s229 + $0x10] sm:$0xff] %v2913
        %2922 = vst [vmem:[%s229 + $0x18] sm:$0xff] %v2914
        %2923 = vst [vmem:[%s229 + $0x20] sm:$0xff] %v2915
        %2924 = vst [vmem:[%s229 + $0x28] sm:$0xff] %v2916
        %2925 = vst [vmem:[%s229 + $0x30] sm:$0xff] %v2917
        %2926 = vst [vmem:[%s229 + $0x38] sm:$0xff] %v2918
        %s2927 = sand.u32 %s119, 1
        %s2928 = scalar_lea.sflag [#allocation4], %s2927
        %s2929 = sand.u32 %s119, 1
        %s2930 = smul.addr %s2929, 64
        %s2931 = scalar_lea.vmem [#allocation7], %s2930
        // Predicated region
        $region45: #{tpu_custom_call.1} parent=35 // pred_check
          %p2932 = pneg %p129
        $region46: #{tpu_custom_call.1} parent=35 // pred_check_branch
          %2934 = sbr.rel (%p2932) target = $region48
        $region47: #{tpu_custom_call.1} parent=35 // pred_region
          %s2936 = ssub.s32 1024, 1024
          %2937 = vsyncadd %s2928, %s2936
          %s2938 = smul.addr %s22, 8
          %s2939 = smul.addr %s2938, 128
          %s2940 = scalar_lea.hbm %s4, %s2939
          %s2941 = sshll.u32 %s2931, 4
          %s2942 = int_to_ptr.vmem [resolvable:$true] %s2941
          %2947 = dma.vmem_to_hbm [thread:$0]  %s2942, 1024, %s2940, %s2928, 256, 256, 16
        $region48: #{tpu_custom_call.1} parent=35 // pred_fallthru
          _
      $region36: #{tpu_custom_call.1} parent=5 // pred_fallthru
        _
      %p2948 = scmp.le.s32.totalorder 2, %s17
      // Predicated region
      $region49: #{tpu_custom_call.1} parent=5 // pred_check
        %p2949 = pneg %p2948
      $region50: #{tpu_custom_call.1} parent=5 // pred_check_branch
        %2951 = sbr.rel (%p2949) target = $region52
      $region51: #{tpu_custom_call.1} parent=5 // pred_region
        %s2952 = ssub.s32 %s17, 2
        // Predicated region
        $region53: #{tpu_custom_call.1} parent=51 // pred_check
          %p2953 = pneg %p135
        $region54: #{tpu_custom_call.1} parent=51 // pred_check_branch
          %2955 = sbr.rel (%p2953) target = $region56
        $region55: #{tpu_custom_call.1} parent=51 // pred_region
          %s2956 = sand.u32 %s120, 1
          %s2957 = scalar_lea.sflag [#allocation4], %s2956
          %s2958 = sand.u32 %s120, 1
          %s2959 = smul.addr %s2958, 64
          %s2960 = scalar_lea.vmem [#allocation7], %s2959
          %2961 = dma.done %s2957, 1024
        $region56: #{tpu_custom_call.1} parent=51 // pred_fallthru
          _
      $region52: #{tpu_custom_call.1} parent=5 // pred_fallthru
        _
    $region6: #{tpu_custom_call.1} parent=1 // loop_footer
      %s21 = sadd.s32 1, %s17
    $region7: #{tpu_custom_call.1} parent=1 // loop_footer_branch
      %16 = sbr.rel target = $region3
    $region8: #{tpu_custom_call.1} parent=1 // loop_exit
      _
    %2962 = vsyncpa [#allocation3], 1
    %s2963 = scalar_lea.sflag [#allocation3], 1
    %2964 = vsyncpa %s2963, 1
    %2965 = vsyncpa [#allocation4], 1
    %s2966 = scalar_lea.sflag [#allocation4], 1
    %2967 = vsyncpa %s2966, 1
    %2968 = vsyncpa [#allocation5], 1
    %s2969 = scalar_lea.sflag [#allocation5], 1
    %2970 = vsyncpa %s2969, 1

</llo_original>
